<compile_context>
chip_gen: v7x
topology: tpu7x:2x2x1
jax: 0.10.0
libtpu: 0.0.40
codegen_flags: <defaults>
</compile_context>

<pallas_src>
import functools

import jax
import jax.numpy as jnp
from jax import lax
from jax.experimental import pallas as pl
from jax.experimental.pallas import tpu as pltpu


# ----------------------------- Pallas kernels ------------------------------ #

def _tap_slab(scr_ref, t, starts):
    """im2col: concat shifted (t, C) views from the halo scratch along lanes."""
    return jnp.concatenate([scr_ref[pl.ds(s, t), :] for s in starts], axis=-1)


def _conv3_kernel(x_ref, w_ref, b_ref, o_ref, scr_ref, *, relu_in, relu_out):
    """conv1d(k=3, s=1, pad=1) with optional fused input/output ReLU."""
    t = o_ref.shape[0]
    x = x_ref[...].astype(jnp.float32)
    if relu_in:
        x = jnp.maximum(x, 0.0)
    scr_ref[...] = jnp.zeros_like(scr_ref)          # zero halos (and middle)
    scr_ref[pl.ds(1, t), :] = x                     # in-kernel zero padding
    slab = _tap_slab(scr_ref, t, (0, 1, 2))         # (t, 3*Cin)
    y = jnp.dot(slab.astype(jnp.bfloat16), w_ref[...],
                preferred_element_type=jnp.float32)
    y = y + b_ref[...].astype(jnp.float32)
    if relu_out:
        y = jnp.maximum(y, 0.0)
    o_ref[...] = y.astype(o_ref.dtype)


def _down_block_kernel(x_ref, w1_ref, b1_ref, w2_ref, b2_ref,
                       we_ref, wo_ref, bu_ref,
                       even_ref, odd_ref, scr_ref, *, dilations, max_pad):
    """Fused Resnet1D(depth, reversed dilations) + nearest-x2 upsample + conv3.

    Everything stays in VMEM; the upsample conv is evaluated in polyphase form:
      y[2t]   = w0 @ h[t-1] + (w1+w2) @ h[t] + b
      y[2t+1] = (w0+w1) @ h[t] + w2 @ h[t+1] + b
    and the two phases are emitted as separate (T, C) outputs.
    """
    t = x_ref.shape[0]
    scr_ref[...] = jnp.zeros_like(scr_ref)          # halo rows stay zero below
    h = x_ref[...].astype(jnp.float32)

    for j, dil in enumerate(dilations):             # static unroll, ResConv1D
        scr_ref[pl.ds(max_pad, t), :] = jnp.maximum(h, 0.0)        # activation1
        slab = _tap_slab(
            scr_ref, t, tuple(max_pad + (k - 1) * dil for k in range(3)))
        u = jnp.dot(slab.astype(jnp.bfloat16), w1_ref[j],
                    preferred_element_type=jnp.float32)            # dilated 3-tap
        u = jnp.maximum(u + b1_ref[j].astype(jnp.float32), 0.0)    # activation2
        h = (h
             + jnp.dot(u.astype(jnp.bfloat16), w2_ref[j],
                       preferred_element_type=jnp.float32)         # 1x1 proj
             + b2_ref[j].astype(jnp.float32))                      # residual add

    # Fused Upsample(x2, nearest) + Conv1d(3, 1, 1), polyphase.
    scr_ref[pl.ds(max_pad, t), :] = h
    prev = scr_ref[pl.ds(max_pad - 1, t), :]        # h[t-1] (zero at the edge)
    nxt = scr_ref[pl.ds(max_pad + 1, t), :]         # h[t+1] (zero at the edge)
    bu = bu_ref[...].astype(jnp.float32)
    even = jnp.dot(jnp.concatenate([prev, h], axis=-1).astype(jnp.bfloat16),
                   we_ref[...], preferred_element_type=jnp.float32) + bu
    odd = jnp.dot(jnp.concatenate([h, nxt], axis=-1).astype(jnp.bfloat16),
                  wo_ref[...], preferred_element_type=jnp.float32) + bu
    even_ref[...] = even.astype(even_ref.dtype)
    odd_ref[...] = odd.astype(odd_ref.dtype)


def _tail_kernel(x_ref, wm_ref, bm_ref, w_out_ref, b_out_ref, o_ref, scr_ref):
    """Fused Conv1d(3)+ReLU -> Conv1d(3) tail of the decoder."""
    t = o_ref.shape[0]
    scr_ref[...] = jnp.zeros_like(scr_ref)
    scr_ref[pl.ds(1, t), :] = x_ref[...].astype(jnp.float32)
    slab = _tap_slab(scr_ref, t, (0, 1, 2))
    h = jnp.dot(slab.astype(jnp.bfloat16), wm_ref[...],
                preferred_element_type=jnp.float32)
    h = jnp.maximum(h + bm_ref[...].astype(jnp.float32), 0.0)
    scr_ref[pl.ds(1, t), :] = h                     # halos are still zero
    slab = _tap_slab(scr_ref, t, (0, 1, 2))
    y = jnp.dot(slab.astype(jnp.bfloat16), w_out_ref[...],
                preferred_element_type=jnp.float32)
    o_ref[...] = (y + b_out_ref[...].astype(jnp.float32)).astype(o_ref.dtype)


# ------------------------------ call wrappers ------------------------------- #

def _parallel_params():
    return pltpu.CompilerParams(dimension_semantics=("parallel",))


def conv3_pallas(x, w_flat, b, *, relu_in=False, relu_out=False):
    """x: (N, T, Cin) f32, w_flat: (3*Cin, Cout) bf16, b: (1, Cout) f32."""
    n, t, cin = x.shape
    cout = w_flat.shape[1]
    return pl.pallas_call(
        functools.partial(_conv3_kernel, relu_in=relu_in, relu_out=relu_out),
        out_shape=jax.ShapeDtypeStruct((n, t, cout), jnp.float32),
        grid=(n,),
        in_specs=[
            pl.BlockSpec((None, t, cin), lambda i: (i, 0, 0)),
            pl.BlockSpec((3 * cin, cout), lambda i: (0, 0)),
            pl.BlockSpec((1, cout), lambda i: (0, 0)),
        ],
        out_specs=pl.BlockSpec((None, t, cout), lambda i: (i, 0, 0)),
        scratch_shapes=[pltpu.VMEM((t + 2, cin), jnp.float32)],
        compiler_params=_parallel_params(),
    )(x, w_flat, b)


def down_block_pallas(x, blk, *, dilations):
    """Fused Resnet1D(depth) + Upsample(x2) + Conv1d(3): (N,T,C) -> (N,2T,C)."""
    n, t, c = x.shape
    depth = len(dilations)
    max_pad = max(max(dilations), 1)
    kernel = functools.partial(_down_block_kernel,
                               dilations=tuple(dilations), max_pad=max_pad)
    even, odd = pl.pallas_call(
        kernel,
        out_shape=(jax.ShapeDtypeStruct((n, t, c), jnp.float32),
                   jax.ShapeDtypeStruct((n, t, c), jnp.float32)),
        grid=(n,),
        in_specs=[
            pl.BlockSpec((None, t, c), lambda i: (i, 0, 0)),
            pl.BlockSpec((depth, 3 * c, c), lambda i: (0, 0, 0)),
            pl.BlockSpec((depth, 1, c), lambda i: (0, 0, 0)),
            pl.BlockSpec((depth, c, c), lambda i: (0, 0, 0)),
            pl.BlockSpec((depth, 1, c), lambda i: (0, 0, 0)),
            pl.BlockSpec((2 * c, c), lambda i: (0, 0)),
            pl.BlockSpec((2 * c, c), lambda i: (0, 0)),
            pl.BlockSpec((1, c), lambda i: (0, 0)),
        ],
        out_specs=(pl.BlockSpec((None, t, c), lambda i: (i, 0, 0)),
                   pl.BlockSpec((None, t, c), lambda i: (i, 0, 0))),
        scratch_shapes=[pltpu.VMEM((t + 2 * max_pad, c), jnp.float32)],
        compiler_params=_parallel_params(),
    )(x, blk['w1'], blk['b1'], blk['w2'], blk['b2'],
      blk['we'], blk['wo'], blk['bu'])
    # TODO(synk): write the interleaved even/odd rows directly from the kernel
    # (strided sublane store) once verified on the target Mosaic version; for
    # now the phases are interleaved here (the trailing reshape is a bitcast).
    return jnp.stack([even, odd], axis=2).reshape(n, 2 * t, c)


def tail_pallas(x, wm, bm, w_out, b_out):
    n, t, c = x.shape
    cout = w_out.shape[1]
    return pl.pallas_call(
        _tail_kernel,
        out_shape=jax.ShapeDtypeStruct((n, t, cout), jnp.float32),
        grid=(n,),
        in_specs=[
            pl.BlockSpec((None, t, c), lambda i: (i, 0, 0)),
            pl.BlockSpec((3 * c, c), lambda i: (0, 0)),
            pl.BlockSpec((1, c), lambda i: (0, 0)),
            pl.BlockSpec((3 * c, cout), lambda i: (0, 0)),
            pl.BlockSpec((1, cout), lambda i: (0, 0)),
        ],
        out_specs=pl.BlockSpec((None, t, cout), lambda i: (i, 0, 0)),
        scratch_shapes=[pltpu.VMEM((t + 2, c), jnp.float32)],
        compiler_params=_parallel_params(),
    )(x, wm, bm, w_out, b_out)


# ------------------------------ Decoder model ------------------------------ #

def _make_dilations(depth, dilation_growth_rate):
    # Resnet1D(reverse_dilation=True): largest dilation applied first.
    return tuple(dilation_growth_rate ** d for d in range(depth))[::-1]


def _conv_params(key, k, cin, cout):
    kw, kb = jax.random.split(key)
    bound = 1.0 / (cin * k) ** 0.5               # PyTorch Conv1d default init
    w = jax.random.uniform(kw, (k, cin, cout), jnp.float32, -bound, bound)
    b = jax.random.uniform(kb, (cout,), jnp.float32, -bound, bound)
    return w, b


def init_decoder_params(key, input_emb_width, output_emb_width, down_t, width,
                        depth, dilation_growth_rate):
    """Raw (reference-layout) parameters: conv weights as (K, Cin, Cout)."""
    del dilation_growth_rate  # dilations are derived separately (static ints)
    n_keys = 4 + down_t * (2 * depth + 1)
    keys = iter(jax.random.split(key, n_keys))
    params = {'conv_in': _conv_params(next(keys), 3, output_emb_width, width)}
    blocks = []
    for _ in range(down_t):
        res = []
        for _ in range(depth):
            res.append((_conv_params(next(keys), 3, width, width),    # dilated
                        _conv_params(next(keys), 1, width, width)))   # 1x1 proj
        blocks.append({'res': res,
                       'up': _conv_params(next(keys), 3, width, width)})
    params['blocks'] = blocks
    params['conv_mid'] = _conv_params(next(keys), 3, width, width)
    params['conv_out'] = _conv_params(next(keys), 3, width, input_emb_width)
    return params


def pack_decoder_params(raw):
    """Kernel-ready params: im2col-flattened bf16 weights, (1, C) f32 biases."""
    def wflat(w):                                # (K, Cin, Cout) -> (K*Cin, Cout)
        return w.reshape(-1, w.shape[-1]).astype(jnp.bfloat16)

    def brow(b):
        return b.reshape(1, -1).astype(jnp.float32)

    packed = {}
    w, b = raw['conv_in']
    packed['conv_in'] = (wflat(w), brow(b))

    blocks = []
    for blk in raw['blocks']:
        w1s, b1s, w2s, b2s = [], [], [], []
        for (w1, b1), (w2, b2) in blk['res']:
            w1s.append(wflat(w1))
            b1s.append(brow(b1))
            w2s.append(w2[0].astype(jnp.bfloat16))
            b2s.append(brow(b2))
        wu, bu = blk['up']
        blocks.append(dict(
            w1=jnp.stack(w1s), b1=jnp.stack(b1s),
            w2=jnp.stack(w2s), b2=jnp.stack(b2s),
            # Polyphase upsample-conv weights, tap sums precombined on host.
            we=jnp.concatenate([wu[0], wu[1] + wu[2]], axis=0).astype(jnp.bfloat16),
            wo=jnp.concatenate([wu[0] + wu[1], wu[2]], axis=0).astype(jnp.bfloat16),
            bu=brow(bu)))
    packed['blocks'] = blocks

    wm, bm = raw['conv_mid']
    w_out, b_out = raw['conv_out']
    packed['tail'] = (wflat(wm), brow(bm), wflat(w_out), brow(b_out))
    return packed


def decoder_forward_pallas(x, params, *, dilations):
    """x: (N, T, output_emb_width) -> (N, T * 2**down_t, input_emb_width)."""
    w, b = params['conv_in']
    h = conv3_pallas(x, w, b, relu_out=True)         # Conv1d + ReLU (fused)
    for blk in params['blocks']:
        h = down_block_pallas(h, blk, dilations=dilations)
    return tail_pallas(h, *params['tail'])           # Conv + ReLU + Conv (fused)


# --------------------------- Pure-JAX reference ----------------------------- #

def _conv_ref(x, w, b, dilation=1):
    k = w.shape[0]
    pad = dilation * (k - 1) // 2
    y = lax.conv_general_dilated(
        x, w, window_strides=(1,), padding=[(pad, pad)],
        rhs_dilation=(dilation,), dimension_numbers=('NWC', 'WIO', 'NWC'))
    return y + b.reshape(1, 1, -1)


def decoder_forward_ref(x, raw, *, dilations):
    w, b = raw['conv_in']
    h = jnp.maximum(_conv_ref(x, w, b), 0.0)
    for blk in raw['blocks']:
        for ((w1, b1), (w2, b2)), dil in zip(blk['res'], dilations):
            u = _conv_ref(jnp.maximum(h, 0.0), w1, b1, dil)
            h = h + _conv_ref(jnp.maximum(u, 0.0), w2, b2, 1)
        h = jnp.repeat(h, 2, axis=1)                 # Upsample(x2, nearest)
        wu, bu = blk['up']
        h = _conv_ref(h, wu, bu, 1)
    w, b = raw['conv_mid']
    h = jnp.maximum(_conv_ref(h, w, b), 0.0)
    w, b = raw['conv_out']
    return _conv_ref(h, w, b, 1)


# ---------------------------------- main ------------------------------------ #

if __name__ == "__main__":
    key = jax.random.PRNGKey(0)
    kx, kp = jax.random.split(key)

    # Small config consistent with the module (scaled-down hyperparameters).
    N, T = 2, 8
    input_emb_width = 3       # final output channels
    output_emb_width = 32     # latent (decoder input) channels
    width = 32
    down_t = 2
    depth = 2
    dilation_growth_rate = 3

    dilations = _make_dilations(depth, dilation_growth_rate)

    x = jax.random.normal(kx, (N, T, output_emb_width), jnp.float32)
    raw_params = init_decoder_params(kp, input_emb_width, output_emb_width,
                                     down_t, width, depth, dilation_growth_rate)
    params = pack_decoder_params(raw_params)

    fwd = jax.jit(functools.partial(decoder_forward_pallas, dilations=dilations))
    y = jax.block_until_ready(fwd(x, params))
    assert y.shape == (N, T * 2 ** down_t, input_emb_width), y.shape

    y_ref = jax.block_until_ready(
        decoder_forward_ref(x, raw_params, dilations=dilations))
    if not jnp.allclose(y, y_ref, atol=3e-2, rtol=3e-2):
        raise AssertionError("Pallas decoder output mismatch vs JAX reference")

    print("KERNEL_OK")
</pallas_src>

<mosaic_0001>
module attributes {stable_mosaic.version = 11 : i64} {
  func.func @_conv3_kernel(%arg0: i32, %arg1: memref<1x8x32xf32, #tpu.memory_space<vmem>>, %arg2: memref<96x32xbf16, #tpu.memory_space<vmem>>, %arg3: memref<1x32xf32, #tpu.memory_space<vmem>>, %arg4: memref<1x8x32xf32, #tpu.memory_space<vmem>>, %arg5: memref<10x32xf32, #tpu.memory_space<vmem>>) attributes {dimension_semantics = [#tpu.dimension_semantics<parallel>], iteration_bounds = array<i64: 2>, scalar_prefetch = 0 : i64, scratch_operands = 1 : i64, tpu.core_type = #tpu.core_type<tc>, window_params = [{transform_indices = @transform_0, window_bounds = array<i64: 1, 8, 32>}, {pipeline_mode = #tpu.pipeline_mode<synchronous>, transform_indices = @transform_1, window_bounds = array<i64: 96, 32>}, {pipeline_mode = #tpu.pipeline_mode<synchronous>, transform_indices = @transform_2, window_bounds = array<i64: 1, 32>}, {transform_indices = @transform_3, window_bounds = array<i64: 1, 8, 32>}]} {
    %c0 = arith.constant 0 : index
    %c0_0 = arith.constant 0 : index
    %c0_1 = arith.constant 0 : index
    %0 = vector.load %arg1[%c0, %c0_0, %c0_1] : memref<1x8x32xf32, #tpu.memory_space<vmem>>, vector<1x8x32xf32>
    %1 = vector.shape_cast %0 : vector<1x8x32xf32> to vector<8x32xf32>
    %cst = arith.constant 0.000000e+00 : f32
    %2 = vector.broadcast %cst : f32 to vector<10x32xf32>
    %c0_2 = arith.constant 0 : index
    %c0_3 = arith.constant 0 : index
    %3 = vector.load %arg5[%c0_2, %c0_3] : memref<10x32xf32, #tpu.memory_space<vmem>>, vector<10x32xf32>
    tpu.vector_store %arg5[%c0_2, %c0_3], %2 {strides = array<i32>} : memref<10x32xf32, #tpu.memory_space<vmem>>, vector<10x32xf32>,
    %c1 = arith.constant 1 : index
    %c0_4 = arith.constant 0 : index
    %4 = vector.load %arg5[%c1, %c0_4] : memref<10x32xf32, #tpu.memory_space<vmem>>, vector<8x32xf32>
    tpu.vector_store %arg5[%c1, %c0_4], %1 {strides = array<i32>} : memref<10x32xf32, #tpu.memory_space<vmem>>, vector<8x32xf32>,
    %c0_5 = arith.constant 0 : index
    %c0_6 = arith.constant 0 : index
    %5 = vector.load %arg5[%c0_5, %c0_6] : memref<10x32xf32, #tpu.memory_space<vmem>>, vector<8x32xf32>
    %c1_7 = arith.constant 1 : index
    %c0_8 = arith.constant 0 : index
    %6 = vector.load %arg5[%c1_7, %c0_8] : memref<10x32xf32, #tpu.memory_space<vmem>>, vector<8x32xf32>
    %c2 = arith.constant 2 : index
    %c0_9 = arith.constant 0 : index
    %7 = vector.load %arg5[%c2, %c0_9] : memref<10x32xf32, #tpu.memory_space<vmem>>, vector<8x32xf32>
    %8 = tpu.concatenate %5, %6, %7 in 1 : vector<8x32xf32>, vector<8x32xf32>, vector<8x32xf32> -> vector<8x96xf32>
    %9 = arith.truncf %8 : vector<8x96xf32> to vector<8x96xbf16>
    %c0_10 = arith.constant 0 : index
    %c0_11 = arith.constant 0 : index
    %10 = vector.load %arg2[%c0_10, %c0_11] : memref<96x32xbf16, #tpu.memory_space<vmem>>, vector<96x32xbf16>
    %cst_12 = arith.constant dense<0.000000e+00> : vector<8x32xf32>
    %11 = tpu.matmul %9, %10, %cst_12 {dimension_numbers = #tpu.dot_dimension_numbers<[1], [0], [0], [1], [0, 0, 1, 1], [], []>} : vector<8x96xbf16>, vector<96x32xbf16>, vector<8x32xf32> -> vector<8x32xf32>
    %c0_13 = arith.constant 0 : index
    %c0_14 = arith.constant 0 : index
    %12 = vector.load %arg3[%c0_13, %c0_14] : memref<1x32xf32, #tpu.memory_space<vmem>>, vector<1x32xf32>
    %13 = vector.broadcast %12 : vector<1x32xf32> to vector<8x32xf32>
    %14 = arith.addf %11, %13 : vector<8x32xf32>
    %cst_15 = arith.constant 0.000000e+00 : f32
    %15 = vector.broadcast %cst_15 : f32 to vector<8x32xf32>
    %16 = arith.maximumf %14, %15 : vector<8x32xf32>
    %c0_16 = arith.constant 0 : index
    %c0_17 = arith.constant 0 : index
    %c0_18 = arith.constant 0 : index
    %17 = vector.load %arg4[%c0_16, %c0_17, %c0_18] : memref<1x8x32xf32, #tpu.memory_space<vmem>>, vector<1x8x32xf32>
    %18 = vector.shape_cast %17 : vector<1x8x32xf32> to vector<8x32xf32>
    %19 = vector.shape_cast %16 : vector<8x32xf32> to vector<1x8x32xf32>
    tpu.vector_store %arg4[%c0_16, %c0_17, %c0_18], %19 {strides = array<i32>} : memref<1x8x32xf32, #tpu.memory_space<vmem>>, vector<1x8x32xf32>,
    return
  }
  func.func @transform_0(%arg0: i32) -> (i32, i32, i32) {
    %c0_i32 = arith.constant 0 : i32
    %c0_i32_0 = arith.constant 0 : i32
    %c0_i32_1 = arith.constant 0 : i32
    return %arg0, %c0_i32, %c0_i32_0 : i32, i32, i32
  }
  func.func @transform_1(%arg0: i32) -> (i32, i32) {
    %c0_i32 = arith.constant 0 : i32
    %c0_i32_0 = arith.constant 0 : i32
    %c0_i32_1 = arith.constant 0 : i32
    return %c0_i32, %c0_i32_0 : i32, i32
  }
  func.func @transform_2(%arg0: i32) -> (i32, i32) {
    %c0_i32 = arith.constant 0 : i32
    %c0_i32_0 = arith.constant 0 : i32
    %c0_i32_1 = arith.constant 0 : i32
    return %c0_i32, %c0_i32_0 : i32, i32
  }
  func.func @transform_3(%arg0: i32) -> (i32, i32, i32) {
    %c0_i32 = arith.constant 0 : i32
    %c0_i32_0 = arith.constant 0 : i32
    %c0_i32_1 = arith.constant 0 : i32
    return %arg0, %c0_i32, %c0_i32_0 : i32, i32, i32
  }
}

module attributes {stable_mosaic.version = 11 : i64} {
  func.func @_down_block_kernel(%arg0: i32, %arg1: memref<1x8x32xf32, #tpu.memory_space<vmem>>, %arg2: memref<2x96x32xbf16, #tpu.memory_space<vmem>>, %arg3: memref<2x1x32xf32, #tpu.memory_space<vmem>>, %arg4: memref<2x32x32xbf16, #tpu.memory_space<vmem>>, %arg5: memref<2x1x32xf32, #tpu.memory_space<vmem>>, %arg6: memref<64x32xbf16, #tpu.memory_space<vmem>>, %arg7: memref<64x32xbf16, #tpu.memory_space<vmem>>, %arg8: memref<1x32xf32, #tpu.memory_space<vmem>>, %arg9: memref<1x8x32xf32, #tpu.memory_space<vmem>>, %arg10: memref<1x8x32xf32, #tpu.memory_space<vmem>>, %arg11: memref<14x32xf32, #tpu.memory_space<vmem>>) attributes {dimension_semantics = [#tpu.dimension_semantics<parallel>], iteration_bounds = array<i64: 2>, scalar_prefetch = 0 : i64, scratch_operands = 1 : i64, tpu.core_type = #tpu.core_type<tc>, window_params = [{transform_indices = @transform_0, window_bounds = array<i64: 1, 8, 32>}, {pipeline_mode = #tpu.pipeline_mode<synchronous>, transform_indices = @transform_1, window_bounds = array<i64: 2, 96, 32>}, {pipeline_mode = #tpu.pipeline_mode<synchronous>, transform_indices = @transform_2, window_bounds = array<i64: 2, 1, 32>}, {pipeline_mode = #tpu.pipeline_mode<synchronous>, transform_indices = @transform_3, window_bounds = array<i64: 2, 32, 32>}, {pipeline_mode = #tpu.pipeline_mode<synchronous>, transform_indices = @transform_4, window_bounds = array<i64: 2, 1, 32>}, {pipeline_mode = #tpu.pipeline_mode<synchronous>, transform_indices = @transform_5, window_bounds = array<i64: 64, 32>}, {pipeline_mode = #tpu.pipeline_mode<synchronous>, transform_indices = @transform_6, window_bounds = array<i64: 64, 32>}, {pipeline_mode = #tpu.pipeline_mode<synchronous>, transform_indices = @transform_7, window_bounds = array<i64: 1, 32>}, {transform_indices = @transform_8, window_bounds = array<i64: 1, 8, 32>}, {transform_indices = @transform_9, window_bounds = array<i64: 1, 8, 32>}]} {
    %cst = arith.constant 0.000000e+00 : f32
    %0 = vector.broadcast %cst : f32 to vector<14x32xf32>
    %c0 = arith.constant 0 : index
    %c0_0 = arith.constant 0 : index
    %1 = vector.load %arg11[%c0, %c0_0] : memref<14x32xf32, #tpu.memory_space<vmem>>, vector<14x32xf32>
    tpu.vector_store %arg11[%c0, %c0_0], %0 {strides = array<i32>} : memref<14x32xf32, #tpu.memory_space<vmem>>, vector<14x32xf32>,
    %c0_1 = arith.constant 0 : index
    %c0_2 = arith.constant 0 : index
    %c0_3 = arith.constant 0 : index
    %2 = vector.load %arg1[%c0_1, %c0_2, %c0_3] : memref<1x8x32xf32, #tpu.memory_space<vmem>>, vector<1x8x32xf32>
    %3 = vector.shape_cast %2 : vector<1x8x32xf32> to vector<8x32xf32>
    %cst_4 = arith.constant 0.000000e+00 : f32
    %4 = vector.broadcast %cst_4 : f32 to vector<8x32xf32>
    %5 = arith.maximumf %3, %4 : vector<8x32xf32>
    %c3 = arith.constant 3 : index
    %c0_5 = arith.constant 0 : index
    %6 = vector.load %arg11[%c3, %c0_5] : memref<14x32xf32, #tpu.memory_space<vmem>>, vector<8x32xf32>
    tpu.vector_store %arg11[%c3, %c0_5], %5 {strides = array<i32>} : memref<14x32xf32, #tpu.memory_space<vmem>>, vector<8x32xf32>,
    %c0_6 = arith.constant 0 : index
    %c0_7 = arith.constant 0 : index
    %7 = vector.load %arg11[%c0_6, %c0_7] : memref<14x32xf32, #tpu.memory_space<vmem>>, vector<8x32xf32>
    %c3_8 = arith.constant 3 : index
    %c0_9 = arith.constant 0 : index
    %8 = vector.load %arg11[%c3_8, %c0_9] : memref<14x32xf32, #tpu.memory_space<vmem>>, vector<8x32xf32>
    %c6 = arith.constant 6 : index
    %c0_10 = arith.constant 0 : index
    %9 = vector.load %arg11[%c6, %c0_10] : memref<14x32xf32, #tpu.memory_space<vmem>>, vector<8x32xf32>
    %10 = tpu.concatenate %7, %8, %9 in 1 : vector<8x32xf32>, vector<8x32xf32>, vector<8x32xf32> -> vector<8x96xf32>
    %11 = arith.truncf %10 : vector<8x96xf32> to vector<8x96xbf16>
    %c0_11 = arith.constant 0 : index
    %c0_12 = arith.constant 0 : index
    %c0_13 = arith.constant 0 : index
    %12 = vector.load %arg2[%c0_11, %c0_12, %c0_13] : memref<2x96x32xbf16, #tpu.memory_space<vmem>>, vector<1x96x32xbf16>
    %13 = vector.shape_cast %12 : vector<1x96x32xbf16> to vector<96x32xbf16>
    %cst_14 = arith.constant dense<0.000000e+00> : vector<8x32xf32>
    %14 = tpu.matmul %11, %13, %cst_14 {dimension_numbers = #tpu.dot_dimension_numbers<[1], [0], [0], [1], [0, 0, 1, 1], [], []>} : vector<8x96xbf16>, vector<96x32xbf16>, vector<8x32xf32> -> vector<8x32xf32>
    %c0_15 = arith.constant 0 : index
    %c0_16 = arith.constant 0 : index
    %c0_17 = arith.constant 0 : index
    %15 = vector.load %arg3[%c0_15, %c0_16, %c0_17] : memref<2x1x32xf32, #tpu.memory_space<vmem>>, vector<1x1x32xf32>
    %16 = vector.shape_cast %15 : vector<1x1x32xf32> to vector<1x32xf32>
    %17 = vector.broadcast %16 : vector<1x32xf32> to vector<8x32xf32>
    %18 = arith.addf %14, %17 : vector<8x32xf32>
    %cst_18 = arith.constant 0.000000e+00 : f32
    %19 = vector.broadcast %cst_18 : f32 to vector<8x32xf32>
    %20 = arith.maximumf %18, %19 : vector<8x32xf32>
    %21 = arith.truncf %20 : vector<8x32xf32> to vector<8x32xbf16>
    %c0_19 = arith.constant 0 : index
    %c0_20 = arith.constant 0 : index
    %c0_21 = arith.constant 0 : index
    %22 = vector.load %arg4[%c0_19, %c0_20, %c0_21] : memref<2x32x32xbf16, #tpu.memory_space<vmem>>, vector<1x32x32xbf16>
    %23 = vector.shape_cast %22 : vector<1x32x32xbf16> to vector<32x32xbf16>
    %cst_22 = arith.constant dense<0.000000e+00> : vector<8x32xf32>
    %24 = tpu.matmul %21, %23, %cst_22 {dimension_numbers = #tpu.dot_dimension_numbers<[1], [0], [0], [1], [0, 0, 1, 1], [], []>} : vector<8x32xbf16>, vector<32x32xbf16>, vector<8x32xf32> -> vector<8x32xf32>
    %25 = arith.addf %3, %24 : vector<8x32xf32>
    %c0_23 = arith.constant 0 : index
    %c0_24 = arith.constant 0 : index
    %c0_25 = arith.constant 0 : index
    %26 = vector.load %arg5[%c0_23, %c0_24, %c0_25] : memref<2x1x32xf32, #tpu.memory_space<vmem>>, vector<1x1x32xf32>
    %27 = vector.shape_cast %26 : vector<1x1x32xf32> to vector<1x32xf32>
    %28 = vector.broadcast %27 : vector<1x32xf32> to vector<8x32xf32>
    %29 = arith.addf %25, %28 : vector<8x32xf32>
    %cst_26 = arith.constant 0.000000e+00 : f32
    %30 = vector.broadcast %cst_26 : f32 to vector<8x32xf32>
    %31 = arith.maximumf %29, %30 : vector<8x32xf32>
    %c3_27 = arith.constant 3 : index
    %c0_28 = arith.constant 0 : index
    %32 = vector.load %arg11[%c3_27, %c0_28] : memref<14x32xf32, #tpu.memory_space<vmem>>, vector<8x32xf32>
    tpu.vector_store %arg11[%c3_27, %c0_28], %31 {strides = array<i32>} : memref<14x32xf32, #tpu.memory_space<vmem>>, vector<8x32xf32>,
    %c2 = arith.constant 2 : index
    %c0_29 = arith.constant 0 : index
    %33 = vector.load %arg11[%c2, %c0_29] : memref<14x32xf32, #tpu.memory_space<vmem>>, vector<8x32xf32>
    %c3_30 = arith.constant 3 : index
    %c0_31 = arith.constant 0 : index
    %34 = vector.load %arg11[%c3_30, %c0_31] : memref<14x32xf32, #tpu.memory_space<vmem>>, vector<8x32xf32>
    %c4 = arith.constant 4 : index
    %c0_32 = arith.constant 0 : index
    %35 = vector.load %arg11[%c4, %c0_32] : memref<14x32xf32, #tpu.memory_space<vmem>>, vector<8x32xf32>
    %36 = tpu.concatenate %33, %34, %35 in 1 : vector<8x32xf32>, vector<8x32xf32>, vector<8x32xf32> -> vector<8x96xf32>
    %37 = arith.truncf %36 : vector<8x96xf32> to vector<8x96xbf16>
    %c1 = arith.constant 1 : index
    %c0_33 = arith.constant 0 : index
    %c0_34 = arith.constant 0 : index
    %38 = vector.load %arg2[%c1, %c0_33, %c0_34] : memref<2x96x32xbf16, #tpu.memory_space<vmem>>, vector<1x96x32xbf16>
    %39 = vector.shape_cast %38 : vector<1x96x32xbf16> to vector<96x32xbf16>
    %cst_35 = arith.constant dense<0.000000e+00> : vector<8x32xf32>
    %40 = tpu.matmul %37, %39, %cst_35 {dimension_numbers = #tpu.dot_dimension_numbers<[1], [0], [0], [1], [0, 0, 1, 1], [], []>} : vector<8x96xbf16>, vector<96x32xbf16>, vector<8x32xf32> -> vector<8x32xf32>
    %c1_36 = arith.constant 1 : index
    %c0_37 = arith.constant 0 : index
    %c0_38 = arith.constant 0 : index
    %41 = vector.load %arg3[%c1_36, %c0_37, %c0_38] : memref<2x1x32xf32, #tpu.memory_space<vmem>>, vector<1x1x32xf32>
    %42 = vector.shape_cast %41 : vector<1x1x32xf32> to vector<1x32xf32>
    %43 = vector.broadcast %42 : vector<1x32xf32> to vector<8x32xf32>
    %44 = arith.addf %40, %43 : vector<8x32xf32>
    %cst_39 = arith.constant 0.000000e+00 : f32
    %45 = vector.broadcast %cst_39 : f32 to vector<8x32xf32>
    %46 = arith.maximumf %44, %45 : vector<8x32xf32>
    %47 = arith.truncf %46 : vector<8x32xf32> to vector<8x32xbf16>
    %c1_40 = arith.constant 1 : index
    %c0_41 = arith.constant 0 : index
    %c0_42 = arith.constant 0 : index
    %48 = vector.load %arg4[%c1_40, %c0_41, %c0_42] : memref<2x32x32xbf16, #tpu.memory_space<vmem>>, vector<1x32x32xbf16>
    %49 = vector.shape_cast %48 : vector<1x32x32xbf16> to vector<32x32xbf16>
    %cst_43 = arith.constant dense<0.000000e+00> : vector<8x32xf32>
    %50 = tpu.matmul %47, %49, %cst_43 {dimension_numbers = #tpu.dot_dimension_numbers<[1], [0], [0], [1], [0, 0, 1, 1], [], []>} : vector<8x32xbf16>, vector<32x32xbf16>, vector<8x32xf32> -> vector<8x32xf32>
    %51 = arith.addf %29, %50 : vector<8x32xf32>
    %c1_44 = arith.constant 1 : index
    %c0_45 = arith.constant 0 : index
    %c0_46 = arith.constant 0 : index
    %52 = vector.load %arg5[%c1_44, %c0_45, %c0_46] : memref<2x1x32xf32, #tpu.memory_space<vmem>>, vector<1x1x32xf32>
    %53 = vector.shape_cast %52 : vector<1x1x32xf32> to vector<1x32xf32>
    %54 = vector.broadcast %53 : vector<1x32xf32> to vector<8x32xf32>
    %55 = arith.addf %51, %54 : vector<8x32xf32>
    %c3_47 = arith.constant 3 : index
    %c0_48 = arith.constant 0 : index
    %56 = vector.load %arg11[%c3_47, %c0_48] : memref<14x32xf32, #tpu.memory_space<vmem>>, vector<8x32xf32>
    tpu.vector_store %arg11[%c3_47, %c0_48], %55 {strides = array<i32>} : memref<14x32xf32, #tpu.memory_space<vmem>>, vector<8x32xf32>,
    %c2_49 = arith.constant 2 : index
    %c0_50 = arith.constant 0 : index
    %57 = vector.load %arg11[%c2_49, %c0_50] : memref<14x32xf32, #tpu.memory_space<vmem>>, vector<8x32xf32>
    %c4_51 = arith.constant 4 : index
    %c0_52 = arith.constant 0 : index
    %58 = vector.load %arg11[%c4_51, %c0_52] : memref<14x32xf32, #tpu.memory_space<vmem>>, vector<8x32xf32>
    %c0_53 = arith.constant 0 : index
    %c0_54 = arith.constant 0 : index
    %59 = vector.load %arg8[%c0_53, %c0_54] : memref<1x32xf32, #tpu.memory_space<vmem>>, vector<1x32xf32>
    %60 = tpu.concatenate %57, %55 in 1 : vector<8x32xf32>, vector<8x32xf32> -> vector<8x64xf32>
    %61 = arith.truncf %60 : vector<8x64xf32> to vector<8x64xbf16>
    %c0_55 = arith.constant 0 : index
    %c0_56 = arith.constant 0 : index
    %62 = vector.load %arg6[%c0_55, %c0_56] : memref<64x32xbf16, #tpu.memory_space<vmem>>, vector<64x32xbf16>
    %cst_57 = arith.constant dense<0.000000e+00> : vector<8x32xf32>
    %63 = tpu.matmul %61, %62, %cst_57 {dimension_numbers = #tpu.dot_dimension_numbers<[1], [0], [0], [1], [0, 0, 1, 1], [], []>} : vector<8x64xbf16>, vector<64x32xbf16>, vector<8x32xf32> -> vector<8x32xf32>
    %64 = vector.broadcast %59 : vector<1x32xf32> to vector<8x32xf32>
    %65 = arith.addf %63, %64 : vector<8x32xf32>
    %66 = tpu.concatenate %55, %58 in 1 : vector<8x32xf32>, vector<8x32xf32> -> vector<8x64xf32>
    %67 = arith.truncf %66 : vector<8x64xf32> to vector<8x64xbf16>
    %c0_58 = arith.constant 0 : index
    %c0_59 = arith.constant 0 : index
    %68 = vector.load %arg7[%c0_58, %c0_59] : memref<64x32xbf16, #tpu.memory_space<vmem>>, vector<64x32xbf16>
    %cst_60 = arith.constant dense<0.000000e+00> : vector<8x32xf32>
    %69 = tpu.matmul %67, %68, %cst_60 {dimension_numbers = #tpu.dot_dimension_numbers<[1], [0], [0], [1], [0, 0, 1, 1], [], []>} : vector<8x64xbf16>, vector<64x32xbf16>, vector<8x32xf32> -> vector<8x32xf32>
    %70 = vector.broadcast %59 : vector<1x32xf32> to vector<8x32xf32>
    %71 = arith.addf %69, %70 : vector<8x32xf32>
    %c0_61 = arith.constant 0 : index
    %c0_62 = arith.constant 0 : index
    %c0_63 = arith.constant 0 : index
    %72 = vector.load %arg9[%c0_61, %c0_62, %c0_63] : memref<1x8x32xf32, #tpu.memory_space<vmem>>, vector<1x8x32xf32>
    %73 = vector.shape_cast %72 : vector<1x8x32xf32> to vector<8x32xf32>
    %74 = vector.shape_cast %65 : vector<8x32xf32> to vector<1x8x32xf32>
    tpu.vector_store %arg9[%c0_61, %c0_62, %c0_63], %74 {strides = array<i32>} : memref<1x8x32xf32, #tpu.memory_space<vmem>>, vector<1x8x32xf32>,
    %c0_64 = arith.constant 0 : index
    %c0_65 = arith.constant 0 : index
    %c0_66 = arith.constant 0 : index
    %75 = vector.load %arg10[%c0_64, %c0_65, %c0_66] : memref<1x8x32xf32, #tpu.memory_space<vmem>>, vector<1x8x32xf32>
    %76 = vector.shape_cast %75 : vector<1x8x32xf32> to vector<8x32xf32>
    %77 = vector.shape_cast %71 : vector<8x32xf32> to vector<1x8x32xf32>
    tpu.vector_store %arg10[%c0_64, %c0_65, %c0_66], %77 {strides = array<i32>} : memref<1x8x32xf32, #tpu.memory_space<vmem>>, vector<1x8x32xf32>,
    return
  }
  func.func @transform_0(%arg0: i32) -> (i32, i32, i32) {
    %c0_i32 = arith.constant 0 : i32
    %c0_i32_0 = arith.constant 0 : i32
    %c0_i32_1 = arith.constant 0 : i32
    return %arg0, %c0_i32, %c0_i32_0 : i32, i32, i32
  }
  func.func @transform_1(%arg0: i32) -> (i32, i32, i32) {
    %c0_i32 = arith.constant 0 : i32
    %c0_i32_0 = arith.constant 0 : i32
    %c0_i32_1 = arith.constant 0 : i32
    %c0_i32_2 = arith.constant 0 : i32
    return %c0_i32, %c0_i32_0, %c0_i32_1 : i32, i32, i32
  }
  func.func @transform_2(%arg0: i32) -> (i32, i32, i32) {
    %c0_i32 = arith.constant 0 : i32
    %c0_i32_0 = arith.constant 0 : i32
    %c0_i32_1 = arith.constant 0 : i32
    %c0_i32_2 = arith.constant 0 : i32
    return %c0_i32, %c0_i32_0, %c0_i32_1 : i32, i32, i32
  }
  func.func @transform_3(%arg0: i32) -> (i32, i32, i32) {
    %c0_i32 = arith.constant 0 : i32
    %c0_i32_0 = arith.constant 0 : i32
    %c0_i32_1 = arith.constant 0 : i32
    %c0_i32_2 = arith.constant 0 : i32
    return %c0_i32, %c0_i32_0, %c0_i32_1 : i32, i32, i32
  }
  func.func @transform_4(%arg0: i32) -> (i32, i32, i32) {
    %c0_i32 = arith.constant 0 : i32
    %c0_i32_0 = arith.constant 0 : i32
    %c0_i32_1 = arith.constant 0 : i32
    %c0_i32_2 = arith.constant 0 : i32
    return %c0_i32, %c0_i32_0, %c0_i32_1 : i32, i32, i32
  }
  func.func @transform_5(%arg0: i32) -> (i32, i32) {
    %c0_i32 = arith.constant 0 : i32
    %c0_i32_0 = arith.constant 0 : i32
    %c0_i32_1 = arith.constant 0 : i32
    return %c0_i32, %c0_i32_0 : i32, i32
  }
  func.func @transform_6(%arg0: i32) -> (i32, i32) {
    %c0_i32 = arith.constant 0 : i32
    %c0_i32_0 = arith.constant 0 : i32
    %c0_i32_1 = arith.constant 0 : i32
    return %c0_i32, %c0_i32_0 : i32, i32
  }
  func.func @transform_7(%arg0: i32) -> (i32, i32) {
    %c0_i32 = arith.constant 0 : i32
    %c0_i32_0 = arith.constant 0 : i32
    %c0_i32_1 = arith.constant 0 : i32
    return %c0_i32, %c0_i32_0 : i32, i32
  }
  func.func @transform_8(%arg0: i32) -> (i32, i32, i32) {
    %c0_i32 = arith.constant 0 : i32
    %c0_i32_0 = arith.constant 0 : i32
    %c0_i32_1 = arith.constant 0 : i32
    return %arg0, %c0_i32, %c0_i32_0 : i32, i32, i32
  }
  func.func @transform_9(%arg0: i32) -> (i32, i32, i32) {
    %c0_i32 = arith.constant 0 : i32
    %c0_i32_0 = arith.constant 0 : i32
    %c0_i32_1 = arith.constant 0 : i32
    return %arg0, %c0_i32, %c0_i32_0 : i32, i32, i32
  }
}

module attributes {stable_mosaic.version = 11 : i64} {
  func.func @_down_block_kernel(%arg0: i32, %arg1: memref<1x16x32xf32, #tpu.memory_space<vmem>>, %arg2: memref<2x96x32xbf16, #tpu.memory_space<vmem>>, %arg3: memref<2x1x32xf32, #tpu.memory_space<vmem>>, %arg4: memref<2x32x32xbf16, #tpu.memory_space<vmem>>, %arg5: memref<2x1x32xf32, #tpu.memory_space<vmem>>, %arg6: memref<64x32xbf16, #tpu.memory_space<vmem>>, %arg7: memref<64x32xbf16, #tpu.memory_space<vmem>>, %arg8: memref<1x32xf32, #tpu.memory_space<vmem>>, %arg9: memref<1x16x32xf32, #tpu.memory_space<vmem>>, %arg10: memref<1x16x32xf32, #tpu.memory_space<vmem>>, %arg11: memref<22x32xf32, #tpu.memory_space<vmem>>) attributes {dimension_semantics = [#tpu.dimension_semantics<parallel>], iteration_bounds = array<i64: 2>, scalar_prefetch = 0 : i64, scratch_operands = 1 : i64, tpu.core_type = #tpu.core_type<tc>, window_params = [{transform_indices = @transform_0, window_bounds = array<i64: 1, 16, 32>}, {pipeline_mode = #tpu.pipeline_mode<synchronous>, transform_indices = @transform_1, window_bounds = array<i64: 2, 96, 32>}, {pipeline_mode = #tpu.pipeline_mode<synchronous>, transform_indices = @transform_2, window_bounds = array<i64: 2, 1, 32>}, {pipeline_mode = #tpu.pipeline_mode<synchronous>, transform_indices = @transform_3, window_bounds = array<i64: 2, 32, 32>}, {pipeline_mode = #tpu.pipeline_mode<synchronous>, transform_indices = @transform_4, window_bounds = array<i64: 2, 1, 32>}, {pipeline_mode = #tpu.pipeline_mode<synchronous>, transform_indices = @transform_5, window_bounds = array<i64: 64, 32>}, {pipeline_mode = #tpu.pipeline_mode<synchronous>, transform_indices = @transform_6, window_bounds = array<i64: 64, 32>}, {pipeline_mode = #tpu.pipeline_mode<synchronous>, transform_indices = @transform_7, window_bounds = array<i64: 1, 32>}, {transform_indices = @transform_8, window_bounds = array<i64: 1, 16, 32>}, {transform_indices = @transform_9, window_bounds = array<i64: 1, 16, 32>}]} {
    %cst = arith.constant 0.000000e+00 : f32
    %0 = vector.broadcast %cst : f32 to vector<22x32xf32>
    %c0 = arith.constant 0 : index
    %c0_0 = arith.constant 0 : index
    %1 = vector.load %arg11[%c0, %c0_0] : memref<22x32xf32, #tpu.memory_space<vmem>>, vector<22x32xf32>
    tpu.vector_store %arg11[%c0, %c0_0], %0 {strides = array<i32>} : memref<22x32xf32, #tpu.memory_space<vmem>>, vector<22x32xf32>,
    %c0_1 = arith.constant 0 : index
    %c0_2 = arith.constant 0 : index
    %c0_3 = arith.constant 0 : index
    %2 = vector.load %arg1[%c0_1, %c0_2, %c0_3] : memref<1x16x32xf32, #tpu.memory_space<vmem>>, vector<1x16x32xf32>
    %3 = vector.shape_cast %2 : vector<1x16x32xf32> to vector<16x32xf32>
    %cst_4 = arith.constant 0.000000e+00 : f32
    %4 = vector.broadcast %cst_4 : f32 to vector<16x32xf32>
    %5 = arith.maximumf %3, %4 : vector<16x32xf32>
    %c3 = arith.constant 3 : index
    %c0_5 = arith.constant 0 : index
    %6 = vector.load %arg11[%c3, %c0_5] : memref<22x32xf32, #tpu.memory_space<vmem>>, vector<16x32xf32>
    tpu.vector_store %arg11[%c3, %c0_5], %5 {strides = array<i32>} : memref<22x32xf32, #tpu.memory_space<vmem>>, vector<16x32xf32>,
    %c0_6 = arith.constant 0 : index
    %c0_7 = arith.constant 0 : index
    %7 = vector.load %arg11[%c0_6, %c0_7] : memref<22x32xf32, #tpu.memory_space<vmem>>, vector<16x32xf32>
    %c3_8 = arith.constant 3 : index
    %c0_9 = arith.constant 0 : index
    %8 = vector.load %arg11[%c3_8, %c0_9] : memref<22x32xf32, #tpu.memory_space<vmem>>, vector<16x32xf32>
    %c6 = arith.constant 6 : index
    %c0_10 = arith.constant 0 : index
    %9 = vector.load %arg11[%c6, %c0_10] : memref<22x32xf32, #tpu.memory_space<vmem>>, vector<16x32xf32>
    %10 = tpu.concatenate %7, %8, %9 in 1 : vector<16x32xf32>, vector<16x32xf32>, vector<16x32xf32> -> vector<16x96xf32>
    %11 = arith.truncf %10 : vector<16x96xf32> to vector<16x96xbf16>
    %c0_11 = arith.constant 0 : index
    %c0_12 = arith.constant 0 : index
    %c0_13 = arith.constant 0 : index
    %12 = vector.load %arg2[%c0_11, %c0_12, %c0_13] : memref<2x96x32xbf16, #tpu.memory_space<vmem>>, vector<1x96x32xbf16>
    %13 = vector.shape_cast %12 : vector<1x96x32xbf16> to vector<96x32xbf16>
    %cst_14 = arith.constant dense<0.000000e+00> : vector<16x32xf32>
    %14 = tpu.matmul %11, %13, %cst_14 {dimension_numbers = #tpu.dot_dimension_numbers<[1], [0], [0], [1], [0, 0, 1, 1], [], []>} : vector<16x96xbf16>, vector<96x32xbf16>, vector<16x32xf32> -> vector<16x32xf32>
    %c0_15 = arith.constant 0 : index
    %c0_16 = arith.constant 0 : index
    %c0_17 = arith.constant 0 : index
    %15 = vector.load %arg3[%c0_15, %c0_16, %c0_17] : memref<2x1x32xf32, #tpu.memory_space<vmem>>, vector<1x1x32xf32>
    %16 = vector.shape_cast %15 : vector<1x1x32xf32> to vector<1x32xf32>
    %17 = vector.broadcast %16 : vector<1x32xf32> to vector<16x32xf32>
    %18 = arith.addf %14, %17 : vector<16x32xf32>
    %cst_18 = arith.constant 0.000000e+00 : f32
    %19 = vector.broadcast %cst_18 : f32 to vector<16x32xf32>
    %20 = arith.maximumf %18, %19 : vector<16x32xf32>
    %21 = arith.truncf %20 : vector<16x32xf32> to vector<16x32xbf16>
    %c0_19 = arith.constant 0 : index
    %c0_20 = arith.constant 0 : index
    %c0_21 = arith.constant 0 : index
    %22 = vector.load %arg4[%c0_19, %c0_20, %c0_21] : memref<2x32x32xbf16, #tpu.memory_space<vmem>>, vector<1x32x32xbf16>
    %23 = vector.shape_cast %22 : vector<1x32x32xbf16> to vector<32x32xbf16>
    %cst_22 = arith.constant dense<0.000000e+00> : vector<16x32xf32>
    %24 = tpu.matmul %21, %23, %cst_22 {dimension_numbers = #tpu.dot_dimension_numbers<[1], [0], [0], [1], [0, 0, 1, 1], [], []>} : vector<16x32xbf16>, vector<32x32xbf16>, vector<16x32xf32> -> vector<16x32xf32>
    %25 = arith.addf %3, %24 : vector<16x32xf32>
    %c0_23 = arith.constant 0 : index
    %c0_24 = arith.constant 0 : index
    %c0_25 = arith.constant 0 : index
    %26 = vector.load %arg5[%c0_23, %c0_24, %c0_25] : memref<2x1x32xf32, #tpu.memory_space<vmem>>, vector<1x1x32xf32>
    %27 = vector.shape_cast %26 : vector<1x1x32xf32> to vector<1x32xf32>
    %28 = vector.broadcast %27 : vector<1x32xf32> to vector<16x32xf32>
    %29 = arith.addf %25, %28 : vector<16x32xf32>
    %cst_26 = arith.constant 0.000000e+00 : f32
    %30 = vector.broadcast %cst_26 : f32 to vector<16x32xf32>
    %31 = arith.maximumf %29, %30 : vector<16x32xf32>
    %c3_27 = arith.constant 3 : index
    %c0_28 = arith.constant 0 : index
    %32 = vector.load %arg11[%c3_27, %c0_28] : memref<22x32xf32, #tpu.memory_space<vmem>>, vector<16x32xf32>
    tpu.vector_store %arg11[%c3_27, %c0_28], %31 {strides = array<i32>} : memref<22x32xf32, #tpu.memory_space<vmem>>, vector<16x32xf32>,
    %c2 = arith.constant 2 : index
    %c0_29 = arith.constant 0 : index
    %33 = vector.load %arg11[%c2, %c0_29] : memref<22x32xf32, #tpu.memory_space<vmem>>, vector<16x32xf32>
    %c3_30 = arith.constant 3 : index
    %c0_31 = arith.constant 0 : index
    %34 = vector.load %arg11[%c3_30, %c0_31] : memref<22x32xf32, #tpu.memory_space<vmem>>, vector<16x32xf32>
    %c4 = arith.constant 4 : index
    %c0_32 = arith.constant 0 : index
    %35 = vector.load %arg11[%c4, %c0_32] : memref<22x32xf32, #tpu.memory_space<vmem>>, vector<16x32xf32>
    %36 = tpu.concatenate %33, %34, %35 in 1 : vector<16x32xf32>, vector<16x32xf32>, vector<16x32xf32> -> vector<16x96xf32>
    %37 = arith.truncf %36 : vector<16x96xf32> to vector<16x96xbf16>
    %c1 = arith.constant 1 : index
    %c0_33 = arith.constant 0 : index
    %c0_34 = arith.constant 0 : index
    %38 = vector.load %arg2[%c1, %c0_33, %c0_34] : memref<2x96x32xbf16, #tpu.memory_space<vmem>>, vector<1x96x32xbf16>
    %39 = vector.shape_cast %38 : vector<1x96x32xbf16> to vector<96x32xbf16>
    %cst_35 = arith.constant dense<0.000000e+00> : vector<16x32xf32>
    %40 = tpu.matmul %37, %39, %cst_35 {dimension_numbers = #tpu.dot_dimension_numbers<[1], [0], [0], [1], [0, 0, 1, 1], [], []>} : vector<16x96xbf16>, vector<96x32xbf16>, vector<16x32xf32> -> vector<16x32xf32>
    %c1_36 = arith.constant 1 : index
    %c0_37 = arith.constant 0 : index
    %c0_38 = arith.constant 0 : index
    %41 = vector.load %arg3[%c1_36, %c0_37, %c0_38] : memref<2x1x32xf32, #tpu.memory_space<vmem>>, vector<1x1x32xf32>
    %42 = vector.shape_cast %41 : vector<1x1x32xf32> to vector<1x32xf32>
    %43 = vector.broadcast %42 : vector<1x32xf32> to vector<16x32xf32>
    %44 = arith.addf %40, %43 : vector<16x32xf32>
    %cst_39 = arith.constant 0.000000e+00 : f32
    %45 = vector.broadcast %cst_39 : f32 to vector<16x32xf32>
    %46 = arith.maximumf %44, %45 : vector<16x32xf32>
    %47 = arith.truncf %46 : vector<16x32xf32> to vector<16x32xbf16>
    %c1_40 = arith.constant 1 : index
    %c0_41 = arith.constant 0 : index
    %c0_42 = arith.constant 0 : index
    %48 = vector.load %arg4[%c1_40, %c0_41, %c0_42] : memref<2x32x32xbf16, #tpu.memory_space<vmem>>, vector<1x32x32xbf16>
    %49 = vector.shape_cast %48 : vector<1x32x32xbf16> to vector<32x32xbf16>
    %cst_43 = arith.constant dense<0.000000e+00> : vector<16x32xf32>
    %50 = tpu.matmul %47, %49, %cst_43 {dimension_numbers = #tpu.dot_dimension_numbers<[1], [0], [0], [1], [0, 0, 1, 1], [], []>} : vector<16x32xbf16>, vector<32x32xbf16>, vector<16x32xf32> -> vector<16x32xf32>
    %51 = arith.addf %29, %50 : vector<16x32xf32>
    %c1_44 = arith.constant 1 : index
    %c0_45 = arith.constant 0 : index
    %c0_46 = arith.constant 0 : index
    %52 = vector.load %arg5[%c1_44, %c0_45, %c0_46] : memref<2x1x32xf32, #tpu.memory_space<vmem>>, vector<1x1x32xf32>
    %53 = vector.shape_cast %52 : vector<1x1x32xf32> to vector<1x32xf32>
    %54 = vector.broadcast %53 : vector<1x32xf32> to vector<16x32xf32>
    %55 = arith.addf %51, %54 : vector<16x32xf32>
    %c3_47 = arith.constant 3 : index
    %c0_48 = arith.constant 0 : index
    %56 = vector.load %arg11[%c3_47, %c0_48] : memref<22x32xf32, #tpu.memory_space<vmem>>, vector<16x32xf32>
    tpu.vector_store %arg11[%c3_47, %c0_48], %55 {strides = array<i32>} : memref<22x32xf32, #tpu.memory_space<vmem>>, vector<16x32xf32>,
    %c2_49 = arith.constant 2 : index
    %c0_50 = arith.constant 0 : index
    %57 = vector.load %arg11[%c2_49, %c0_50] : memref<22x32xf32, #tpu.memory_space<vmem>>, vector<16x32xf32>
    %c4_51 = arith.constant 4 : index
    %c0_52 = arith.constant 0 : index
    %58 = vector.load %arg11[%c4_51, %c0_52] : memref<22x32xf32, #tpu.memory_space<vmem>>, vector<16x32xf32>
    %c0_53 = arith.constant 0 : index
    %c0_54 = arith.constant 0 : index
    %59 = vector.load %arg8[%c0_53, %c0_54] : memref<1x32xf32, #tpu.memory_space<vmem>>, vector<1x32xf32>
    %60 = tpu.concatenate %57, %55 in 1 : vector<16x32xf32>, vector<16x32xf32> -> vector<16x64xf32>
    %61 = arith.truncf %60 : vector<16x64xf32> to vector<16x64xbf16>
    %c0_55 = arith.constant 0 : index
    %c0_56 = arith.constant 0 : index
    %62 = vector.load %arg6[%c0_55, %c0_56] : memref<64x32xbf16, #tpu.memory_space<vmem>>, vector<64x32xbf16>
    %cst_57 = arith.constant dense<0.000000e+00> : vector<16x32xf32>
    %63 = tpu.matmul %61, %62, %cst_57 {dimension_numbers = #tpu.dot_dimension_numbers<[1], [0], [0], [1], [0, 0, 1, 1], [], []>} : vector<16x64xbf16>, vector<64x32xbf16>, vector<16x32xf32> -> vector<16x32xf32>
    %64 = vector.broadcast %59 : vector<1x32xf32> to vector<16x32xf32>
    %65 = arith.addf %63, %64 : vector<16x32xf32>
    %66 = tpu.concatenate %55, %58 in 1 : vector<16x32xf32>, vector<16x32xf32> -> vector<16x64xf32>
    %67 = arith.truncf %66 : vector<16x64xf32> to vector<16x64xbf16>
    %c0_58 = arith.constant 0 : index
    %c0_59 = arith.constant 0 : index
    %68 = vector.load %arg7[%c0_58, %c0_59] : memref<64x32xbf16, #tpu.memory_space<vmem>>, vector<64x32xbf16>
    %cst_60 = arith.constant dense<0.000000e+00> : vector<16x32xf32>
    %69 = tpu.matmul %67, %68, %cst_60 {dimension_numbers = #tpu.dot_dimension_numbers<[1], [0], [0], [1], [0, 0, 1, 1], [], []>} : vector<16x64xbf16>, vector<64x32xbf16>, vector<16x32xf32> -> vector<16x32xf32>
    %70 = vector.broadcast %59 : vector<1x32xf32> to vector<16x32xf32>
    %71 = arith.addf %69, %70 : vector<16x32xf32>
    %c0_61 = arith.constant 0 : index
    %c0_62 = arith.constant 0 : index
    %c0_63 = arith.constant 0 : index
    %72 = vector.load %arg9[%c0_61, %c0_62, %c0_63] : memref<1x16x32xf32, #tpu.memory_space<vmem>>, vector<1x16x32xf32>
    %73 = vector.shape_cast %72 : vector<1x16x32xf32> to vector<16x32xf32>
    %74 = vector.shape_cast %65 : vector<16x32xf32> to vector<1x16x32xf32>
    tpu.vector_store %arg9[%c0_61, %c0_62, %c0_63], %74 {strides = array<i32>} : memref<1x16x32xf32, #tpu.memory_space<vmem>>, vector<1x16x32xf32>,
    %c0_64 = arith.constant 0 : index
    %c0_65 = arith.constant 0 : index
    %c0_66 = arith.constant 0 : index
    %75 = vector.load %arg10[%c0_64, %c0_65, %c0_66] : memref<1x16x32xf32, #tpu.memory_space<vmem>>, vector<1x16x32xf32>
    %76 = vector.shape_cast %75 : vector<1x16x32xf32> to vector<16x32xf32>
    %77 = vector.shape_cast %71 : vector<16x32xf32> to vector<1x16x32xf32>
    tpu.vector_store %arg10[%c0_64, %c0_65, %c0_66], %77 {strides = array<i32>} : memref<1x16x32xf32, #tpu.memory_space<vmem>>, vector<1x16x32xf32>,
    return
  }
  func.func @transform_0(%arg0: i32) -> (i32, i32, i32) {
    %c0_i32 = arith.constant 0 : i32
    %c0_i32_0 = arith.constant 0 : i32
    %c0_i32_1 = arith.constant 0 : i32
    return %arg0, %c0_i32, %c0_i32_0 : i32, i32, i32
  }
  func.func @transform_1(%arg0: i32) -> (i32, i32, i32) {
    %c0_i32 = arith.constant 0 : i32
    %c0_i32_0 = arith.constant 0 : i32
    %c0_i32_1 = arith.constant 0 : i32
    %c0_i32_2 = arith.constant 0 : i32
    return %c0_i32, %c0_i32_0, %c0_i32_1 : i32, i32, i32
  }
  func.func @transform_2(%arg0: i32) -> (i32, i32, i32) {
    %c0_i32 = arith.constant 0 : i32
    %c0_i32_0 = arith.constant 0 : i32
    %c0_i32_1 = arith.constant 0 : i32
    %c0_i32_2 = arith.constant 0 : i32
    return %c0_i32, %c0_i32_0, %c0_i32_1 : i32, i32, i32
  }
  func.func @transform_3(%arg0: i32) -> (i32, i32, i32) {
    %c0_i32 = arith.constant 0 : i32
    %c0_i32_0 = arith.constant 0 : i32
    %c0_i32_1 = arith.constant 0 : i32
    %c0_i32_2 = arith.constant 0 : i32
    return %c0_i32, %c0_i32_0, %c0_i32_1 : i32, i32, i32
  }
  func.func @transform_4(%arg0: i32) -> (i32, i32, i32) {
    %c0_i32 = arith.constant 0 : i32
    %c0_i32_0 = arith.constant 0 : i32
    %c0_i32_1 = arith.constant 0 : i32
    %c0_i32_2 = arith.constant 0 : i32
    return %c0_i32, %c0_i32_0, %c0_i32_1 : i32, i32, i32
  }
  func.func @transform_5(%arg0: i32) -> (i32, i32) {
    %c0_i32 = arith.constant 0 : i32
    %c0_i32_0 = arith.constant 0 : i32
    %c0_i32_1 = arith.constant 0 : i32
    return %c0_i32, %c0_i32_0 : i32, i32
  }
  func.func @transform_6(%arg0: i32) -> (i32, i32) {
    %c0_i32 = arith.constant 0 : i32
    %c0_i32_0 = arith.constant 0 : i32
    %c0_i32_1 = arith.constant 0 : i32
    return %c0_i32, %c0_i32_0 : i32, i32
  }
  func.func @transform_7(%arg0: i32) -> (i32, i32) {
    %c0_i32 = arith.constant 0 : i32
    %c0_i32_0 = arith.constant 0 : i32
    %c0_i32_1 = arith.constant 0 : i32
    return %c0_i32, %c0_i32_0 : i32, i32
  }
  func.func @transform_8(%arg0: i32) -> (i32, i32, i32) {
    %c0_i32 = arith.constant 0 : i32
    %c0_i32_0 = arith.constant 0 : i32
    %c0_i32_1 = arith.constant 0 : i32
    return %arg0, %c0_i32, %c0_i32_0 : i32, i32, i32
  }
  func.func @transform_9(%arg0: i32) -> (i32, i32, i32) {
    %c0_i32 = arith.constant 0 : i32
    %c0_i32_0 = arith.constant 0 : i32
    %c0_i32_1 = arith.constant 0 : i32
    return %arg0, %c0_i32, %c0_i32_0 : i32, i32, i32
  }
}

module attributes {stable_mosaic.version = 11 : i64} {
  func.func @_tail_kernel(%arg0: i32, %arg1: memref<1x32x32xf32, #tpu.memory_space<vmem>>, %arg2: memref<96x32xbf16, #tpu.memory_space<vmem>>, %arg3: memref<1x32xf32, #tpu.memory_space<vmem>>, %arg4: memref<96x3xbf16, #tpu.memory_space<vmem>>, %arg5: memref<1x3xf32, #tpu.memory_space<vmem>>, %arg6: memref<1x32x3xf32, #tpu.memory_space<vmem>>, %arg7: memref<34x32xf32, #tpu.memory_space<vmem>>) attributes {dimension_semantics = [#tpu.dimension_semantics<parallel>], iteration_bounds = array<i64: 2>, scalar_prefetch = 0 : i64, scratch_operands = 1 : i64, tpu.core_type = #tpu.core_type<tc>, window_params = [{transform_indices = @transform_0, window_bounds = array<i64: 1, 32, 32>}, {pipeline_mode = #tpu.pipeline_mode<synchronous>, transform_indices = @transform_1, window_bounds = array<i64: 96, 32>}, {pipeline_mode = #tpu.pipeline_mode<synchronous>, transform_indices = @transform_2, window_bounds = array<i64: 1, 32>}, {pipeline_mode = #tpu.pipeline_mode<synchronous>, transform_indices = @transform_3, window_bounds = array<i64: 96, 3>}, {pipeline_mode = #tpu.pipeline_mode<synchronous>, transform_indices = @transform_4, window_bounds = array<i64: 1, 3>}, {transform_indices = @transform_5, window_bounds = array<i64: 1, 32, 3>}]} {
    %cst = arith.constant 0.000000e+00 : f32
    %0 = vector.broadcast %cst : f32 to vector<34x32xf32>
    %c0 = arith.constant 0 : index
    %c0_0 = arith.constant 0 : index
    %1 = vector.load %arg7[%c0, %c0_0] : memref<34x32xf32, #tpu.memory_space<vmem>>, vector<34x32xf32>
    tpu.vector_store %arg7[%c0, %c0_0], %0 {strides = array<i32>} : memref<34x32xf32, #tpu.memory_space<vmem>>, vector<34x32xf32>,
    %c0_1 = arith.constant 0 : index
    %c0_2 = arith.constant 0 : index
    %c0_3 = arith.constant 0 : index
    %2 = vector.load %arg1[%c0_1, %c0_2, %c0_3] : memref<1x32x32xf32, #tpu.memory_space<vmem>>, vector<1x32x32xf32>
    %3 = vector.shape_cast %2 : vector<1x32x32xf32> to vector<32x32xf32>
    %c1 = arith.constant 1 : index
    %c0_4 = arith.constant 0 : index
    %4 = vector.load %arg7[%c1, %c0_4] : memref<34x32xf32, #tpu.memory_space<vmem>>, vector<32x32xf32>
    tpu.vector_store %arg7[%c1, %c0_4], %3 {strides = array<i32>} : memref<34x32xf32, #tpu.memory_space<vmem>>, vector<32x32xf32>,
    %c0_5 = arith.constant 0 : index
    %c0_6 = arith.constant 0 : index
    %5 = vector.load %arg7[%c0_5, %c0_6] : memref<34x32xf32, #tpu.memory_space<vmem>>, vector<32x32xf32>
    %c1_7 = arith.constant 1 : index
    %c0_8 = arith.constant 0 : index
    %6 = vector.load %arg7[%c1_7, %c0_8] : memref<34x32xf32, #tpu.memory_space<vmem>>, vector<32x32xf32>
    %c2 = arith.constant 2 : index
    %c0_9 = arith.constant 0 : index
    %7 = vector.load %arg7[%c2, %c0_9] : memref<34x32xf32, #tpu.memory_space<vmem>>, vector<32x32xf32>
    %8 = tpu.concatenate %5, %6, %7 in 1 : vector<32x32xf32>, vector<32x32xf32>, vector<32x32xf32> -> vector<32x96xf32>
    %9 = arith.truncf %8 : vector<32x96xf32> to vector<32x96xbf16>
    %c0_10 = arith.constant 0 : index
    %c0_11 = arith.constant 0 : index
    %10 = vector.load %arg2[%c0_10, %c0_11] : memref<96x32xbf16, #tpu.memory_space<vmem>>, vector<96x32xbf16>
    %cst_12 = arith.constant dense<0.000000e+00> : vector<32x32xf32>
    %11 = tpu.matmul %9, %10, %cst_12 {dimension_numbers = #tpu.dot_dimension_numbers<[1], [0], [0], [1], [0, 0, 1, 1], [], []>} : vector<32x96xbf16>, vector<96x32xbf16>, vector<32x32xf32> -> vector<32x32xf32>
    %c0_13 = arith.constant 0 : index
    %c0_14 = arith.constant 0 : index
    %12 = vector.load %arg3[%c0_13, %c0_14] : memref<1x32xf32, #tpu.memory_space<vmem>>, vector<1x32xf32>
    %13 = vector.broadcast %12 : vector<1x32xf32> to vector<32x32xf32>
    %14 = arith.addf %11, %13 : vector<32x32xf32>
    %cst_15 = arith.constant 0.000000e+00 : f32
    %15 = vector.broadcast %cst_15 : f32 to vector<32x32xf32>
    %16 = arith.maximumf %14, %15 : vector<32x32xf32>
    %c1_16 = arith.constant 1 : index
    %c0_17 = arith.constant 0 : index
    %17 = vector.load %arg7[%c1_16, %c0_17] : memref<34x32xf32, #tpu.memory_space<vmem>>, vector<32x32xf32>
    tpu.vector_store %arg7[%c1_16, %c0_17], %16 {strides = array<i32>} : memref<34x32xf32, #tpu.memory_space<vmem>>, vector<32x32xf32>,
    %c0_18 = arith.constant 0 : index
    %c0_19 = arith.constant 0 : index
    %18 = vector.load %arg7[%c0_18, %c0_19] : memref<34x32xf32, #tpu.memory_space<vmem>>, vector<32x32xf32>
    %c1_20 = arith.constant 1 : index
    %c0_21 = arith.constant 0 : index
    %19 = vector.load %arg7[%c1_20, %c0_21] : memref<34x32xf32, #tpu.memory_space<vmem>>, vector<32x32xf32>
    %c2_22 = arith.constant 2 : index
    %c0_23 = arith.constant 0 : index
    %20 = vector.load %arg7[%c2_22, %c0_23] : memref<34x32xf32, #tpu.memory_space<vmem>>, vector<32x32xf32>
    %21 = tpu.concatenate %18, %19, %20 in 1 : vector<32x32xf32>, vector<32x32xf32>, vector<32x32xf32> -> vector<32x96xf32>
    %22 = arith.truncf %21 : vector<32x96xf32> to vector<32x96xbf16>
    %c0_24 = arith.constant 0 : index
    %c0_25 = arith.constant 0 : index
    %23 = vector.load %arg4[%c0_24, %c0_25] : memref<96x3xbf16, #tpu.memory_space<vmem>>, vector<96x3xbf16>
    %cst_26 = arith.constant dense<0.000000e+00> : vector<32x3xf32>
    %24 = tpu.matmul %22, %23, %cst_26 {dimension_numbers = #tpu.dot_dimension_numbers<[1], [0], [0], [1], [0, 0, 1, 1], [], []>} : vector<32x96xbf16>, vector<96x3xbf16>, vector<32x3xf32> -> vector<32x3xf32>
    %c0_27 = arith.constant 0 : index
    %c0_28 = arith.constant 0 : index
    %25 = vector.load %arg5[%c0_27, %c0_28] : memref<1x3xf32, #tpu.memory_space<vmem>>, vector<1x3xf32>
    %26 = vector.broadcast %25 : vector<1x3xf32> to vector<32x3xf32>
    %27 = arith.addf %24, %26 : vector<32x3xf32>
    %c0_29 = arith.constant 0 : index
    %c0_30 = arith.constant 0 : index
    %c0_31 = arith.constant 0 : index
    %28 = vector.load %arg6[%c0_29, %c0_30, %c0_31] : memref<1x32x3xf32, #tpu.memory_space<vmem>>, vector<1x32x3xf32>
    %29 = vector.shape_cast %28 : vector<1x32x3xf32> to vector<32x3xf32>
    %30 = vector.shape_cast %27 : vector<32x3xf32> to vector<1x32x3xf32>
    tpu.vector_store %arg6[%c0_29, %c0_30, %c0_31], %30 {strides = array<i32>} : memref<1x32x3xf32, #tpu.memory_space<vmem>>, vector<1x32x3xf32>,
    return
  }
  func.func @transform_0(%arg0: i32) -> (i32, i32, i32) {
    %c0_i32 = arith.constant 0 : i32
    %c0_i32_0 = arith.constant 0 : i32
    %c0_i32_1 = arith.constant 0 : i32
    return %arg0, %c0_i32, %c0_i32_0 : i32, i32, i32
  }
  func.func @transform_1(%arg0: i32) -> (i32, i32) {
    %c0_i32 = arith.constant 0 : i32
    %c0_i32_0 = arith.constant 0 : i32
    %c0_i32_1 = arith.constant 0 : i32
    return %c0_i32, %c0_i32_0 : i32, i32
  }
  func.func @transform_2(%arg0: i32) -> (i32, i32) {
    %c0_i32 = arith.constant 0 : i32
    %c0_i32_0 = arith.constant 0 : i32
    %c0_i32_1 = arith.constant 0 : i32
    return %c0_i32, %c0_i32_0 : i32, i32
  }
  func.func @transform_3(%arg0: i32) -> (i32, i32) {
    %c0_i32 = arith.constant 0 : i32
    %c0_i32_0 = arith.constant 0 : i32
    %c0_i32_1 = arith.constant 0 : i32
    return %c0_i32, %c0_i32_0 : i32, i32
  }
  func.func @transform_4(%arg0: i32) -> (i32, i32) {
    %c0_i32 = arith.constant 0 : i32
    %c0_i32_0 = arith.constant 0 : i32
    %c0_i32_1 = arith.constant 0 : i32
    return %c0_i32, %c0_i32_0 : i32, i32
  }
  func.func @transform_5(%arg0: i32) -> (i32, i32, i32) {
    %c0_i32 = arith.constant 0 : i32
    %c0_i32_0 = arith.constant 0 : i32
    %c0_i32_1 = arith.constant 0 : i32
    return %arg0, %c0_i32, %c0_i32_0 : i32, i32, i32
  }
}

</mosaic_0001>

<llo_original>
// kernel: decoder_forward_pallas.4
$region0: #{decoder_forward_pallas.4}
  #allocation0 [shape = 'u32[]', space=smem, size = 0x4, offset = 0x4, fixed_abs, tag = 'smem constant byte address 0x4 - core index']
  #allocation1 [shape = 'u32[144,128]{1,0:T(1,128)}', space=vmem, size = 0x12000, scoped, tag = 'internal scratch']
  #allocation2 [shape = 'f32[10,32]{1,0:T(8,128)}', space=vmem, size = 0x2000, scoped, tag = 'scratch operand']
  %s0 = inlined_call_operand.vmem [shape: f32[2,8,32], index: 0, kind: input, shape index: {}]
  %s1 = inlined_call_operand.vmem [shape: bf16[96,32], index: 1, kind: input, shape index: {}]
  %s2 = inlined_call_operand.vmem [shape: f32[1,32], index: 2, kind: input, shape index: {}]
  %s3 = inlined_call_operand.vmem [shape: f32[2,8,32], index: 3, kind: output, shape index: {}]
  %s4 = sld [smem:[#allocation0]]
  $region45: #{decoder_forward_pallas.4} parent=0
    _
  %s6 = ssub.s32 1, %s4
  %s7 = scalar_select 0, %s6, %s4
  loop: start=0, step=1, limit=4
  $region2: #{decoder_forward_pallas.4} parent=0 // loop_pre_header
    _
  $region3: #{decoder_forward_pallas.4} parent=0 // loop_header
    %s9 = sphi 0, %s13
    %p10 = scmp.ge.s32.totalorder %s9, 4
    %s19 = sphi 0, %s21
    %s22 = sphi 0, %s19
    %s23 = sphi 0, %s22
    %s39 = sphi 0, %s23
    %s43 = sphi 0, %s43
    %s45 = sphi 0, %s43
    %s46 = sphi 0, %s45
    %s60 = sphi 0, %s46
    %s64 = sphi 0, %s64
    %s66 = sphi 0, %s64
    %s67 = sphi 0, %s66
    %s81 = sphi 0, %s67
    %s87 = sphi 0, %s89
    %s90 = sphi 0, %s87
    %s91 = sphi 0, %s90
    %s107 = sphi 0, %s91
  $region4: #{decoder_forward_pallas.4} parent=0 // loop_header_branch
    %12 = sbr.rel (%p10) target = $region8
  $region5: #{decoder_forward_pallas.4} parent=0 // loop_body
    %s14 = ssub.s32 %s9, 1
    %s15 = ssub.s32 %s9, 2
    %s16 = sadd.s32 %s9, 1
    %s17 = ssub.s32 %s9, %s16
    %p18 = scmp.eq.s32.totalorder %s17, 0
    %s20 = sadd.s32 %s19, 1
    %s21 = scalar_select %p18, %s19, %s20
    %p24 = pneg %p18
    %p25 = scmp.eq.s32.totalorder %s9, 1
    %p26 = por %p24, %p25
    %p27 = scmp.ne.s32.totalorder %s19, %s22
    %p28 = scmp.eq.s32.totalorder %s9, 0
    %p29 = por %p27, %p28
    %p30 = scmp.ne.s32.totalorder %s19, %s22
    %p31 = scmp.eq.s32.totalorder %s14, 1
    %p32 = por %p30, %p31
    %p33 = scmp.ne.s32.totalorder %s22, %s23
    %p34 = scmp.eq.s32.totalorder %s14, 0
    %p35 = por %p33, %p34
    %p36 = scmp.ne.s32.totalorder %s22, %s23
    %p37 = scmp.eq.s32.totalorder %s15, 1
    %p38 = por %p36, %p37
    %p40 = scmp.ne.s32.totalorder %s23, %s39
    %p41 = scmp.eq.s32.totalorder %s15, 0
    %p42 = por %p40, %p41
    %s44 = sadd.s32 %s43, 1
    %p47 = scmp.eq.s32.totalorder %s9, 1
    %p48 = scmp.ne.s32.totalorder %s43, %s45
    %p49 = scmp.eq.s32.totalorder %s9, 0
    %p50 = por %p48, %p49
    %p51 = scmp.ne.s32.totalorder %s43, %s45
    %p52 = scmp.eq.s32.totalorder %s14, 1
    %p53 = por %p51, %p52
    %p54 = scmp.ne.s32.totalorder %s45, %s46
    %p55 = scmp.eq.s32.totalorder %s14, 0
    %p56 = por %p54, %p55
    %p57 = scmp.ne.s32.totalorder %s45, %s46
    %p58 = scmp.eq.s32.totalorder %s15, 1
    %p59 = por %p57, %p58
    %p61 = scmp.ne.s32.totalorder %s46, %s60
    %p62 = scmp.eq.s32.totalorder %s15, 0
    %p63 = por %p61, %p62
    %s65 = sadd.s32 %s64, 1
    %p68 = scmp.eq.s32.totalorder %s9, 1
    %p69 = scmp.ne.s32.totalorder %s64, %s66
    %p70 = scmp.eq.s32.totalorder %s9, 0
    %p71 = por %p69, %p70
    %p72 = scmp.ne.s32.totalorder %s64, %s66
    %p73 = scmp.eq.s32.totalorder %s14, 1
    %p74 = por %p72, %p73
    %p75 = scmp.ne.s32.totalorder %s66, %s67
    %p76 = scmp.eq.s32.totalorder %s14, 0
    %p77 = por %p75, %p76
    %p78 = scmp.ne.s32.totalorder %s66, %s67
    %p79 = scmp.eq.s32.totalorder %s15, 1
    %p80 = por %p78, %p79
    %p82 = scmp.ne.s32.totalorder %s67, %s81
    %p83 = scmp.eq.s32.totalorder %s15, 0
    %p84 = por %p82, %p83
    %s85 = ssub.s32 %s9, %s16
    %p86 = scmp.eq.s32.totalorder %s85, 0
    %s88 = sadd.s32 %s87, 1
    %s89 = scalar_select %p86, %s87, %s88
    %p92 = pneg %p86
    %p93 = scmp.eq.s32.totalorder %s9, 1
    %p94 = por %p92, %p93
    %p95 = scmp.ne.s32.totalorder %s87, %s90
    %p96 = scmp.eq.s32.totalorder %s9, 0
    %p97 = por %p95, %p96
    %p98 = scmp.ne.s32.totalorder %s87, %s90
    %p99 = scmp.eq.s32.totalorder %s14, 1
    %p100 = por %p98, %p99
    %p101 = scmp.ne.s32.totalorder %s90, %s91
    %p102 = scmp.eq.s32.totalorder %s14, 0
    %p103 = por %p101, %p102
    %p104 = scmp.ne.s32.totalorder %s90, %s91
    %p105 = scmp.eq.s32.totalorder %s15, 1
    %p106 = por %p104, %p105
    %p108 = scmp.ne.s32.totalorder %s91, %s107
    %p109 = scmp.eq.s32.totalorder %s15, 0
    %p110 = por %p108, %p109
    %p111 = scmp.le.s32.totalorder 1, %s9
    %p112 = scmp.lt.s32.totalorder %s9, 3
    %p113 = pnand %p111, %p112
    %p114 = pneg %p113
    // Predicated region
    $region9: #{decoder_forward_pallas.4} parent=5 // pred_check
      _
    $region10: #{decoder_forward_pallas.4} parent=5 // pred_check_branch
      %116 = sbr.rel (%p113) target = $region12
    $region11: #{decoder_forward_pallas.4} parent=5 // pred_region
      %s117 = ssub.s32 %s9, 1
      // Predicated region
      $region13: #{decoder_forward_pallas.4} parent=11 // pred_check
        %p118 = pneg %p56
      $region14: #{decoder_forward_pallas.4} parent=11 // pred_check_branch
        %120 = sbr.rel (%p118) target = $region16
      $region15: #{decoder_forward_pallas.4} parent=11 // pred_region
        _
      $region16: #{decoder_forward_pallas.4} parent=11 // pred_fallthru
        _
      // Predicated region
      $region17: #{decoder_forward_pallas.4} parent=11 // pred_check
        %p121 = pneg %p77
      $region18: #{decoder_forward_pallas.4} parent=11 // pred_check_branch
        %123 = sbr.rel (%p121) target = $region20
      $region19: #{decoder_forward_pallas.4} parent=11 // pred_region
        _
      $region20: #{decoder_forward_pallas.4} parent=11 // pred_fallthru
        _
    $region12: #{decoder_forward_pallas.4} parent=5 // pred_fallthru
      _
    %p124 = scmp.lt.s32.totalorder %s9, 2
    // Predicated region
    $region21: #{decoder_forward_pallas.4} parent=5 // pred_check
      %p125 = pneg %p124
    $region22: #{decoder_forward_pallas.4} parent=5 // pred_check_branch
      %127 = sbr.rel (%p125) target = $region24
    $region23: #{decoder_forward_pallas.4} parent=5 // pred_region
      // Predicated region
      $region25: #{decoder_forward_pallas.4} parent=23 // pred_check
        %p128 = pneg %p29
      $region26: #{decoder_forward_pallas.4} parent=23 // pred_check_branch
        %130 = sbr.rel (%p128) target = $region28
      $region27: #{decoder_forward_pallas.4} parent=23 // pred_region
        %p131 = scmp.lt.s32.totalorder %s9, 1
        %s132 = scalar_select %p131, %s9, 1
        %s133 = smul.addr %s132, 8
        %s134 = scalar_lea.vmem %s0, %s133
      $region28: #{decoder_forward_pallas.4} parent=23 // pred_fallthru
        _
    $region24: #{decoder_forward_pallas.4} parent=5 // pred_fallthru
      _
    %p135 = scmp.le.s32.totalorder 1, %s9
    %p136 = scmp.lt.s32.totalorder %s9, 3
    %p137 = pnand %p135, %p136
    %p138 = pneg %p137
    // Predicated region
    $region29: #{decoder_forward_pallas.4} parent=5 // pred_check
      _
    $region30: #{decoder_forward_pallas.4} parent=5 // pred_check_branch
      %140 = sbr.rel (%p137) target = $region32
    $region31: #{decoder_forward_pallas.4} parent=5 // pred_region
      %s141 = ssub.s32 %s9, 1
      %p142 = scmp.lt.s32.totalorder %s14, 1
      %s143 = scalar_select %p142, %s14, 1
      %s144 = smul.addr %s143, 8
      %s145 = scalar_lea.vmem %s0, %s144
      %p146 = pneg %p35
      %p147 = pneg %p32
      %p148 = pneg %p56
      %p149 = pneg %p53
      %p150 = pneg %p77
      %p151 = pneg %p74
      %p152 = pneg %p103
      %p153 = pneg %p100
      %p154 = scmp.lt.s32.totalorder %s14, 1
      %s155 = scalar_select %p154, %s14, 1
      %s156 = smul.addr %s155, 8
      %s157 = scalar_lea.vmem %s3, %s156
      %p158 = scmp.lt.s32.totalorder %s14, 1
      %s159 = scalar_select %p158, %s14, 1
      %s160 = smul.addr %s159, 8
      %s161 = scalar_lea.vmem %s0, %s160
      %p162 = scmp.lt.s32.totalorder %s14, 1
      %s163 = scalar_select %p162, %s14, 1
      %s164 = smul.addr %s163, 8
      %s165 = scalar_lea.vmem %s3, %s164
      %v167 = vld [vmem:[%s161] sm:$0xff]
      %vm168 = vcmask 261120
      %169 = vst.msk [vmem:[#allocation2] sm:$0xff] %vm168, 0.0
      %vm170 = vcmask 254976
      %171 = vst.msk [vmem:[#allocation2 + $0x8] sm:$0x3] %vm170, 0.0
      %172 = vst.msk [vmem:[#allocation2 + $0x1] sm:$0xff] %vm168, %v167
      %v173 = vld [vmem:[#allocation2] sm:$0xff]
      %v174 = vld [vmem:[#allocation2 + $0x1] sm:$0xff]
      %v175 = vld [vmem:[#allocation2 + $0x2] sm:$0xff]
      %177 = vrot.lane.b32.xlu0 %v174, 32
      %v178 = vpop.permute.xlu0 %177
      %181 = vrot.lane.b32.xlu0 %v175, 64
      %v182 = vpop.permute.xlu0 %181
      %v184 = vsel %vm168, %v173, %v178
      %vm185 = vcmask 523264
      %v186 = vsel %vm185, %v184, %v182
      %v187 = vpack.c.bf16 %v186, %v186
      %v188 = vld [vmem:[%s1] sm:$0xf]
      %v189 = vld [vmem:[%s1 + $0x4] sm:$0xf]
      %v190 = vld [vmem:[%s1 + $0x8] sm:$0xf]
      %v191 = vld [vmem:[%s1 + $0xc] sm:$0xf]
      %v192 = vld [vmem:[%s1 + $0x10] sm:$0xf]
      %v193 = vld [vmem:[%s1 + $0x14] sm:$0xf]
      %v194 = vld [vmem:[%s1 + $0x18] sm:$0xf]
      %v195 = vld [vmem:[%s1 + $0x1c] sm:$0xf]
      %v196 = vld [vmem:[%s1 + $0x20] sm:$0xf]
      %v197 = vld [vmem:[%s1 + $0x24] sm:$0xf]
      %v198 = vld [vmem:[%s1 + $0x28] sm:$0xf]
      %v199 = vld [vmem:[%s1 + $0x2c] sm:$0xf]
      %v200 = vld [vmem:[%s2] sm:$0x1]
      %v202 = vlaneseq
      %v203 = vshrl.u32 %v202, 7
      %v204 = vsub.s32 0, %v203
      %v205 = vrot.slane %v200, %v204
      %v219 = vunpack.c.l.b16 %v188
      %v220 = vunpack.c.l.b16 %v189
      %v221 = vunpack.c.l.b16 %v190
      %v222 = vunpack.c.l.b16 %v191
      %v223 = vunpack.c.l.b16 %v192
      %v224 = vunpack.c.l.b16 %v193
      %v225 = vunpack.c.l.b16 %v194
      %v226 = vunpack.c.l.b16 %v195
      %v227 = vunpack.c.l.b16 %v196
      %v228 = vunpack.c.l.b16 %v197
      %v229 = vunpack.c.l.b16 %v198
      %v230 = vunpack.c.l.b16 %v199
      %v231 = vpack.c.b16 %v220, %v219
      %v232 = vpack.c.b16 %v222, %v221
      %v233 = vpack.c.b16 %v224, %v223
      %v234 = vpack.c.b16 %v226, %v225
      %v235 = vpack.c.b16 %v228, %v227
      %v236 = vpack.c.b16 %v230, %v229
      %vm243 = vcmask 785408
      %v245 = vsel %vm243, %v187, 0
      %247 = vmatprep.subr.bf16.mxu0 0
      %248 = vmatpush1.bf16.msra.mxu0 %v231
      %249 = vmatprep.subr.bf16.mxu0 0
      %250 = vmatpush1.bf16.msra.mxu0 %v232
      %251 = vmatprep.subr.bf16.mxu0 0
      %252 = vmatpush1.bf16.msra.mxu0 %v233
      %253 = vmatprep.subr.bf16.mxu0 0
      %254 = vmatpush1.bf16.msra.mxu0 %v234
      %255 = vmatprep.subr.bf16.mxu0 0
      %256 = vmatpush1.bf16.msra.mxu0 %v235
      %257 = vmatprep.subr.bf16.mxu0 0
      %258 = vmatpush1.bf16.msra.mxu0 %v236
      %259 = vmatprep.subr.bf16.mxu0 0
      %260 = vmatpush1.bf16.msra.mxu0 0
      %261 = vmatprep.subr.bf16.mxu0 0
      %262 = vmatpush1.bf16.msra.mxu0 0
      %263 = vmatprep.subr.bf16.mxu0 0
      %264 = vmatpush1.bf16.msra.mxu0 0
      %265 = vmatprep.subr.bf16.mxu0 0
      %266 = vmatpush1.bf16.msra.mxu0 0
      %267 = vmatprep.subr.bf16.mxu0 0
      %268 = vmatpush1.bf16.msra.mxu0 0
      %269 = vmatprep.subr.bf16.mxu0 0
      %270 = vmatpush1.bf16.msra.mxu0 0
      %271 = vmatprep.subr.bf16.mxu0 0
      %272 = vmatpush1.bf16.msra.mxu0 0
      %273 = vmatprep.subr.bf16.mxu0 0
      %274 = vmatpush1.bf16.msra.mxu0 0
      %275 = vmatprep.subr.bf16.mxu0 0
      %276 = vmatpush1.bf16.msra.mxu0 0
      %277 = vmatprep.subr.bf16.mxu0 0
      %278 = vmatpush1.bf16.msra.mxu0 0
      %279 = vmatprep.mubr.bf16.mxu0 0
      %280 = vmatmul.mubr.bf16.gmra.mrb[0].mxu0 %v245
      %v281 = vpop.f32.mrb[0].mxu0
      %v282 = vadd.f32 %v205, %v281
      %v283 = vpop.f32.mrb[0].mxu0
      %v284 = vpop.f32.mrb[0].mxu0
      %v285 = vpop.f32.mrb[0].mxu0
      %286 = vdwg.mxu0
      %v287 = vmax.f32 %v282, 0.0
      %288 = vst.msk [vmem:[%s165] sm:$0xff] %vm168, %v287
      %p289 = scmp.lt.s32.totalorder %s14, 1
      %s290 = scalar_select %p289, %s14, 1
      %s291 = smul.addr %s290, 8
      %s292 = scalar_lea.vmem %s3, %s291
      // Predicated region
      $region33: #{decoder_forward_pallas.4} parent=31 // pred_check
        %p293 = pneg %p100
      $region34: #{decoder_forward_pallas.4} parent=31 // pred_check_branch
        %295 = sbr.rel (%p293) target = $region36
      $region35: #{decoder_forward_pallas.4} parent=31 // pred_region
        _
      $region36: #{decoder_forward_pallas.4} parent=31 // pred_fallthru
        _
    $region32: #{decoder_forward_pallas.4} parent=5 // pred_fallthru
      _
    %p296 = scmp.le.s32.totalorder 2, %s9
    // Predicated region
    $region37: #{decoder_forward_pallas.4} parent=5 // pred_check
      %p297 = pneg %p296
    $region38: #{decoder_forward_pallas.4} parent=5 // pred_check_branch
      %299 = sbr.rel (%p297) target = $region40
    $region39: #{decoder_forward_pallas.4} parent=5 // pred_region
      %s300 = ssub.s32 %s9, 2
      // Predicated region
      $region41: #{decoder_forward_pallas.4} parent=39 // pred_check
        %p301 = pneg %p106
      $region42: #{decoder_forward_pallas.4} parent=39 // pred_check_branch
        %303 = sbr.rel (%p301) target = $region44
      $region43: #{decoder_forward_pallas.4} parent=39 // pred_region
        %p304 = scmp.lt.s32.totalorder %s15, 1
        %s305 = scalar_select %p304, %s15, 1
        %s306 = smul.addr %s305, 8
        %s307 = scalar_lea.vmem %s3, %s306
      $region44: #{decoder_forward_pallas.4} parent=39 // pred_fallthru
        _
    $region40: #{decoder_forward_pallas.4} parent=5 // pred_fallthru
      _
  $region6: #{decoder_forward_pallas.4} parent=0 // loop_footer
    %s13 = sadd.s32 1, %s9
  $region7: #{decoder_forward_pallas.4} parent=0 // loop_footer_branch
    %8 = sbr.rel target = $region3
  $region8: #{decoder_forward_pallas.4} parent=0 // loop_exit
    _

// kernel: decoder_forward_pallas.5
$region0: #{decoder_forward_pallas.5}
  #allocation0 [shape = 'u32[]', space=smem, size = 0x4, offset = 0x4, fixed_abs, tag = 'smem constant byte address 0x4 - core index']
  #allocation1 [shape = 'u32[144,128]{1,0:T(1,128)}', space=vmem, size = 0x12000, scoped, tag = 'internal scratch']
  #allocation2 [shape = 'f32[14,32]{1,0:T(8,128)}', space=vmem, size = 0x2000, scoped, tag = 'scratch operand']
  %s0 = inlined_call_operand.vmem [shape: f32[2,8,32], index: 0, kind: input, shape index: {}]
  %s1 = inlined_call_operand.vmem [shape: bf16[2,96,32], index: 1, kind: input, shape index: {}]
  %s2 = inlined_call_operand.vmem [shape: f32[2,1,32], index: 2, kind: input, shape index: {}]
  %s3 = inlined_call_operand.vmem [shape: bf16[2,32,32], index: 3, kind: input, shape index: {}]
  %s4 = inlined_call_operand.vmem [shape: f32[2,1,32], index: 4, kind: input, shape index: {}]
  %s5 = inlined_call_operand.vmem [shape: bf16[64,32], index: 5, kind: input, shape index: {}]
  %s6 = inlined_call_operand.vmem [shape: bf16[64,32], index: 6, kind: input, shape index: {}]
  %s7 = inlined_call_operand.vmem [shape: f32[1,32], index: 7, kind: input, shape index: {}]
  %s8 = inlined_call_operand.vmem [shape: f32[2,8,32], index: 8, kind: output, shape index: {0}]
  %s9 = inlined_call_operand.vmem [shape: f32[2,8,32], index: 9, kind: output, shape index: {1}]
  %10 = xla_tuple %s8, %s9
  %s11 = sld [smem:[#allocation0]]
  $region73: #{decoder_forward_pallas.5} parent=0
    _
  %s13 = ssub.s32 1, %s11
  %s14 = scalar_select 0, %s13, %s11
  loop: start=0, step=1, limit=4
  $region2: #{decoder_forward_pallas.5} parent=0 // loop_pre_header
    _
  $region3: #{decoder_forward_pallas.5} parent=0 // loop_header
    %s16 = sphi 0, %s20
    %p17 = scmp.ge.s32.totalorder %s16, 4
    %s26 = sphi 0, %s28
    %s29 = sphi 0, %s26
    %s30 = sphi 0, %s29
    %s46 = sphi 0, %s30
    %s50 = sphi 0, %s50
    %s52 = sphi 0, %s50
    %s53 = sphi 0, %s52
    %s67 = sphi 0, %s53
    %s71 = sphi 0, %s71
    %s73 = sphi 0, %s71
    %s74 = sphi 0, %s73
    %s88 = sphi 0, %s74
    %s92 = sphi 0, %s92
    %s94 = sphi 0, %s92
    %s95 = sphi 0, %s94
    %s109 = sphi 0, %s95
    %s113 = sphi 0, %s113
    %s115 = sphi 0, %s113
    %s116 = sphi 0, %s115
    %s130 = sphi 0, %s116
    %s134 = sphi 0, %s134
    %s136 = sphi 0, %s134
    %s137 = sphi 0, %s136
    %s151 = sphi 0, %s137
    %s155 = sphi 0, %s155
    %s157 = sphi 0, %s155
    %s158 = sphi 0, %s157
    %s172 = sphi 0, %s158
    %s176 = sphi 0, %s176
    %s178 = sphi 0, %s176
    %s179 = sphi 0, %s178
    %s193 = sphi 0, %s179
    %s199 = sphi 0, %s201
    %s202 = sphi 0, %s199
    %s203 = sphi 0, %s202
    %s219 = sphi 0, %s203
    %s225 = sphi 0, %s227
    %s228 = sphi 0, %s225
    %s229 = sphi 0, %s228
    %s245 = sphi 0, %s229
  $region4: #{decoder_forward_pallas.5} parent=0 // loop_header_branch
    %19 = sbr.rel (%p17) target = $region8
  $region5: #{decoder_forward_pallas.5} parent=0 // loop_body
    %s21 = ssub.s32 %s16, 1
    %s22 = ssub.s32 %s16, 2
    %s23 = sadd.s32 %s16, 1
    %s24 = ssub.s32 %s16, %s23
    %p25 = scmp.eq.s32.totalorder %s24, 0
    %s27 = sadd.s32 %s26, 1
    %s28 = scalar_select %p25, %s26, %s27
    %p31 = pneg %p25
    %p32 = scmp.eq.s32.totalorder %s16, 1
    %p33 = por %p31, %p32
    %p34 = scmp.ne.s32.totalorder %s26, %s29
    %p35 = scmp.eq.s32.totalorder %s16, 0
    %p36 = por %p34, %p35
    %p37 = scmp.ne.s32.totalorder %s26, %s29
    %p38 = scmp.eq.s32.totalorder %s21, 1
    %p39 = por %p37, %p38
    %p40 = scmp.ne.s32.totalorder %s29, %s30
    %p41 = scmp.eq.s32.totalorder %s21, 0
    %p42 = por %p40, %p41
    %p43 = scmp.ne.s32.totalorder %s29, %s30
    %p44 = scmp.eq.s32.totalorder %s22, 1
    %p45 = por %p43, %p44
    %p47 = scmp.ne.s32.totalorder %s30, %s46
    %p48 = scmp.eq.s32.totalorder %s22, 0
    %p49 = por %p47, %p48
    %s51 = sadd.s32 %s50, 1
    %p54 = scmp.eq.s32.totalorder %s16, 1
    %p55 = scmp.ne.s32.totalorder %s50, %s52
    %p56 = scmp.eq.s32.totalorder %s16, 0
    %p57 = por %p55, %p56
    %p58 = scmp.ne.s32.totalorder %s50, %s52
    %p59 = scmp.eq.s32.totalorder %s21, 1
    %p60 = por %p58, %p59
    %p61 = scmp.ne.s32.totalorder %s52, %s53
    %p62 = scmp.eq.s32.totalorder %s21, 0
    %p63 = por %p61, %p62
    %p64 = scmp.ne.s32.totalorder %s52, %s53
    %p65 = scmp.eq.s32.totalorder %s22, 1
    %p66 = por %p64, %p65
    %p68 = scmp.ne.s32.totalorder %s53, %s67
    %p69 = scmp.eq.s32.totalorder %s22, 0
    %p70 = por %p68, %p69
    %s72 = sadd.s32 %s71, 1
    %p75 = scmp.eq.s32.totalorder %s16, 1
    %p76 = scmp.ne.s32.totalorder %s71, %s73
    %p77 = scmp.eq.s32.totalorder %s16, 0
    %p78 = por %p76, %p77
    %p79 = scmp.ne.s32.totalorder %s71, %s73
    %p80 = scmp.eq.s32.totalorder %s21, 1
    %p81 = por %p79, %p80
    %p82 = scmp.ne.s32.totalorder %s73, %s74
    %p83 = scmp.eq.s32.totalorder %s21, 0
    %p84 = por %p82, %p83
    %p85 = scmp.ne.s32.totalorder %s73, %s74
    %p86 = scmp.eq.s32.totalorder %s22, 1
    %p87 = por %p85, %p86
    %p89 = scmp.ne.s32.totalorder %s74, %s88
    %p90 = scmp.eq.s32.totalorder %s22, 0
    %p91 = por %p89, %p90
    %s93 = sadd.s32 %s92, 1
    %p96 = scmp.eq.s32.totalorder %s16, 1
    %p97 = scmp.ne.s32.totalorder %s92, %s94
    %p98 = scmp.eq.s32.totalorder %s16, 0
    %p99 = por %p97, %p98
    %p100 = scmp.ne.s32.totalorder %s92, %s94
    %p101 = scmp.eq.s32.totalorder %s21, 1
    %p102 = por %p100, %p101
    %p103 = scmp.ne.s32.totalorder %s94, %s95
    %p104 = scmp.eq.s32.totalorder %s21, 0
    %p105 = por %p103, %p104
    %p106 = scmp.ne.s32.totalorder %s94, %s95
    %p107 = scmp.eq.s32.totalorder %s22, 1
    %p108 = por %p106, %p107
    %p110 = scmp.ne.s32.totalorder %s95, %s109
    %p111 = scmp.eq.s32.totalorder %s22, 0
    %p112 = por %p110, %p111
    %s114 = sadd.s32 %s113, 1
    %p117 = scmp.eq.s32.totalorder %s16, 1
    %p118 = scmp.ne.s32.totalorder %s113, %s115
    %p119 = scmp.eq.s32.totalorder %s16, 0
    %p120 = por %p118, %p119
    %p121 = scmp.ne.s32.totalorder %s113, %s115
    %p122 = scmp.eq.s32.totalorder %s21, 1
    %p123 = por %p121, %p122
    %p124 = scmp.ne.s32.totalorder %s115, %s116
    %p125 = scmp.eq.s32.totalorder %s21, 0
    %p126 = por %p124, %p125
    %p127 = scmp.ne.s32.totalorder %s115, %s116
    %p128 = scmp.eq.s32.totalorder %s22, 1
    %p129 = por %p127, %p128
    %p131 = scmp.ne.s32.totalorder %s116, %s130
    %p132 = scmp.eq.s32.totalorder %s22, 0
    %p133 = por %p131, %p132
    %s135 = sadd.s32 %s134, 1
    %p138 = scmp.eq.s32.totalorder %s16, 1
    %p139 = scmp.ne.s32.totalorder %s134, %s136
    %p140 = scmp.eq.s32.totalorder %s16, 0
    %p141 = por %p139, %p140
    %p142 = scmp.ne.s32.totalorder %s134, %s136
    %p143 = scmp.eq.s32.totalorder %s21, 1
    %p144 = por %p142, %p143
    %p145 = scmp.ne.s32.totalorder %s136, %s137
    %p146 = scmp.eq.s32.totalorder %s21, 0
    %p147 = por %p145, %p146
    %p148 = scmp.ne.s32.totalorder %s136, %s137
    %p149 = scmp.eq.s32.totalorder %s22, 1
    %p150 = por %p148, %p149
    %p152 = scmp.ne.s32.totalorder %s137, %s151
    %p153 = scmp.eq.s32.totalorder %s22, 0
    %p154 = por %p152, %p153
    %s156 = sadd.s32 %s155, 1
    %p159 = scmp.eq.s32.totalorder %s16, 1
    %p160 = scmp.ne.s32.totalorder %s155, %s157
    %p161 = scmp.eq.s32.totalorder %s16, 0
    %p162 = por %p160, %p161
    %p163 = scmp.ne.s32.totalorder %s155, %s157
    %p164 = scmp.eq.s32.totalorder %s21, 1
    %p165 = por %p163, %p164
    %p166 = scmp.ne.s32.totalorder %s157, %s158
    %p167 = scmp.eq.s32.totalorder %s21, 0
    %p168 = por %p166, %p167
    %p169 = scmp.ne.s32.totalorder %s157, %s158
    %p170 = scmp.eq.s32.totalorder %s22, 1
    %p171 = por %p169, %p170
    %p173 = scmp.ne.s32.totalorder %s158, %s172
    %p174 = scmp.eq.s32.totalorder %s22, 0
    %p175 = por %p173, %p174
    %s177 = sadd.s32 %s176, 1
    %p180 = scmp.eq.s32.totalorder %s16, 1
    %p181 = scmp.ne.s32.totalorder %s176, %s178
    %p182 = scmp.eq.s32.totalorder %s16, 0
    %p183 = por %p181, %p182
    %p184 = scmp.ne.s32.totalorder %s176, %s178
    %p185 = scmp.eq.s32.totalorder %s21, 1
    %p186 = por %p184, %p185
    %p187 = scmp.ne.s32.totalorder %s178, %s179
    %p188 = scmp.eq.s32.totalorder %s21, 0
    %p189 = por %p187, %p188
    %p190 = scmp.ne.s32.totalorder %s178, %s179
    %p191 = scmp.eq.s32.totalorder %s22, 1
    %p192 = por %p190, %p191
    %p194 = scmp.ne.s32.totalorder %s179, %s193
    %p195 = scmp.eq.s32.totalorder %s22, 0
    %p196 = por %p194, %p195
    %s197 = ssub.s32 %s16, %s23
    %p198 = scmp.eq.s32.totalorder %s197, 0
    %s200 = sadd.s32 %s199, 1
    %s201 = scalar_select %p198, %s199, %s200
    %p204 = pneg %p198
    %p205 = scmp.eq.s32.totalorder %s16, 1
    %p206 = por %p204, %p205
    %p207 = scmp.ne.s32.totalorder %s199, %s202
    %p208 = scmp.eq.s32.totalorder %s16, 0
    %p209 = por %p207, %p208
    %p210 = scmp.ne.s32.totalorder %s199, %s202
    %p211 = scmp.eq.s32.totalorder %s21, 1
    %p212 = por %p210, %p211
    %p213 = scmp.ne.s32.totalorder %s202, %s203
    %p214 = scmp.eq.s32.totalorder %s21, 0
    %p215 = por %p213, %p214
    %p216 = scmp.ne.s32.totalorder %s202, %s203
    %p217 = scmp.eq.s32.totalorder %s22, 1
    %p218 = por %p216, %p217
    %p220 = scmp.ne.s32.totalorder %s203, %s219
    %p221 = scmp.eq.s32.totalorder %s22, 0
    %p222 = por %p220, %p221
    %s223 = ssub.s32 %s16, %s23
    %p224 = scmp.eq.s32.totalorder %s223, 0
    %s226 = sadd.s32 %s225, 1
    %s227 = scalar_select %p224, %s225, %s226
    %p230 = pneg %p224
    %p231 = scmp.eq.s32.totalorder %s16, 1
    %p232 = por %p230, %p231
    %p233 = scmp.ne.s32.totalorder %s225, %s228
    %p234 = scmp.eq.s32.totalorder %s16, 0
    %p235 = por %p233, %p234
    %p236 = scmp.ne.s32.totalorder %s225, %s228
    %p237 = scmp.eq.s32.totalorder %s21, 1
    %p238 = por %p236, %p237
    %p239 = scmp.ne.s32.totalorder %s228, %s229
    %p240 = scmp.eq.s32.totalorder %s21, 0
    %p241 = por %p239, %p240
    %p242 = scmp.ne.s32.totalorder %s228, %s229
    %p243 = scmp.eq.s32.totalorder %s22, 1
    %p244 = por %p242, %p243
    %p246 = scmp.ne.s32.totalorder %s229, %s245
    %p247 = scmp.eq.s32.totalorder %s22, 0
    %p248 = por %p246, %p247
    %p249 = scmp.le.s32.totalorder 1, %s16
    %p250 = scmp.lt.s32.totalorder %s16, 3
    %p251 = pnand %p249, %p250
    %p252 = pneg %p251
    // Predicated region
    $region9: #{decoder_forward_pallas.5} parent=5 // pred_check
      _
    $region10: #{decoder_forward_pallas.5} parent=5 // pred_check_branch
      %254 = sbr.rel (%p251) target = $region12
    $region11: #{decoder_forward_pallas.5} parent=5 // pred_region
      %s255 = ssub.s32 %s16, 1
      // Predicated region
      $region13: #{decoder_forward_pallas.5} parent=11 // pred_check
        %p256 = pneg %p63
      $region14: #{decoder_forward_pallas.5} parent=11 // pred_check_branch
        %258 = sbr.rel (%p256) target = $region16
      $region15: #{decoder_forward_pallas.5} parent=11 // pred_region
        _
      $region16: #{decoder_forward_pallas.5} parent=11 // pred_fallthru
        _
      // Predicated region
      $region17: #{decoder_forward_pallas.5} parent=11 // pred_check
        %p259 = pneg %p84
      $region18: #{decoder_forward_pallas.5} parent=11 // pred_check_branch
        %261 = sbr.rel (%p259) target = $region20
      $region19: #{decoder_forward_pallas.5} parent=11 // pred_region
        _
      $region20: #{decoder_forward_pallas.5} parent=11 // pred_fallthru
        _
      // Predicated region
      $region21: #{decoder_forward_pallas.5} parent=11 // pred_check
        %p262 = pneg %p105
      $region22: #{decoder_forward_pallas.5} parent=11 // pred_check_branch
        %264 = sbr.rel (%p262) target = $region24
      $region23: #{decoder_forward_pallas.5} parent=11 // pred_region
        _
      $region24: #{decoder_forward_pallas.5} parent=11 // pred_fallthru
        _
      // Predicated region
      $region25: #{decoder_forward_pallas.5} parent=11 // pred_check
        %p265 = pneg %p126
      $region26: #{decoder_forward_pallas.5} parent=11 // pred_check_branch
        %267 = sbr.rel (%p265) target = $region28
      $region27: #{decoder_forward_pallas.5} parent=11 // pred_region
        _
      $region28: #{decoder_forward_pallas.5} parent=11 // pred_fallthru
        _
      // Predicated region
      $region29: #{decoder_forward_pallas.5} parent=11 // pred_check
        %p268 = pneg %p147
      $region30: #{decoder_forward_pallas.5} parent=11 // pred_check_branch
        %270 = sbr.rel (%p268) target = $region32
      $region31: #{decoder_forward_pallas.5} parent=11 // pred_region
        _
      $region32: #{decoder_forward_pallas.5} parent=11 // pred_fallthru
        _
      // Predicated region
      $region33: #{decoder_forward_pallas.5} parent=11 // pred_check
        %p271 = pneg %p168
      $region34: #{decoder_forward_pallas.5} parent=11 // pred_check_branch
        %273 = sbr.rel (%p271) target = $region36
      $region35: #{decoder_forward_pallas.5} parent=11 // pred_region
        _
      $region36: #{decoder_forward_pallas.5} parent=11 // pred_fallthru
        _
      // Predicated region
      $region37: #{decoder_forward_pallas.5} parent=11 // pred_check
        %p274 = pneg %p189
      $region38: #{decoder_forward_pallas.5} parent=11 // pred_check_branch
        %276 = sbr.rel (%p274) target = $region40
      $region39: #{decoder_forward_pallas.5} parent=11 // pred_region
        _
      $region40: #{decoder_forward_pallas.5} parent=11 // pred_fallthru
        _
    $region12: #{decoder_forward_pallas.5} parent=5 // pred_fallthru
      _
    %p277 = scmp.lt.s32.totalorder %s16, 2
    // Predicated region
    $region41: #{decoder_forward_pallas.5} parent=5 // pred_check
      %p278 = pneg %p277
    $region42: #{decoder_forward_pallas.5} parent=5 // pred_check_branch
      %280 = sbr.rel (%p278) target = $region44
    $region43: #{decoder_forward_pallas.5} parent=5 // pred_region
      // Predicated region
      $region45: #{decoder_forward_pallas.5} parent=43 // pred_check
        %p281 = pneg %p36
      $region46: #{decoder_forward_pallas.5} parent=43 // pred_check_branch
        %283 = sbr.rel (%p281) target = $region48
      $region47: #{decoder_forward_pallas.5} parent=43 // pred_region
        %p284 = scmp.lt.s32.totalorder %s16, 1
        %s285 = scalar_select %p284, %s16, 1
        %s286 = smul.addr %s285, 8
        %s287 = scalar_lea.vmem %s0, %s286
      $region48: #{decoder_forward_pallas.5} parent=43 // pred_fallthru
        _
    $region44: #{decoder_forward_pallas.5} parent=5 // pred_fallthru
      _
    %p288 = scmp.le.s32.totalorder 1, %s16
    %p289 = scmp.lt.s32.totalorder %s16, 3
    %p290 = pnand %p288, %p289
    %p291 = pneg %p290
    // Predicated region
    $region49: #{decoder_forward_pallas.5} parent=5 // pred_check
      _
    $region50: #{decoder_forward_pallas.5} parent=5 // pred_check_branch
      %293 = sbr.rel (%p290) target = $region52
    $region51: #{decoder_forward_pallas.5} parent=5 // pred_region
      %s294 = ssub.s32 %s16, 1
      %p295 = scmp.lt.s32.totalorder %s21, 1
      %s296 = scalar_select %p295, %s21, 1
      %s297 = smul.addr %s296, 8
      %s298 = scalar_lea.vmem %s0, %s297
      %p299 = pneg %p42
      %p300 = pneg %p39
      %p301 = pneg %p63
      %p302 = pneg %p60
      %p303 = pneg %p84
      %p304 = pneg %p81
      %p305 = pneg %p105
      %p306 = pneg %p102
      %p307 = pneg %p126
      %p308 = pneg %p123
      %p309 = pneg %p147
      %p310 = pneg %p144
      %p311 = pneg %p168
      %p312 = pneg %p165
      %p313 = pneg %p189
      %p314 = pneg %p186
      %p315 = pneg %p215
      %p316 = pneg %p212
      %p317 = scmp.lt.s32.totalorder %s21, 1
      %s318 = scalar_select %p317, %s21, 1
      %s319 = smul.addr %s318, 8
      %s320 = scalar_lea.vmem %s8, %s319
      %p321 = pneg %p241
      %p322 = pneg %p238
      %p323 = scmp.lt.s32.totalorder %s21, 1
      %s324 = scalar_select %p323, %s21, 1
      %s325 = smul.addr %s324, 8
      %s326 = scalar_lea.vmem %s9, %s325
      %p327 = scmp.lt.s32.totalorder %s21, 1
      %s328 = scalar_select %p327, %s21, 1
      %s329 = smul.addr %s328, 8
      %s330 = scalar_lea.vmem %s0, %s329
      %p331 = scmp.lt.s32.totalorder %s21, 1
      %s332 = scalar_select %p331, %s21, 1
      %s333 = smul.addr %s332, 8
      %s334 = scalar_lea.vmem %s8, %s333
      %p335 = scmp.lt.s32.totalorder %s21, 1
      %s336 = scalar_select %p335, %s21, 1
      %s337 = smul.addr %s336, 8
      %s338 = scalar_lea.vmem %s9, %s337
      %vm340 = vcmask 261120
      %341 = vst.msk [vmem:[#allocation2] sm:$0xff] %vm340, 0.0
      %vm342 = vcmask 259072
      %343 = vst.msk [vmem:[#allocation2 + $0x8] sm:$0x3f] %vm342, 0.0
      %v344 = vld [vmem:[%s330] sm:$0xff]
      %v345 = vmax.f32 %v344, 0.0
      %346 = vst.msk [vmem:[#allocation2 + $0x3] sm:$0xff] %vm340, %v345
      %v347 = vld [vmem:[#allocation2] sm:$0xff]
      %v348 = vld [vmem:[#allocation2 + $0x3] sm:$0xff]
      %v349 = vld [vmem:[#allocation2 + $0x6] sm:$0xff]
      %351 = vrot.lane.b32.xlu0 %v348, 32
      %v352 = vpop.permute.xlu0 %351
      %355 = vrot.lane.b32.xlu0 %v349, 64
      %v356 = vpop.permute.xlu0 %355
      %v358 = vsel %vm340, %v347, %v352
      %vm359 = vcmask 523264
      %v360 = vsel %vm359, %v358, %v356
      %v361 = vpack.c.bf16 %v360, %v360
      %v362 = vld [vmem:[%s1] sm:$0xf]
      %v363 = vld [vmem:[%s1 + $0x4] sm:$0xf]
      %v364 = vld [vmem:[%s1 + $0x8] sm:$0xf]
      %v365 = vld [vmem:[%s1 + $0xc] sm:$0xf]
      %v366 = vld [vmem:[%s1 + $0x10] sm:$0xf]
      %v367 = vld [vmem:[%s1 + $0x14] sm:$0xf]
      %v368 = vld [vmem:[%s1 + $0x18] sm:$0xf]
      %v369 = vld [vmem:[%s1 + $0x1c] sm:$0xf]
      %v370 = vld [vmem:[%s1 + $0x20] sm:$0xf]
      %v371 = vld [vmem:[%s1 + $0x24] sm:$0xf]
      %v372 = vld [vmem:[%s1 + $0x28] sm:$0xf]
      %v373 = vld [vmem:[%s1 + $0x2c] sm:$0xf]
      %v374 = vld [vmem:[%s2] sm:$0x1]
      %v376 = vlaneseq
      %v377 = vshrl.u32 %v376, 7
      %v378 = vsub.s32 0, %v377
      %v379 = vrot.slane %v374, %v378
      %v393 = vunpack.c.l.b16 %v362
      %v394 = vunpack.c.l.b16 %v363
      %v395 = vunpack.c.l.b16 %v364
      %v396 = vunpack.c.l.b16 %v365
      %v397 = vunpack.c.l.b16 %v366
      %v398 = vunpack.c.l.b16 %v367
      %v399 = vunpack.c.l.b16 %v368
      %v400 = vunpack.c.l.b16 %v369
      %v401 = vunpack.c.l.b16 %v370
      %v402 = vunpack.c.l.b16 %v371
      %v403 = vunpack.c.l.b16 %v372
      %v404 = vunpack.c.l.b16 %v373
      %v405 = vpack.c.b16 %v394, %v393
      %v406 = vpack.c.b16 %v396, %v395
      %v407 = vpack.c.b16 %v398, %v397
      %v408 = vpack.c.b16 %v400, %v399
      %v409 = vpack.c.b16 %v402, %v401
      %v410 = vpack.c.b16 %v404, %v403
      %vm417 = vcmask 785408
      %v419 = vsel %vm417, %v361, 0
      %421 = vmatprep.subr.bf16.mxu0 0
      %422 = vmatpush1.bf16.msra.mxu0 %v405
      %423 = vmatprep.subr.bf16.mxu0 0
      %424 = vmatpush1.bf16.msra.mxu0 %v406
      %425 = vmatprep.subr.bf16.mxu0 0
      %426 = vmatpush1.bf16.msra.mxu0 %v407
      %427 = vmatprep.subr.bf16.mxu0 0
      %428 = vmatpush1.bf16.msra.mxu0 %v408
      %429 = vmatprep.subr.bf16.mxu0 0
      %430 = vmatpush1.bf16.msra.mxu0 %v409
      %431 = vmatprep.subr.bf16.mxu0 0
      %432 = vmatpush1.bf16.msra.mxu0 %v410
      %433 = vmatprep.subr.bf16.mxu0 0
      %434 = vmatpush1.bf16.msra.mxu0 0
      %435 = vmatprep.subr.bf16.mxu0 0
      %436 = vmatpush1.bf16.msra.mxu0 0
      %437 = vmatprep.subr.bf16.mxu0 0
      %438 = vmatpush1.bf16.msra.mxu0 0
      %439 = vmatprep.subr.bf16.mxu0 0
      %440 = vmatpush1.bf16.msra.mxu0 0
      %441 = vmatprep.subr.bf16.mxu0 0
      %442 = vmatpush1.bf16.msra.mxu0 0
      %443 = vmatprep.subr.bf16.mxu0 0
      %444 = vmatpush1.bf16.msra.mxu0 0
      %445 = vmatprep.subr.bf16.mxu0 0
      %446 = vmatpush1.bf16.msra.mxu0 0
      %447 = vmatprep.subr.bf16.mxu0 0
      %448 = vmatpush1.bf16.msra.mxu0 0
      %449 = vmatprep.subr.bf16.mxu0 0
      %450 = vmatpush1.bf16.msra.mxu0 0
      %451 = vmatprep.subr.bf16.mxu0 0
      %452 = vmatpush1.bf16.msra.mxu0 0
      %453 = vmatprep.mubr.bf16.mxu0 0
      %454 = vmatmul.mubr.bf16.gmra.mrb[0].mxu0 %v419
      %v455 = vpop.f32.mrb[0].mxu0
      %v456 = vadd.f32 %v379, %v455
      %v457 = vpop.f32.mrb[0].mxu0
      %v458 = vpop.f32.mrb[0].mxu0
      %v459 = vpop.f32.mrb[0].mxu0
      %460 = vdwg.mxu0
      %v461 = vmax.f32 %v456, 0.0
      %v462 = vpack.c.bf16 %v461, %v461
      %v463 = vld [vmem:[%s3] sm:$0xf]
      %v464 = vld [vmem:[%s3 + $0x4] sm:$0xf]
      %v465 = vld [vmem:[%s3 + $0x8] sm:$0xf]
      %v466 = vld [vmem:[%s3 + $0xc] sm:$0xf]
      %v471 = vunpack.c.l.b16 %v463
      %v472 = vunpack.c.l.b16 %v464
      %v473 = vunpack.c.l.b16 %v465
      %v474 = vunpack.c.l.b16 %v466
      %v475 = vpack.c.b16 %v472, %v471
      %v476 = vpack.c.b16 %v474, %v473
      %v480 = vsel %vm340, %v462, 0
      %482 = vmatprep.subr.bf16.mxu0 0
      %483 = vmatpush1.bf16.msra.mxu0 %v475
      %484 = vmatprep.subr.bf16.mxu0 0
      %485 = vmatpush1.bf16.msra.mxu0 %v476
      %486 = vmatprep.subr.bf16.mxu0 0
      %487 = vmatpush1.bf16.msra.mxu0 0
      %488 = vmatprep.subr.bf16.mxu0 0
      %489 = vmatpush1.bf16.msra.mxu0 0
      %490 = vmatprep.subr.bf16.mxu0 0
      %491 = vmatpush1.bf16.msra.mxu0 0
      %492 = vmatprep.subr.bf16.mxu0 0
      %493 = vmatpush1.bf16.msra.mxu0 0
      %494 = vmatprep.subr.bf16.mxu0 0
      %495 = vmatpush1.bf16.msra.mxu0 0
      %496 = vmatprep.subr.bf16.mxu0 0
      %497 = vmatpush1.bf16.msra.mxu0 0
      %498 = vmatprep.subr.bf16.mxu0 0
      %499 = vmatpush1.bf16.msra.mxu0 0
      %500 = vmatprep.subr.bf16.mxu0 0
      %501 = vmatpush1.bf16.msra.mxu0 0
      %502 = vmatprep.subr.bf16.mxu0 0
      %503 = vmatpush1.bf16.msra.mxu0 0
      %504 = vmatprep.subr.bf16.mxu0 0
      %505 = vmatpush1.bf16.msra.mxu0 0
      %506 = vmatprep.subr.bf16.mxu0 0
      %507 = vmatpush1.bf16.msra.mxu0 0
      %508 = vmatprep.subr.bf16.mxu0 0
      %509 = vmatpush1.bf16.msra.mxu0 0
      %510 = vmatprep.subr.bf16.mxu0 0
      %511 = vmatpush1.bf16.msra.mxu0 0
      %512 = vmatprep.subr.bf16.mxu0 0
      %513 = vmatpush1.bf16.msra.mxu0 0
      %514 = vmatprep.mubr.bf16.mxu0 0
      %515 = vmatmul.mubr.bf16.gmra.mrb[0].mxu0 %v480
      %v516 = vpop.f32.mrb[0].mxu0
      %v517 = vadd.f32 0.0, %v516
      %v518 = vpop.f32.mrb[0].mxu0
      %v519 = vpop.f32.mrb[0].mxu0
      %v520 = vpop.f32.mrb[0].mxu0
      %521 = vdwg.mxu0
      %v522 = vadd.f32 %v344, %v517
      %v523 = vld [vmem:[%s4] sm:$0x1]
      %v525 = vlaneseq
      %v526 = vshrl.u32 %v525, 7
      %v527 = vsub.s32 0, %v526
      %v528 = vrot.slane %v523, %v527
      %v530 = vadd.f32 %v522, %v528
      %v531 = vmax.f32 %v530, 0.0
      %532 = vst.msk [vmem:[#allocation2 + $0x3] sm:$0xff] %vm340, %v531
      %v533 = vld [vmem:[#allocation2 + $0x2] sm:$0xff]
      %v534 = vld [vmem:[#allocation2 + $0x3] sm:$0xff]
      %v535 = vld [vmem:[#allocation2 + $0x4] sm:$0xff]
      %537 = vrot.lane.b32.xlu0 %v534, 32
      %v538 = vpop.permute.xlu0 %537
      %541 = vrot.lane.b32.xlu0 %v535, 64
      %v542 = vpop.permute.xlu0 %541
      %v544 = vsel %vm340, %v533, %v538
      %v545 = vsel %vm359, %v544, %v542
      %v546 = vpack.c.bf16 %v545, %v545
      %s547 = scalar_lea.vmem %s1, 48
      %v548 = vld [vmem:[%s547] sm:$0xf]
      %v549 = vld [vmem:[%s547 + $0x4] sm:$0xf]
      %v550 = vld [vmem:[%s547 + $0x8] sm:$0xf]
      %v551 = vld [vmem:[%s547 + $0xc] sm:$0xf]
      %v552 = vld [vmem:[%s547 + $0x10] sm:$0xf]
      %v553 = vld [vmem:[%s547 + $0x14] sm:$0xf]
      %v554 = vld [vmem:[%s547 + $0x18] sm:$0xf]
      %v555 = vld [vmem:[%s547 + $0x1c] sm:$0xf]
      %v556 = vld [vmem:[%s547 + $0x20] sm:$0xf]
      %v557 = vld [vmem:[%s547 + $0x24] sm:$0xf]
      %v558 = vld [vmem:[%s547 + $0x28] sm:$0xf]
      %v559 = vld [vmem:[%s547 + $0x2c] sm:$0xf]
      %s560 = scalar_lea.vmem %s2, 1
      %v561 = vld [vmem:[%s560] sm:$0x1]
      %v563 = vlaneseq
      %v564 = vshrl.u32 %v563, 7
      %v565 = vsub.s32 0, %v564
      %v566 = vrot.slane %v561, %v565
      %v580 = vunpack.c.l.b16 %v548
      %v581 = vunpack.c.l.b16 %v549
      %v582 = vunpack.c.l.b16 %v550
      %v583 = vunpack.c.l.b16 %v551
      %v584 = vunpack.c.l.b16 %v552
      %v585 = vunpack.c.l.b16 %v553
      %v586 = vunpack.c.l.b16 %v554
      %v587 = vunpack.c.l.b16 %v555
      %v588 = vunpack.c.l.b16 %v556
      %v589 = vunpack.c.l.b16 %v557
      %v590 = vunpack.c.l.b16 %v558
      %v591 = vunpack.c.l.b16 %v559
      %v592 = vpack.c.b16 %v581, %v580
      %v593 = vpack.c.b16 %v583, %v582
      %v594 = vpack.c.b16 %v585, %v584
      %v595 = vpack.c.b16 %v587, %v586
      %v596 = vpack.c.b16 %v589, %v588
      %v597 = vpack.c.b16 %v591, %v590
      %v605 = vsel %vm417, %v546, 0
      %607 = vmatprep.subr.bf16.mxu0 0
      %608 = vmatpush1.bf16.msra.mxu0 %v592
      %609 = vmatprep.subr.bf16.mxu0 0
      %610 = vmatpush1.bf16.msra.mxu0 %v593
      %611 = vmatprep.subr.bf16.mxu0 0
      %612 = vmatpush1.bf16.msra.mxu0 %v594
      %613 = vmatprep.subr.bf16.mxu0 0
      %614 = vmatpush1.bf16.msra.mxu0 %v595
      %615 = vmatprep.subr.bf16.mxu0 0
      %616 = vmatpush1.bf16.msra.mxu0 %v596
      %617 = vmatprep.subr.bf16.mxu0 0
      %618 = vmatpush1.bf16.msra.mxu0 %v597
      %619 = vmatprep.subr.bf16.mxu0 0
      %620 = vmatpush1.bf16.msra.mxu0 0
      %621 = vmatprep.subr.bf16.mxu0 0
      %622 = vmatpush1.bf16.msra.mxu0 0
      %623 = vmatprep.subr.bf16.mxu0 0
      %624 = vmatpush1.bf16.msra.mxu0 0
      %625 = vmatprep.subr.bf16.mxu0 0
      %626 = vmatpush1.bf16.msra.mxu0 0
      %627 = vmatprep.subr.bf16.mxu0 0
      %628 = vmatpush1.bf16.msra.mxu0 0
      %629 = vmatprep.subr.bf16.mxu0 0
      %630 = vmatpush1.bf16.msra.mxu0 0
      %631 = vmatprep.subr.bf16.mxu0 0
      %632 = vmatpush1.bf16.msra.mxu0 0
      %633 = vmatprep.subr.bf16.mxu0 0
      %634 = vmatpush1.bf16.msra.mxu0 0
      %635 = vmatprep.subr.bf16.mxu0 0
      %636 = vmatpush1.bf16.msra.mxu0 0
      %637 = vmatprep.subr.bf16.mxu0 0
      %638 = vmatpush1.bf16.msra.mxu0 0
      %639 = vmatprep.mubr.bf16.mxu0 0
      %640 = vmatmul.mubr.bf16.gmra.mrb[0].mxu0 %v605
      %v641 = vpop.f32.mrb[0].mxu0
      %v642 = vadd.f32 %v566, %v641
      %v643 = vpop.f32.mrb[0].mxu0
      %v644 = vpop.f32.mrb[0].mxu0
      %v645 = vpop.f32.mrb[0].mxu0
      %646 = vdwg.mxu0
      %v647 = vmax.f32 %v642, 0.0
      %v648 = vpack.c.bf16 %v647, %v647
      %s649 = scalar_lea.vmem %s3, 16
      %v650 = vld [vmem:[%s649] sm:$0xf]
      %v651 = vld [vmem:[%s649 + $0x4] sm:$0xf]
      %v652 = vld [vmem:[%s649 + $0x8] sm:$0xf]
      %v653 = vld [vmem:[%s649 + $0xc] sm:$0xf]
      %v658 = vunpack.c.l.b16 %v650
      %v659 = vunpack.c.l.b16 %v651
      %v660 = vunpack.c.l.b16 %v652
      %v661 = vunpack.c.l.b16 %v653
      %v662 = vpack.c.b16 %v659, %v658
      %v663 = vpack.c.b16 %v661, %v660
      %v667 = vsel %vm340, %v648, 0
      %669 = vmatprep.subr.bf16.mxu0 0
      %670 = vmatpush1.bf16.msra.mxu0 %v662
      %671 = vmatprep.subr.bf16.mxu0 0
      %672 = vmatpush1.bf16.msra.mxu0 %v663
      %673 = vmatprep.subr.bf16.mxu0 0
      %674 = vmatpush1.bf16.msra.mxu0 0
      %675 = vmatprep.subr.bf16.mxu0 0
      %676 = vmatpush1.bf16.msra.mxu0 0
      %677 = vmatprep.subr.bf16.mxu0 0
      %678 = vmatpush1.bf16.msra.mxu0 0
      %679 = vmatprep.subr.bf16.mxu0 0
      %680 = vmatpush1.bf16.msra.mxu0 0
      %681 = vmatprep.subr.bf16.mxu0 0
      %682 = vmatpush1.bf16.msra.mxu0 0
      %683 = vmatprep.subr.bf16.mxu0 0
      %684 = vmatpush1.bf16.msra.mxu0 0
      %685 = vmatprep.subr.bf16.mxu0 0
      %686 = vmatpush1.bf16.msra.mxu0 0
      %687 = vmatprep.subr.bf16.mxu0 0
      %688 = vmatpush1.bf16.msra.mxu0 0
      %689 = vmatprep.subr.bf16.mxu0 0
      %690 = vmatpush1.bf16.msra.mxu0 0
      %691 = vmatprep.subr.bf16.mxu0 0
      %692 = vmatpush1.bf16.msra.mxu0 0
      %693 = vmatprep.subr.bf16.mxu0 0
      %694 = vmatpush1.bf16.msra.mxu0 0
      %695 = vmatprep.subr.bf16.mxu0 0
      %696 = vmatpush1.bf16.msra.mxu0 0
      %697 = vmatprep.subr.bf16.mxu0 0
      %698 = vmatpush1.bf16.msra.mxu0 0
      %699 = vmatprep.subr.bf16.mxu0 0
      %700 = vmatpush1.bf16.msra.mxu0 0
      %701 = vmatprep.mubr.bf16.mxu0 0
      %702 = vmatmul.mubr.bf16.gmra.mrb[0].mxu0 %v667
      %v703 = vpop.f32.mrb[0].mxu0
      %v704 = vadd.f32 0.0, %v703
      %v705 = vpop.f32.mrb[0].mxu0
      %v706 = vpop.f32.mrb[0].mxu0
      %v707 = vpop.f32.mrb[0].mxu0
      %708 = vdwg.mxu0
      %v709 = vadd.f32 %v530, %v704
      %s710 = scalar_lea.vmem %s4, 1
      %v711 = vld [vmem:[%s710] sm:$0x1]
      %v713 = vlaneseq
      %v714 = vshrl.u32 %v713, 7
      %v715 = vsub.s32 0, %v714
      %v716 = vrot.slane %v711, %v715
      %v718 = vadd.f32 %v709, %v716
      %719 = vst.msk [vmem:[#allocation2 + $0x3] sm:$0xff] %vm340, %v718
      %v720 = vld [vmem:[#allocation2 + $0x2] sm:$0xff]
      %v721 = vld [vmem:[#allocation2 + $0x4] sm:$0xff]
      %v722 = vld [vmem:[%s7] sm:$0x1]
      %724 = vrot.lane.b32.xlu0 %v718, 32
      %v725 = vpop.permute.xlu0 %724
      %v727 = vsel %vm340, %v720, %v725
      %v728 = vpack.c.bf16 %v727, %v727
      %v729 = vld [vmem:[%s5] sm:$0xf]
      %v730 = vld [vmem:[%s5 + $0x4] sm:$0xf]
      %v731 = vld [vmem:[%s5 + $0x8] sm:$0xf]
      %v732 = vld [vmem:[%s5 + $0xc] sm:$0xf]
      %v733 = vld [vmem:[%s5 + $0x10] sm:$0xf]
      %v734 = vld [vmem:[%s5 + $0x14] sm:$0xf]
      %v735 = vld [vmem:[%s5 + $0x18] sm:$0xf]
      %v736 = vld [vmem:[%s5 + $0x1c] sm:$0xf]
      %v738 = vlaneseq
      %v739 = vshrl.u32 %v738, 7
      %v740 = vsub.s32 0, %v739
      %v741 = vrot.slane %v722, %v740
      %v751 = vunpack.c.l.b16 %v729
      %v752 = vunpack.c.l.b16 %v730
      %v753 = vunpack.c.l.b16 %v731
      %v754 = vunpack.c.l.b16 %v732
      %v755 = vunpack.c.l.b16 %v733
      %v756 = vunpack.c.l.b16 %v734
      %v757 = vunpack.c.l.b16 %v735
      %v758 = vunpack.c.l.b16 %v736
      %v759 = vpack.c.b16 %v752, %v751
      %v760 = vpack.c.b16 %v754, %v753
      %v761 = vpack.c.b16 %v756, %v755
      %v762 = vpack.c.b16 %v758, %v757
      %v768 = vsel %vm359, %v728, 0
      %770 = vmatprep.subr.bf16.mxu0 0
      %771 = vmatpush1.bf16.msra.mxu0 %v759
      %772 = vmatprep.subr.bf16.mxu0 0
      %773 = vmatpush1.bf16.msra.mxu0 %v760
      %774 = vmatprep.subr.bf16.mxu0 0
      %775 = vmatpush1.bf16.msra.mxu0 %v761
      %776 = vmatprep.subr.bf16.mxu0 0
      %777 = vmatpush1.bf16.msra.mxu0 %v762
      %778 = vmatprep.subr.bf16.mxu0 0
      %779 = vmatpush1.bf16.msra.mxu0 0
      %780 = vmatprep.subr.bf16.mxu0 0
      %781 = vmatpush1.bf16.msra.mxu0 0
      %782 = vmatprep.subr.bf16.mxu0 0
      %783 = vmatpush1.bf16.msra.mxu0 0
      %784 = vmatprep.subr.bf16.mxu0 0
      %785 = vmatpush1.bf16.msra.mxu0 0
      %786 = vmatprep.subr.bf16.mxu0 0
      %787 = vmatpush1.bf16.msra.mxu0 0
      %788 = vmatprep.subr.bf16.mxu0 0
      %789 = vmatpush1.bf16.msra.mxu0 0
      %790 = vmatprep.subr.bf16.mxu0 0
      %791 = vmatpush1.bf16.msra.mxu0 0
      %792 = vmatprep.subr.bf16.mxu0 0
      %793 = vmatpush1.bf16.msra.mxu0 0
      %794 = vmatprep.subr.bf16.mxu0 0
      %795 = vmatpush1.bf16.msra.mxu0 0
      %796 = vmatprep.subr.bf16.mxu0 0
      %797 = vmatpush1.bf16.msra.mxu0 0
      %798 = vmatprep.subr.bf16.mxu0 0
      %799 = vmatpush1.bf16.msra.mxu0 0
      %800 = vmatprep.subr.bf16.mxu0 0
      %801 = vmatpush1.bf16.msra.mxu0 0
      %802 = vmatprep.mubr.bf16.mxu0 0
      %803 = vmatmul.mubr.bf16.gmra.mrb[0].mxu0 %v768
      %v804 = vpop.f32.mrb[0].mxu0
      %v805 = vadd.f32 %v741, %v804
      %v806 = vpop.f32.mrb[0].mxu0
      %v807 = vpop.f32.mrb[0].mxu0
      %v808 = vpop.f32.mrb[0].mxu0
      %809 = vdwg.mxu0
      %811 = vrot.lane.b32.xlu0 %v721, 32
      %v812 = vpop.permute.xlu0 %811
      %v814 = vsel %vm340, %v718, %v812
      %v815 = vpack.c.bf16 %v814, %v814
      %v816 = vld [vmem:[%s6] sm:$0xf]
      %v817 = vld [vmem:[%s6 + $0x4] sm:$0xf]
      %v818 = vld [vmem:[%s6 + $0x8] sm:$0xf]
      %v819 = vld [vmem:[%s6 + $0xc] sm:$0xf]
      %v820 = vld [vmem:[%s6 + $0x10] sm:$0xf]
      %v821 = vld [vmem:[%s6 + $0x14] sm:$0xf]
      %v822 = vld [vmem:[%s6 + $0x18] sm:$0xf]
      %v823 = vld [vmem:[%s6 + $0x1c] sm:$0xf]
      %v832 = vunpack.c.l.b16 %v816
      %v833 = vunpack.c.l.b16 %v817
      %v834 = vunpack.c.l.b16 %v818
      %v835 = vunpack.c.l.b16 %v819
      %v836 = vunpack.c.l.b16 %v820
      %v837 = vunpack.c.l.b16 %v821
      %v838 = vunpack.c.l.b16 %v822
      %v839 = vunpack.c.l.b16 %v823
      %v840 = vpack.c.b16 %v833, %v832
      %v841 = vpack.c.b16 %v835, %v834
      %v842 = vpack.c.b16 %v837, %v836
      %v843 = vpack.c.b16 %v839, %v838
      %v849 = vsel %vm359, %v815, 0
      %851 = vmatprep.subr.bf16.mxu0 0
      %852 = vmatpush1.bf16.msra.mxu0 %v840
      %853 = vmatprep.subr.bf16.mxu0 0
      %854 = vmatpush1.bf16.msra.mxu0 %v841
      %855 = vmatprep.subr.bf16.mxu0 0
      %856 = vmatpush1.bf16.msra.mxu0 %v842
      %857 = vmatprep.subr.bf16.mxu0 0
      %858 = vmatpush1.bf16.msra.mxu0 %v843
      %859 = vmatprep.subr.bf16.mxu0 0
      %860 = vmatpush1.bf16.msra.mxu0 0
      %861 = vmatprep.subr.bf16.mxu0 0
      %862 = vmatpush1.bf16.msra.mxu0 0
      %863 = vmatprep.subr.bf16.mxu0 0
      %864 = vmatpush1.bf16.msra.mxu0 0
      %865 = vmatprep.subr.bf16.mxu0 0
      %866 = vmatpush1.bf16.msra.mxu0 0
      %867 = vmatprep.subr.bf16.mxu0 0
      %868 = vmatpush1.bf16.msra.mxu0 0
      %869 = vmatprep.subr.bf16.mxu0 0
      %870 = vmatpush1.bf16.msra.mxu0 0
      %871 = vmatprep.subr.bf16.mxu0 0
      %872 = vmatpush1.bf16.msra.mxu0 0
      %873 = vmatprep.subr.bf16.mxu0 0
      %874 = vmatpush1.bf16.msra.mxu0 0
      %875 = vmatprep.subr.bf16.mxu0 0
      %876 = vmatpush1.bf16.msra.mxu0 0
      %877 = vmatprep.subr.bf16.mxu0 0
      %878 = vmatpush1.bf16.msra.mxu0 0
      %879 = vmatprep.subr.bf16.mxu0 0
      %880 = vmatpush1.bf16.msra.mxu0 0
      %881 = vmatprep.subr.bf16.mxu0 0
      %882 = vmatpush1.bf16.msra.mxu0 0
      %883 = vmatprep.mubr.bf16.mxu0 0
      %884 = vmatmul.mubr.bf16.gmra.mrb[0].mxu0 %v849
      %v885 = vpop.f32.mrb[0].mxu0
      %v886 = vadd.f32 %v741, %v885
      %v887 = vpop.f32.mrb[0].mxu0
      %v888 = vpop.f32.mrb[0].mxu0
      %v889 = vpop.f32.mrb[0].mxu0
      %890 = vdwg.mxu0
      %891 = vst.msk [vmem:[%s334] sm:$0xff] %vm340, %v805
      %892 = vst.msk [vmem:[%s338] sm:$0xff] %vm340, %v886
      %p893 = scmp.lt.s32.totalorder %s21, 1
      %s894 = scalar_select %p893, %s21, 1
      %s895 = smul.addr %s894, 8
      %s896 = scalar_lea.vmem %s8, %s895
      %p897 = scmp.lt.s32.totalorder %s21, 1
      %s898 = scalar_select %p897, %s21, 1
      %s899 = smul.addr %s898, 8
      %s900 = scalar_lea.vmem %s9, %s899
      // Predicated region
      $region53: #{decoder_forward_pallas.5} parent=51 // pred_check
        %p901 = pneg %p212
      $region54: #{decoder_forward_pallas.5} parent=51 // pred_check_branch
        %903 = sbr.rel (%p901) target = $region56
      $region55: #{decoder_forward_pallas.5} parent=51 // pred_region
        _
      $region56: #{decoder_forward_pallas.5} parent=51 // pred_fallthru
        _
      // Predicated region
      $region57: #{decoder_forward_pallas.5} parent=51 // pred_check
        %p904 = pneg %p238
      $region58: #{decoder_forward_pallas.5} parent=51 // pred_check_branch
        %906 = sbr.rel (%p904) target = $region60
      $region59: #{decoder_forward_pallas.5} parent=51 // pred_region
        _
      $region60: #{decoder_forward_pallas.5} parent=51 // pred_fallthru
        _
    $region52: #{decoder_forward_pallas.5} parent=5 // pred_fallthru
      _
    %p907 = scmp.le.s32.totalorder 2, %s16
    // Predicated region
    $region61: #{decoder_forward_pallas.5} parent=5 // pred_check
      %p908 = pneg %p907
    $region62: #{decoder_forward_pallas.5} parent=5 // pred_check_branch
      %910 = sbr.rel (%p908) target = $region64
    $region63: #{decoder_forward_pallas.5} parent=5 // pred_region
      %s911 = ssub.s32 %s16, 2
      // Predicated region
      $region65: #{decoder_forward_pallas.5} parent=63 // pred_check
        %p912 = pneg %p218
      $region66: #{decoder_forward_pallas.5} parent=63 // pred_check_branch
        %914 = sbr.rel (%p912) target = $region68
      $region67: #{decoder_forward_pallas.5} parent=63 // pred_region
        %p915 = scmp.lt.s32.totalorder %s22, 1
        %s916 = scalar_select %p915, %s22, 1
        %s917 = smul.addr %s916, 8
        %s918 = scalar_lea.vmem %s8, %s917
      $region68: #{decoder_forward_pallas.5} parent=63 // pred_fallthru
        _
      // Predicated region
      $region69: #{decoder_forward_pallas.5} parent=63 // pred_check
        %p919 = pneg %p244
      $region70: #{decoder_forward_pallas.5} parent=63 // pred_check_branch
        %921 = sbr.rel (%p919) target = $region72
      $region71: #{decoder_forward_pallas.5} parent=63 // pred_region
        %p922 = scmp.lt.s32.totalorder %s22, 1
        %s923 = scalar_select %p922, %s22, 1
        %s924 = smul.addr %s923, 8
        %s925 = scalar_lea.vmem %s9, %s924
      $region72: #{decoder_forward_pallas.5} parent=63 // pred_fallthru
        _
    $region64: #{decoder_forward_pallas.5} parent=5 // pred_fallthru
      _
  $region6: #{decoder_forward_pallas.5} parent=0 // loop_footer
    %s20 = sadd.s32 1, %s16
  $region7: #{decoder_forward_pallas.5} parent=0 // loop_footer_branch
    %15 = sbr.rel target = $region3
  $region8: #{decoder_forward_pallas.5} parent=0 // loop_exit
    _

// kernel: decoder_forward_pallas.6
$region0: #{decoder_forward_pallas.6}
  #allocation0 [shape = 'u32[]', space=smem, size = 0x4, offset = 0x4, fixed_abs, tag = 'smem constant byte address 0x4 - core index']
  #allocation1 [shape = 'u32[144,128]{1,0:T(1,128)}', space=vmem, size = 0x12000, scoped, tag = 'internal scratch']
  #allocation2 [shape = 'f32[22,32]{1,0:T(8,128)}', space=vmem, size = 0x3000, scoped, tag = 'scratch operand']
  %s0 = inlined_call_operand.vmem [shape: f32[2,16,32], index: 0, kind: input, shape index: {}]
  %s1 = inlined_call_operand.vmem [shape: bf16[2,96,32], index: 1, kind: input, shape index: {}]
  %s2 = inlined_call_operand.vmem [shape: f32[2,1,32], index: 2, kind: input, shape index: {}]
  %s3 = inlined_call_operand.vmem [shape: bf16[2,32,32], index: 3, kind: input, shape index: {}]
  %s4 = inlined_call_operand.vmem [shape: f32[2,1,32], index: 4, kind: input, shape index: {}]
  %s5 = inlined_call_operand.vmem [shape: bf16[64,32], index: 5, kind: input, shape index: {}]
  %s6 = inlined_call_operand.vmem [shape: bf16[64,32], index: 6, kind: input, shape index: {}]
  %s7 = inlined_call_operand.vmem [shape: f32[1,32], index: 7, kind: input, shape index: {}]
  %s8 = inlined_call_operand.vmem [shape: f32[2,16,32], index: 8, kind: output, shape index: {0}]
  %s9 = inlined_call_operand.vmem [shape: f32[2,16,32], index: 9, kind: output, shape index: {1}]
  %10 = xla_tuple %s8, %s9
  %s11 = sld [smem:[#allocation0]]
  $region73: #{decoder_forward_pallas.6} parent=0
    _
  %s13 = ssub.s32 1, %s11
  %s14 = scalar_select 0, %s13, %s11
  loop: start=0, step=1, limit=4
  $region2: #{decoder_forward_pallas.6} parent=0 // loop_pre_header
    _
  $region3: #{decoder_forward_pallas.6} parent=0 // loop_header
    %s16 = sphi 0, %s20
    %p17 = scmp.ge.s32.totalorder %s16, 4
    %s26 = sphi 0, %s28
    %s29 = sphi 0, %s26
    %s30 = sphi 0, %s29
    %s46 = sphi 0, %s30
    %s50 = sphi 0, %s50
    %s52 = sphi 0, %s50
    %s53 = sphi 0, %s52
    %s67 = sphi 0, %s53
    %s71 = sphi 0, %s71
    %s73 = sphi 0, %s71
    %s74 = sphi 0, %s73
    %s88 = sphi 0, %s74
    %s92 = sphi 0, %s92
    %s94 = sphi 0, %s92
    %s95 = sphi 0, %s94
    %s109 = sphi 0, %s95
    %s113 = sphi 0, %s113
    %s115 = sphi 0, %s113
    %s116 = sphi 0, %s115
    %s130 = sphi 0, %s116
    %s134 = sphi 0, %s134
    %s136 = sphi 0, %s134
    %s137 = sphi 0, %s136
    %s151 = sphi 0, %s137
    %s155 = sphi 0, %s155
    %s157 = sphi 0, %s155
    %s158 = sphi 0, %s157
    %s172 = sphi 0, %s158
    %s176 = sphi 0, %s176
    %s178 = sphi 0, %s176
    %s179 = sphi 0, %s178
    %s193 = sphi 0, %s179
    %s199 = sphi 0, %s201
    %s202 = sphi 0, %s199
    %s203 = sphi 0, %s202
    %s219 = sphi 0, %s203
    %s225 = sphi 0, %s227
    %s228 = sphi 0, %s225
    %s229 = sphi 0, %s228
    %s245 = sphi 0, %s229
  $region4: #{decoder_forward_pallas.6} parent=0 // loop_header_branch
    %19 = sbr.rel (%p17) target = $region8
  $region5: #{decoder_forward_pallas.6} parent=0 // loop_body
    %s21 = ssub.s32 %s16, 1
    %s22 = ssub.s32 %s16, 2
    %s23 = sadd.s32 %s16, 1
    %s24 = ssub.s32 %s16, %s23
    %p25 = scmp.eq.s32.totalorder %s24, 0
    %s27 = sadd.s32 %s26, 1
    %s28 = scalar_select %p25, %s26, %s27
    %p31 = pneg %p25
    %p32 = scmp.eq.s32.totalorder %s16, 1
    %p33 = por %p31, %p32
    %p34 = scmp.ne.s32.totalorder %s26, %s29
    %p35 = scmp.eq.s32.totalorder %s16, 0
    %p36 = por %p34, %p35
    %p37 = scmp.ne.s32.totalorder %s26, %s29
    %p38 = scmp.eq.s32.totalorder %s21, 1
    %p39 = por %p37, %p38
    %p40 = scmp.ne.s32.totalorder %s29, %s30
    %p41 = scmp.eq.s32.totalorder %s21, 0
    %p42 = por %p40, %p41
    %p43 = scmp.ne.s32.totalorder %s29, %s30
    %p44 = scmp.eq.s32.totalorder %s22, 1
    %p45 = por %p43, %p44
    %p47 = scmp.ne.s32.totalorder %s30, %s46
    %p48 = scmp.eq.s32.totalorder %s22, 0
    %p49 = por %p47, %p48
    %s51 = sadd.s32 %s50, 1
    %p54 = scmp.eq.s32.totalorder %s16, 1
    %p55 = scmp.ne.s32.totalorder %s50, %s52
    %p56 = scmp.eq.s32.totalorder %s16, 0
    %p57 = por %p55, %p56
    %p58 = scmp.ne.s32.totalorder %s50, %s52
    %p59 = scmp.eq.s32.totalorder %s21, 1
    %p60 = por %p58, %p59
    %p61 = scmp.ne.s32.totalorder %s52, %s53
    %p62 = scmp.eq.s32.totalorder %s21, 0
    %p63 = por %p61, %p62
    %p64 = scmp.ne.s32.totalorder %s52, %s53
    %p65 = scmp.eq.s32.totalorder %s22, 1
    %p66 = por %p64, %p65
    %p68 = scmp.ne.s32.totalorder %s53, %s67
    %p69 = scmp.eq.s32.totalorder %s22, 0
    %p70 = por %p68, %p69
    %s72 = sadd.s32 %s71, 1
    %p75 = scmp.eq.s32.totalorder %s16, 1
    %p76 = scmp.ne.s32.totalorder %s71, %s73
    %p77 = scmp.eq.s32.totalorder %s16, 0
    %p78 = por %p76, %p77
    %p79 = scmp.ne.s32.totalorder %s71, %s73
    %p80 = scmp.eq.s32.totalorder %s21, 1
    %p81 = por %p79, %p80
    %p82 = scmp.ne.s32.totalorder %s73, %s74
    %p83 = scmp.eq.s32.totalorder %s21, 0
    %p84 = por %p82, %p83
    %p85 = scmp.ne.s32.totalorder %s73, %s74
    %p86 = scmp.eq.s32.totalorder %s22, 1
    %p87 = por %p85, %p86
    %p89 = scmp.ne.s32.totalorder %s74, %s88
    %p90 = scmp.eq.s32.totalorder %s22, 0
    %p91 = por %p89, %p90
    %s93 = sadd.s32 %s92, 1
    %p96 = scmp.eq.s32.totalorder %s16, 1
    %p97 = scmp.ne.s32.totalorder %s92, %s94
    %p98 = scmp.eq.s32.totalorder %s16, 0
    %p99 = por %p97, %p98
    %p100 = scmp.ne.s32.totalorder %s92, %s94
    %p101 = scmp.eq.s32.totalorder %s21, 1
    %p102 = por %p100, %p101
    %p103 = scmp.ne.s32.totalorder %s94, %s95
    %p104 = scmp.eq.s32.totalorder %s21, 0
    %p105 = por %p103, %p104
    %p106 = scmp.ne.s32.totalorder %s94, %s95
    %p107 = scmp.eq.s32.totalorder %s22, 1
    %p108 = por %p106, %p107
    %p110 = scmp.ne.s32.totalorder %s95, %s109
    %p111 = scmp.eq.s32.totalorder %s22, 0
    %p112 = por %p110, %p111
    %s114 = sadd.s32 %s113, 1
    %p117 = scmp.eq.s32.totalorder %s16, 1
    %p118 = scmp.ne.s32.totalorder %s113, %s115
    %p119 = scmp.eq.s32.totalorder %s16, 0
    %p120 = por %p118, %p119
    %p121 = scmp.ne.s32.totalorder %s113, %s115
    %p122 = scmp.eq.s32.totalorder %s21, 1
    %p123 = por %p121, %p122
    %p124 = scmp.ne.s32.totalorder %s115, %s116
    %p125 = scmp.eq.s32.totalorder %s21, 0
    %p126 = por %p124, %p125
    %p127 = scmp.ne.s32.totalorder %s115, %s116
    %p128 = scmp.eq.s32.totalorder %s22, 1
    %p129 = por %p127, %p128
    %p131 = scmp.ne.s32.totalorder %s116, %s130
    %p132 = scmp.eq.s32.totalorder %s22, 0
    %p133 = por %p131, %p132
    %s135 = sadd.s32 %s134, 1
    %p138 = scmp.eq.s32.totalorder %s16, 1
    %p139 = scmp.ne.s32.totalorder %s134, %s136
    %p140 = scmp.eq.s32.totalorder %s16, 0
    %p141 = por %p139, %p140
    %p142 = scmp.ne.s32.totalorder %s134, %s136
    %p143 = scmp.eq.s32.totalorder %s21, 1
    %p144 = por %p142, %p143
    %p145 = scmp.ne.s32.totalorder %s136, %s137
    %p146 = scmp.eq.s32.totalorder %s21, 0
    %p147 = por %p145, %p146
    %p148 = scmp.ne.s32.totalorder %s136, %s137
    %p149 = scmp.eq.s32.totalorder %s22, 1
    %p150 = por %p148, %p149
    %p152 = scmp.ne.s32.totalorder %s137, %s151
    %p153 = scmp.eq.s32.totalorder %s22, 0
    %p154 = por %p152, %p153
    %s156 = sadd.s32 %s155, 1
    %p159 = scmp.eq.s32.totalorder %s16, 1
    %p160 = scmp.ne.s32.totalorder %s155, %s157
    %p161 = scmp.eq.s32.totalorder %s16, 0
    %p162 = por %p160, %p161
    %p163 = scmp.ne.s32.totalorder %s155, %s157
    %p164 = scmp.eq.s32.totalorder %s21, 1
    %p165 = por %p163, %p164
    %p166 = scmp.ne.s32.totalorder %s157, %s158
    %p167 = scmp.eq.s32.totalorder %s21, 0
    %p168 = por %p166, %p167
    %p169 = scmp.ne.s32.totalorder %s157, %s158
    %p170 = scmp.eq.s32.totalorder %s22, 1
    %p171 = por %p169, %p170
    %p173 = scmp.ne.s32.totalorder %s158, %s172
    %p174 = scmp.eq.s32.totalorder %s22, 0
    %p175 = por %p173, %p174
    %s177 = sadd.s32 %s176, 1
    %p180 = scmp.eq.s32.totalorder %s16, 1
    %p181 = scmp.ne.s32.totalorder %s176, %s178
    %p182 = scmp.eq.s32.totalorder %s16, 0
    %p183 = por %p181, %p182
    %p184 = scmp.ne.s32.totalorder %s176, %s178
    %p185 = scmp.eq.s32.totalorder %s21, 1
    %p186 = por %p184, %p185
    %p187 = scmp.ne.s32.totalorder %s178, %s179
    %p188 = scmp.eq.s32.totalorder %s21, 0
    %p189 = por %p187, %p188
    %p190 = scmp.ne.s32.totalorder %s178, %s179
    %p191 = scmp.eq.s32.totalorder %s22, 1
    %p192 = por %p190, %p191
    %p194 = scmp.ne.s32.totalorder %s179, %s193
    %p195 = scmp.eq.s32.totalorder %s22, 0
    %p196 = por %p194, %p195
    %s197 = ssub.s32 %s16, %s23
    %p198 = scmp.eq.s32.totalorder %s197, 0
    %s200 = sadd.s32 %s199, 1
    %s201 = scalar_select %p198, %s199, %s200
    %p204 = pneg %p198
    %p205 = scmp.eq.s32.totalorder %s16, 1
    %p206 = por %p204, %p205
    %p207 = scmp.ne.s32.totalorder %s199, %s202
    %p208 = scmp.eq.s32.totalorder %s16, 0
    %p209 = por %p207, %p208
    %p210 = scmp.ne.s32.totalorder %s199, %s202
    %p211 = scmp.eq.s32.totalorder %s21, 1
    %p212 = por %p210, %p211
    %p213 = scmp.ne.s32.totalorder %s202, %s203
    %p214 = scmp.eq.s32.totalorder %s21, 0
    %p215 = por %p213, %p214
    %p216 = scmp.ne.s32.totalorder %s202, %s203
    %p217 = scmp.eq.s32.totalorder %s22, 1
    %p218 = por %p216, %p217
    %p220 = scmp.ne.s32.totalorder %s203, %s219
    %p221 = scmp.eq.s32.totalorder %s22, 0
    %p222 = por %p220, %p221
    %s223 = ssub.s32 %s16, %s23
    %p224 = scmp.eq.s32.totalorder %s223, 0
    %s226 = sadd.s32 %s225, 1
    %s227 = scalar_select %p224, %s225, %s226
    %p230 = pneg %p224
    %p231 = scmp.eq.s32.totalorder %s16, 1
    %p232 = por %p230, %p231
    %p233 = scmp.ne.s32.totalorder %s225, %s228
    %p234 = scmp.eq.s32.totalorder %s16, 0
    %p235 = por %p233, %p234
    %p236 = scmp.ne.s32.totalorder %s225, %s228
    %p237 = scmp.eq.s32.totalorder %s21, 1
    %p238 = por %p236, %p237
    %p239 = scmp.ne.s32.totalorder %s228, %s229
    %p240 = scmp.eq.s32.totalorder %s21, 0
    %p241 = por %p239, %p240
    %p242 = scmp.ne.s32.totalorder %s228, %s229
    %p243 = scmp.eq.s32.totalorder %s22, 1
    %p244 = por %p242, %p243
    %p246 = scmp.ne.s32.totalorder %s229, %s245
    %p247 = scmp.eq.s32.totalorder %s22, 0
    %p248 = por %p246, %p247
    %p249 = scmp.le.s32.totalorder 1, %s16
    %p250 = scmp.lt.s32.totalorder %s16, 3
    %p251 = pnand %p249, %p250
    %p252 = pneg %p251
    // Predicated region
    $region9: #{decoder_forward_pallas.6} parent=5 // pred_check
      _
    $region10: #{decoder_forward_pallas.6} parent=5 // pred_check_branch
      %254 = sbr.rel (%p251) target = $region12
    $region11: #{decoder_forward_pallas.6} parent=5 // pred_region
      %s255 = ssub.s32 %s16, 1
      // Predicated region
      $region13: #{decoder_forward_pallas.6} parent=11 // pred_check
        %p256 = pneg %p63
      $region14: #{decoder_forward_pallas.6} parent=11 // pred_check_branch
        %258 = sbr.rel (%p256) target = $region16
      $region15: #{decoder_forward_pallas.6} parent=11 // pred_region
        _
      $region16: #{decoder_forward_pallas.6} parent=11 // pred_fallthru
        _
      // Predicated region
      $region17: #{decoder_forward_pallas.6} parent=11 // pred_check
        %p259 = pneg %p84
      $region18: #{decoder_forward_pallas.6} parent=11 // pred_check_branch
        %261 = sbr.rel (%p259) target = $region20
      $region19: #{decoder_forward_pallas.6} parent=11 // pred_region
        _
      $region20: #{decoder_forward_pallas.6} parent=11 // pred_fallthru
        _
      // Predicated region
      $region21: #{decoder_forward_pallas.6} parent=11 // pred_check
        %p262 = pneg %p105
      $region22: #{decoder_forward_pallas.6} parent=11 // pred_check_branch
        %264 = sbr.rel (%p262) target = $region24
      $region23: #{decoder_forward_pallas.6} parent=11 // pred_region
        _
      $region24: #{decoder_forward_pallas.6} parent=11 // pred_fallthru
        _
      // Predicated region
      $region25: #{decoder_forward_pallas.6} parent=11 // pred_check
        %p265 = pneg %p126
      $region26: #{decoder_forward_pallas.6} parent=11 // pred_check_branch
        %267 = sbr.rel (%p265) target = $region28
      $region27: #{decoder_forward_pallas.6} parent=11 // pred_region
        _
      $region28: #{decoder_forward_pallas.6} parent=11 // pred_fallthru
        _
      // Predicated region
      $region29: #{decoder_forward_pallas.6} parent=11 // pred_check
        %p268 = pneg %p147
      $region30: #{decoder_forward_pallas.6} parent=11 // pred_check_branch
        %270 = sbr.rel (%p268) target = $region32
      $region31: #{decoder_forward_pallas.6} parent=11 // pred_region
        _
      $region32: #{decoder_forward_pallas.6} parent=11 // pred_fallthru
        _
      // Predicated region
      $region33: #{decoder_forward_pallas.6} parent=11 // pred_check
        %p271 = pneg %p168
      $region34: #{decoder_forward_pallas.6} parent=11 // pred_check_branch
        %273 = sbr.rel (%p271) target = $region36
      $region35: #{decoder_forward_pallas.6} parent=11 // pred_region
        _
      $region36: #{decoder_forward_pallas.6} parent=11 // pred_fallthru
        _
      // Predicated region
      $region37: #{decoder_forward_pallas.6} parent=11 // pred_check
        %p274 = pneg %p189
      $region38: #{decoder_forward_pallas.6} parent=11 // pred_check_branch
        %276 = sbr.rel (%p274) target = $region40
      $region39: #{decoder_forward_pallas.6} parent=11 // pred_region
        _
      $region40: #{decoder_forward_pallas.6} parent=11 // pred_fallthru
        _
    $region12: #{decoder_forward_pallas.6} parent=5 // pred_fallthru
      _
    %p277 = scmp.lt.s32.totalorder %s16, 2
    // Predicated region
    $region41: #{decoder_forward_pallas.6} parent=5 // pred_check
      %p278 = pneg %p277
    $region42: #{decoder_forward_pallas.6} parent=5 // pred_check_branch
      %280 = sbr.rel (%p278) target = $region44
    $region43: #{decoder_forward_pallas.6} parent=5 // pred_region
      // Predicated region
      $region45: #{decoder_forward_pallas.6} parent=43 // pred_check
        %p281 = pneg %p36
      $region46: #{decoder_forward_pallas.6} parent=43 // pred_check_branch
        %283 = sbr.rel (%p281) target = $region48
      $region47: #{decoder_forward_pallas.6} parent=43 // pred_region
        %p284 = scmp.lt.s32.totalorder %s16, 1
        %s285 = scalar_select %p284, %s16, 1
        %s286 = smul.addr %s285, 2
        %s287 = smul.addr %s286, 8
        %s288 = scalar_lea.vmem %s0, %s287
      $region48: #{decoder_forward_pallas.6} parent=43 // pred_fallthru
        _
    $region44: #{decoder_forward_pallas.6} parent=5 // pred_fallthru
      _
    %p289 = scmp.le.s32.totalorder 1, %s16
    %p290 = scmp.lt.s32.totalorder %s16, 3
    %p291 = pnand %p289, %p290
    %p292 = pneg %p291
    // Predicated region
    $region49: #{decoder_forward_pallas.6} parent=5 // pred_check
      _
    $region50: #{decoder_forward_pallas.6} parent=5 // pred_check_branch
      %294 = sbr.rel (%p291) target = $region52
    $region51: #{decoder_forward_pallas.6} parent=5 // pred_region
      %s295 = ssub.s32 %s16, 1
      %p296 = scmp.lt.s32.totalorder %s21, 1
      %s297 = scalar_select %p296, %s21, 1
      %s298 = smul.addr %s297, 2
      %s299 = smul.addr %s298, 8
      %s300 = scalar_lea.vmem %s0, %s299
      %p301 = pneg %p42
      %p302 = pneg %p39
      %p303 = pneg %p63
      %p304 = pneg %p60
      %p305 = pneg %p84
      %p306 = pneg %p81
      %p307 = pneg %p105
      %p308 = pneg %p102
      %p309 = pneg %p126
      %p310 = pneg %p123
      %p311 = pneg %p147
      %p312 = pneg %p144
      %p313 = pneg %p168
      %p314 = pneg %p165
      %p315 = pneg %p189
      %p316 = pneg %p186
      %p317 = pneg %p215
      %p318 = pneg %p212
      %p319 = scmp.lt.s32.totalorder %s21, 1
      %s320 = scalar_select %p319, %s21, 1
      %s321 = smul.addr %s320, 2
      %s322 = smul.addr %s321, 8
      %s323 = scalar_lea.vmem %s8, %s322
      %p324 = pneg %p241
      %p325 = pneg %p238
      %p326 = scmp.lt.s32.totalorder %s21, 1
      %s327 = scalar_select %p326, %s21, 1
      %s328 = smul.addr %s327, 2
      %s329 = smul.addr %s328, 8
      %s330 = scalar_lea.vmem %s9, %s329
      %p331 = scmp.lt.s32.totalorder %s21, 1
      %s332 = scalar_select %p331, %s21, 1
      %s333 = smul.addr %s332, 2
      %s334 = smul.addr %s333, 8
      %s335 = scalar_lea.vmem %s0, %s334
      %p336 = scmp.lt.s32.totalorder %s21, 1
      %s337 = scalar_select %p336, %s21, 1
      %s338 = smul.addr %s337, 2
      %s339 = smul.addr %s338, 8
      %s340 = scalar_lea.vmem %s8, %s339
      %p341 = scmp.lt.s32.totalorder %s21, 1
      %s342 = scalar_select %p341, %s21, 1
      %s343 = smul.addr %s342, 2
      %s344 = smul.addr %s343, 8
      %s345 = scalar_lea.vmem %s9, %s344
      %vm347 = vcmask 261120
      %348 = vst.msk [vmem:[#allocation2] sm:$0xff] %vm347, 0.0
      %349 = vst.msk [vmem:[#allocation2 + $0x8] sm:$0xff] %vm347, 0.0
      %vm350 = vcmask 259072
      %351 = vst.msk [vmem:[#allocation2 + $0x10] sm:$0x3f] %vm350, 0.0
      %v352 = vld [vmem:[%s335] sm:$0xff]
      %v353 = vld [vmem:[%s335 + $0x8] sm:$0xff]
      %v354 = vmax.f32 %v352, 0.0
      %v355 = vmax.f32 %v353, 0.0
      %356 = vst.msk [vmem:[#allocation2 + $0x3] sm:$0xff] %vm347, %v354
      %357 = vst.msk [vmem:[#allocation2 + $0xb] sm:$0xff] %vm347, %v355
      %v358 = vld [vmem:[#allocation2] sm:$0xff]
      %v359 = vld [vmem:[#allocation2 + $0x8] sm:$0xff]
      %v360 = vld [vmem:[#allocation2 + $0x3] sm:$0xff]
      %v361 = vld [vmem:[#allocation2 + $0xb] sm:$0xff]
      %v362 = vld [vmem:[#allocation2 + $0x6] sm:$0xff]
      %v363 = vld [vmem:[#allocation2 + $0xe] sm:$0xff]
      %366 = vrot.lane.b32.xlu0 %v360, 32
      %v367 = vpop.permute.xlu0 %366
      %368 = vrot.lane.b32.xlu0 %v361, 32
      %v369 = vpop.permute.xlu0 %368
      %374 = vrot.lane.b32.xlu0 %v362, 64
      %v375 = vpop.permute.xlu0 %374
      %376 = vrot.lane.b32.xlu0 %v363, 64
      %v377 = vpop.permute.xlu0 %376
      %v380 = vsel %vm347, %v358, %v367
      %v381 = vsel %vm347, %v359, %v369
      %vm382 = vcmask 523264
      %v383 = vsel %vm382, %v380, %v375
      %v384 = vsel %vm382, %v381, %v377
      %v385 = vpack.c.bf16 %v384, %v383
      %v386 = vld [vmem:[%s1] sm:$0xf]
      %v387 = vld [vmem:[%s1 + $0x4] sm:$0xf]
      %v388 = vld [vmem:[%s1 + $0x8] sm:$0xf]
      %v389 = vld [vmem:[%s1 + $0xc] sm:$0xf]
      %v390 = vld [vmem:[%s1 + $0x10] sm:$0xf]
      %v391 = vld [vmem:[%s1 + $0x14] sm:$0xf]
      %v392 = vld [vmem:[%s1 + $0x18] sm:$0xf]
      %v393 = vld [vmem:[%s1 + $0x1c] sm:$0xf]
      %v394 = vld [vmem:[%s1 + $0x20] sm:$0xf]
      %v395 = vld [vmem:[%s1 + $0x24] sm:$0xf]
      %v396 = vld [vmem:[%s1 + $0x28] sm:$0xf]
      %v397 = vld [vmem:[%s1 + $0x2c] sm:$0xf]
      %v398 = vld [vmem:[%s2] sm:$0x1]
      %v400 = vlaneseq
      %v401 = vshrl.u32 %v400, 7
      %v402 = vsub.s32 0, %v401
      %v403 = vrot.slane %v398, %v402
      %v417 = vunpack.c.l.b16 %v386
      %v418 = vunpack.c.l.b16 %v387
      %v419 = vunpack.c.l.b16 %v388
      %v420 = vunpack.c.l.b16 %v389
      %v421 = vunpack.c.l.b16 %v390
      %v422 = vunpack.c.l.b16 %v391
      %v423 = vunpack.c.l.b16 %v392
      %v424 = vunpack.c.l.b16 %v393
      %v425 = vunpack.c.l.b16 %v394
      %v426 = vunpack.c.l.b16 %v395
      %v427 = vunpack.c.l.b16 %v396
      %v428 = vunpack.c.l.b16 %v397
      %v429 = vpack.c.b16 %v418, %v417
      %v430 = vpack.c.b16 %v420, %v419
      %v431 = vpack.c.b16 %v422, %v421
      %v432 = vpack.c.b16 %v424, %v423
      %v433 = vpack.c.b16 %v426, %v425
      %v434 = vpack.c.b16 %v428, %v427
      %vm441 = vcmask 785408
      %v443 = vsel %vm441, %v385, 0
      %445 = vmatprep.subr.bf16.mxu0 0
      %446 = vmatpush1.bf16.msra.mxu0 %v429
      %447 = vmatprep.subr.bf16.mxu0 0
      %448 = vmatpush1.bf16.msra.mxu0 %v430
      %449 = vmatprep.subr.bf16.mxu0 0
      %450 = vmatpush1.bf16.msra.mxu0 %v431
      %451 = vmatprep.subr.bf16.mxu0 0
      %452 = vmatpush1.bf16.msra.mxu0 %v432
      %453 = vmatprep.subr.bf16.mxu0 0
      %454 = vmatpush1.bf16.msra.mxu0 %v433
      %455 = vmatprep.subr.bf16.mxu0 0
      %456 = vmatpush1.bf16.msra.mxu0 %v434
      %457 = vmatprep.subr.bf16.mxu0 0
      %458 = vmatpush1.bf16.msra.mxu0 0
      %459 = vmatprep.subr.bf16.mxu0 0
      %460 = vmatpush1.bf16.msra.mxu0 0
      %461 = vmatprep.subr.bf16.mxu0 0
      %462 = vmatpush1.bf16.msra.mxu0 0
      %463 = vmatprep.subr.bf16.mxu0 0
      %464 = vmatpush1.bf16.msra.mxu0 0
      %465 = vmatprep.subr.bf16.mxu0 0
      %466 = vmatpush1.bf16.msra.mxu0 0
      %467 = vmatprep.subr.bf16.mxu0 0
      %468 = vmatpush1.bf16.msra.mxu0 0
      %469 = vmatprep.subr.bf16.mxu0 0
      %470 = vmatpush1.bf16.msra.mxu0 0
      %471 = vmatprep.subr.bf16.mxu0 0
      %472 = vmatpush1.bf16.msra.mxu0 0
      %473 = vmatprep.subr.bf16.mxu0 0
      %474 = vmatpush1.bf16.msra.mxu0 0
      %475 = vmatprep.subr.bf16.mxu0 0
      %476 = vmatpush1.bf16.msra.mxu0 0
      %477 = vmatprep.mubr.bf16.mxu0 0
      %478 = vmatmul.mubr.bf16.gmra.mrb[0].mxu0 %v443
      %v479 = vpop.f32.mrb[0].mxu0
      %v480 = vadd.f32 %v403, %v479
      %v481 = vpop.f32.mrb[0].mxu0
      %v482 = vpop.f32.mrb[0].mxu0
      %v483 = vadd.f32 %v403, %v482
      %v484 = vpop.f32.mrb[0].mxu0
      %485 = vdwg.mxu0
      %v486 = vmax.f32 %v480, 0.0
      %v487 = vmax.f32 %v483, 0.0
      %v488 = vpack.c.bf16 %v487, %v486
      %v489 = vld [vmem:[%s3] sm:$0xf]
      %v490 = vld [vmem:[%s3 + $0x4] sm:$0xf]
      %v491 = vld [vmem:[%s3 + $0x8] sm:$0xf]
      %v492 = vld [vmem:[%s3 + $0xc] sm:$0xf]
      %v497 = vunpack.c.l.b16 %v489
      %v498 = vunpack.c.l.b16 %v490
      %v499 = vunpack.c.l.b16 %v491
      %v500 = vunpack.c.l.b16 %v492
      %v501 = vpack.c.b16 %v498, %v497
      %v502 = vpack.c.b16 %v500, %v499
      %v506 = vsel %vm347, %v488, 0
      %508 = vmatprep.subr.bf16.mxu0 0
      %509 = vmatpush1.bf16.msra.mxu0 %v501
      %510 = vmatprep.subr.bf16.mxu0 0
      %511 = vmatpush1.bf16.msra.mxu0 %v502
      %512 = vmatprep.subr.bf16.mxu0 0
      %513 = vmatpush1.bf16.msra.mxu0 0
      %514 = vmatprep.subr.bf16.mxu0 0
      %515 = vmatpush1.bf16.msra.mxu0 0
      %516 = vmatprep.subr.bf16.mxu0 0
      %517 = vmatpush1.bf16.msra.mxu0 0
      %518 = vmatprep.subr.bf16.mxu0 0
      %519 = vmatpush1.bf16.msra.mxu0 0
      %520 = vmatprep.subr.bf16.mxu0 0
      %521 = vmatpush1.bf16.msra.mxu0 0
      %522 = vmatprep.subr.bf16.mxu0 0
      %523 = vmatpush1.bf16.msra.mxu0 0
      %524 = vmatprep.subr.bf16.mxu0 0
      %525 = vmatpush1.bf16.msra.mxu0 0
      %526 = vmatprep.subr.bf16.mxu0 0
      %527 = vmatpush1.bf16.msra.mxu0 0
      %528 = vmatprep.subr.bf16.mxu0 0
      %529 = vmatpush1.bf16.msra.mxu0 0
      %530 = vmatprep.subr.bf16.mxu0 0
      %531 = vmatpush1.bf16.msra.mxu0 0
      %532 = vmatprep.subr.bf16.mxu0 0
      %533 = vmatpush1.bf16.msra.mxu0 0
      %534 = vmatprep.subr.bf16.mxu0 0
      %535 = vmatpush1.bf16.msra.mxu0 0
      %536 = vmatprep.subr.bf16.mxu0 0
      %537 = vmatpush1.bf16.msra.mxu0 0
      %538 = vmatprep.subr.bf16.mxu0 0
      %539 = vmatpush1.bf16.msra.mxu0 0
      %540 = vmatprep.mubr.bf16.mxu0 0
      %541 = vmatmul.mubr.bf16.gmra.mrb[0].mxu0 %v506
      %v542 = vpop.f32.mrb[0].mxu0
      %v543 = vadd.f32 0.0, %v542
      %v544 = vpop.f32.mrb[0].mxu0
      %v545 = vpop.f32.mrb[0].mxu0
      %v546 = vadd.f32 0.0, %v545
      %v547 = vpop.f32.mrb[0].mxu0
      %548 = vdwg.mxu0
      %v549 = vadd.f32 %v352, %v543
      %v550 = vadd.f32 %v353, %v546
      %v551 = vld [vmem:[%s4] sm:$0x1]
      %v553 = vlaneseq
      %v554 = vshrl.u32 %v553, 7
      %v555 = vsub.s32 0, %v554
      %v556 = vrot.slane %v551, %v555
      %v558 = vadd.f32 %v549, %v556
      %v559 = vadd.f32 %v550, %v556
      %v560 = vmax.f32 %v558, 0.0
      %v561 = vmax.f32 %v559, 0.0
      %562 = vst.msk [vmem:[#allocation2 + $0x3] sm:$0xff] %vm347, %v560
      %563 = vst.msk [vmem:[#allocation2 + $0xb] sm:$0xff] %vm347, %v561
      %v564 = vld [vmem:[#allocation2 + $0x2] sm:$0xff]
      %v565 = vld [vmem:[#allocation2 + $0xa] sm:$0xff]
      %v566 = vld [vmem:[#allocation2 + $0x3] sm:$0xff]
      %v567 = vld [vmem:[#allocation2 + $0xb] sm:$0xff]
      %v568 = vld [vmem:[#allocation2 + $0x4] sm:$0xff]
      %v569 = vld [vmem:[#allocation2 + $0xc] sm:$0xff]
      %572 = vrot.lane.b32.xlu0 %v566, 32
      %v573 = vpop.permute.xlu0 %572
      %574 = vrot.lane.b32.xlu0 %v567, 32
      %v575 = vpop.permute.xlu0 %574
      %580 = vrot.lane.b32.xlu0 %v568, 64
      %v581 = vpop.permute.xlu0 %580
      %582 = vrot.lane.b32.xlu0 %v569, 64
      %v583 = vpop.permute.xlu0 %582
      %v586 = vsel %vm347, %v564, %v573
      %v587 = vsel %vm347, %v565, %v575
      %v588 = vsel %vm382, %v586, %v581
      %v589 = vsel %vm382, %v587, %v583
      %v590 = vpack.c.bf16 %v589, %v588
      %s591 = scalar_lea.vmem %s1, 48
      %v592 = vld [vmem:[%s591] sm:$0xf]
      %v593 = vld [vmem:[%s591 + $0x4] sm:$0xf]
      %v594 = vld [vmem:[%s591 + $0x8] sm:$0xf]
      %v595 = vld [vmem:[%s591 + $0xc] sm:$0xf]
      %v596 = vld [vmem:[%s591 + $0x10] sm:$0xf]
      %v597 = vld [vmem:[%s591 + $0x14] sm:$0xf]
      %v598 = vld [vmem:[%s591 + $0x18] sm:$0xf]
      %v599 = vld [vmem:[%s591 + $0x1c] sm:$0xf]
      %v600 = vld [vmem:[%s591 + $0x20] sm:$0xf]
      %v601 = vld [vmem:[%s591 + $0x24] sm:$0xf]
      %v602 = vld [vmem:[%s591 + $0x28] sm:$0xf]
      %v603 = vld [vmem:[%s591 + $0x2c] sm:$0xf]
      %s604 = scalar_lea.vmem %s2, 1
      %v605 = vld [vmem:[%s604] sm:$0x1]
      %v607 = vlaneseq
      %v608 = vshrl.u32 %v607, 7
      %v609 = vsub.s32 0, %v608
      %v610 = vrot.slane %v605, %v609
      %v624 = vunpack.c.l.b16 %v592
      %v625 = vunpack.c.l.b16 %v593
      %v626 = vunpack.c.l.b16 %v594
      %v627 = vunpack.c.l.b16 %v595
      %v628 = vunpack.c.l.b16 %v596
      %v629 = vunpack.c.l.b16 %v597
      %v630 = vunpack.c.l.b16 %v598
      %v631 = vunpack.c.l.b16 %v599
      %v632 = vunpack.c.l.b16 %v600
      %v633 = vunpack.c.l.b16 %v601
      %v634 = vunpack.c.l.b16 %v602
      %v635 = vunpack.c.l.b16 %v603
      %v636 = vpack.c.b16 %v625, %v624
      %v637 = vpack.c.b16 %v627, %v626
      %v638 = vpack.c.b16 %v629, %v628
      %v639 = vpack.c.b16 %v631, %v630
      %v640 = vpack.c.b16 %v633, %v632
      %v641 = vpack.c.b16 %v635, %v634
      %v649 = vsel %vm441, %v590, 0
      %651 = vmatprep.subr.bf16.mxu0 0
      %652 = vmatpush1.bf16.msra.mxu0 %v636
      %653 = vmatprep.subr.bf16.mxu0 0
      %654 = vmatpush1.bf16.msra.mxu0 %v637
      %655 = vmatprep.subr.bf16.mxu0 0
      %656 = vmatpush1.bf16.msra.mxu0 %v638
      %657 = vmatprep.subr.bf16.mxu0 0
      %658 = vmatpush1.bf16.msra.mxu0 %v639
      %659 = vmatprep.subr.bf16.mxu0 0
      %660 = vmatpush1.bf16.msra.mxu0 %v640
      %661 = vmatprep.subr.bf16.mxu0 0
      %662 = vmatpush1.bf16.msra.mxu0 %v641
      %663 = vmatprep.subr.bf16.mxu0 0
      %664 = vmatpush1.bf16.msra.mxu0 0
      %665 = vmatprep.subr.bf16.mxu0 0
      %666 = vmatpush1.bf16.msra.mxu0 0
      %667 = vmatprep.subr.bf16.mxu0 0
      %668 = vmatpush1.bf16.msra.mxu0 0
      %669 = vmatprep.subr.bf16.mxu0 0
      %670 = vmatpush1.bf16.msra.mxu0 0
      %671 = vmatprep.subr.bf16.mxu0 0
      %672 = vmatpush1.bf16.msra.mxu0 0
      %673 = vmatprep.subr.bf16.mxu0 0
      %674 = vmatpush1.bf16.msra.mxu0 0
      %675 = vmatprep.subr.bf16.mxu0 0
      %676 = vmatpush1.bf16.msra.mxu0 0
      %677 = vmatprep.subr.bf16.mxu0 0
      %678 = vmatpush1.bf16.msra.mxu0 0
      %679 = vmatprep.subr.bf16.mxu0 0
      %680 = vmatpush1.bf16.msra.mxu0 0
      %681 = vmatprep.subr.bf16.mxu0 0
      %682 = vmatpush1.bf16.msra.mxu0 0
      %683 = vmatprep.mubr.bf16.mxu0 0
      %684 = vmatmul.mubr.bf16.gmra.mrb[0].mxu0 %v649
      %v685 = vpop.f32.mrb[0].mxu0
      %v686 = vadd.f32 %v610, %v685
      %v687 = vpop.f32.mrb[0].mxu0
      %v688 = vpop.f32.mrb[0].mxu0
      %v689 = vadd.f32 %v610, %v688
      %v690 = vpop.f32.mrb[0].mxu0
      %691 = vdwg.mxu0
      %v692 = vmax.f32 %v686, 0.0
      %v693 = vmax.f32 %v689, 0.0
      %v694 = vpack.c.bf16 %v693, %v692
      %s695 = scalar_lea.vmem %s3, 16
      %v696 = vld [vmem:[%s695] sm:$0xf]
      %v697 = vld [vmem:[%s695 + $0x4] sm:$0xf]
      %v698 = vld [vmem:[%s695 + $0x8] sm:$0xf]
      %v699 = vld [vmem:[%s695 + $0xc] sm:$0xf]
      %v704 = vunpack.c.l.b16 %v696
      %v705 = vunpack.c.l.b16 %v697
      %v706 = vunpack.c.l.b16 %v698
      %v707 = vunpack.c.l.b16 %v699
      %v708 = vpack.c.b16 %v705, %v704
      %v709 = vpack.c.b16 %v707, %v706
      %v713 = vsel %vm347, %v694, 0
      %715 = vmatprep.subr.bf16.mxu0 0
      %716 = vmatpush1.bf16.msra.mxu0 %v708
      %717 = vmatprep.subr.bf16.mxu0 0
      %718 = vmatpush1.bf16.msra.mxu0 %v709
      %719 = vmatprep.subr.bf16.mxu0 0
      %720 = vmatpush1.bf16.msra.mxu0 0
      %721 = vmatprep.subr.bf16.mxu0 0
      %722 = vmatpush1.bf16.msra.mxu0 0
      %723 = vmatprep.subr.bf16.mxu0 0
      %724 = vmatpush1.bf16.msra.mxu0 0
      %725 = vmatprep.subr.bf16.mxu0 0
      %726 = vmatpush1.bf16.msra.mxu0 0
      %727 = vmatprep.subr.bf16.mxu0 0
      %728 = vmatpush1.bf16.msra.mxu0 0
      %729 = vmatprep.subr.bf16.mxu0 0
      %730 = vmatpush1.bf16.msra.mxu0 0
      %731 = vmatprep.subr.bf16.mxu0 0
      %732 = vmatpush1.bf16.msra.mxu0 0
      %733 = vmatprep.subr.bf16.mxu0 0
      %734 = vmatpush1.bf16.msra.mxu0 0
      %735 = vmatprep.subr.bf16.mxu0 0
      %736 = vmatpush1.bf16.msra.mxu0 0
      %737 = vmatprep.subr.bf16.mxu0 0
      %738 = vmatpush1.bf16.msra.mxu0 0
      %739 = vmatprep.subr.bf16.mxu0 0
      %740 = vmatpush1.bf16.msra.mxu0 0
      %741 = vmatprep.subr.bf16.mxu0 0
      %742 = vmatpush1.bf16.msra.mxu0 0
      %743 = vmatprep.subr.bf16.mxu0 0
      %744 = vmatpush1.bf16.msra.mxu0 0
      %745 = vmatprep.subr.bf16.mxu0 0
      %746 = vmatpush1.bf16.msra.mxu0 0
      %747 = vmatprep.mubr.bf16.mxu0 0
      %748 = vmatmul.mubr.bf16.gmra.mrb[0].mxu0 %v713
      %v749 = vpop.f32.mrb[0].mxu0
      %v750 = vadd.f32 0.0, %v749
      %v751 = vpop.f32.mrb[0].mxu0
      %v752 = vpop.f32.mrb[0].mxu0
      %v753 = vadd.f32 0.0, %v752
      %v754 = vpop.f32.mrb[0].mxu0
      %755 = vdwg.mxu0
      %v756 = vadd.f32 %v558, %v750
      %v757 = vadd.f32 %v559, %v753
      %s758 = scalar_lea.vmem %s4, 1
      %v759 = vld [vmem:[%s758] sm:$0x1]
      %v761 = vlaneseq
      %v762 = vshrl.u32 %v761, 7
      %v763 = vsub.s32 0, %v762
      %v764 = vrot.slane %v759, %v763
      %v766 = vadd.f32 %v756, %v764
      %v767 = vadd.f32 %v757, %v764
      %768 = vst.msk [vmem:[#allocation2 + $0x3] sm:$0xff] %vm347, %v766
      %769 = vst.msk [vmem:[#allocation2 + $0xb] sm:$0xff] %vm347, %v767
      %v770 = vld [vmem:[#allocation2 + $0x2] sm:$0xff]
      %v771 = vld [vmem:[#allocation2 + $0xa] sm:$0xff]
      %v772 = vld [vmem:[#allocation2 + $0x4] sm:$0xff]
      %v773 = vld [vmem:[#allocation2 + $0xc] sm:$0xff]
      %v774 = vld [vmem:[%s7] sm:$0x1]
      %777 = vrot.lane.b32.xlu0 %v766, 32
      %v778 = vpop.permute.xlu0 %777
      %779 = vrot.lane.b32.xlu0 %v767, 32
      %v780 = vpop.permute.xlu0 %779
      %v783 = vsel %vm347, %v770, %v778
      %v784 = vsel %vm347, %v771, %v780
      %v785 = vpack.c.bf16 %v784, %v783
      %v786 = vld [vmem:[%s5] sm:$0xf]
      %v787 = vld [vmem:[%s5 + $0x4] sm:$0xf]
      %v788 = vld [vmem:[%s5 + $0x8] sm:$0xf]
      %v789 = vld [vmem:[%s5 + $0xc] sm:$0xf]
      %v790 = vld [vmem:[%s5 + $0x10] sm:$0xf]
      %v791 = vld [vmem:[%s5 + $0x14] sm:$0xf]
      %v792 = vld [vmem:[%s5 + $0x18] sm:$0xf]
      %v793 = vld [vmem:[%s5 + $0x1c] sm:$0xf]
      %v795 = vlaneseq
      %v796 = vshrl.u32 %v795, 7
      %v797 = vsub.s32 0, %v796
      %v798 = vrot.slane %v774, %v797
      %v808 = vunpack.c.l.b16 %v786
      %v809 = vunpack.c.l.b16 %v787
      %v810 = vunpack.c.l.b16 %v788
      %v811 = vunpack.c.l.b16 %v789
      %v812 = vunpack.c.l.b16 %v790
      %v813 = vunpack.c.l.b16 %v791
      %v814 = vunpack.c.l.b16 %v792
      %v815 = vunpack.c.l.b16 %v793
      %v816 = vpack.c.b16 %v809, %v808
      %v817 = vpack.c.b16 %v811, %v810
      %v818 = vpack.c.b16 %v813, %v812
      %v819 = vpack.c.b16 %v815, %v814
      %v825 = vsel %vm382, %v785, 0
      %827 = vmatprep.subr.bf16.mxu0 0
      %828 = vmatpush1.bf16.msra.mxu0 %v816
      %829 = vmatprep.subr.bf16.mxu0 0
      %830 = vmatpush1.bf16.msra.mxu0 %v817
      %831 = vmatprep.subr.bf16.mxu0 0
      %832 = vmatpush1.bf16.msra.mxu0 %v818
      %833 = vmatprep.subr.bf16.mxu0 0
      %834 = vmatpush1.bf16.msra.mxu0 %v819
      %835 = vmatprep.subr.bf16.mxu0 0
      %836 = vmatpush1.bf16.msra.mxu0 0
      %837 = vmatprep.subr.bf16.mxu0 0
      %838 = vmatpush1.bf16.msra.mxu0 0
      %839 = vmatprep.subr.bf16.mxu0 0
      %840 = vmatpush1.bf16.msra.mxu0 0
      %841 = vmatprep.subr.bf16.mxu0 0
      %842 = vmatpush1.bf16.msra.mxu0 0
      %843 = vmatprep.subr.bf16.mxu0 0
      %844 = vmatpush1.bf16.msra.mxu0 0
      %845 = vmatprep.subr.bf16.mxu0 0
      %846 = vmatpush1.bf16.msra.mxu0 0
      %847 = vmatprep.subr.bf16.mxu0 0
      %848 = vmatpush1.bf16.msra.mxu0 0
      %849 = vmatprep.subr.bf16.mxu0 0
      %850 = vmatpush1.bf16.msra.mxu0 0
      %851 = vmatprep.subr.bf16.mxu0 0
      %852 = vmatpush1.bf16.msra.mxu0 0
      %853 = vmatprep.subr.bf16.mxu0 0
      %854 = vmatpush1.bf16.msra.mxu0 0
      %855 = vmatprep.subr.bf16.mxu0 0
      %856 = vmatpush1.bf16.msra.mxu0 0
      %857 = vmatprep.subr.bf16.mxu0 0
      %858 = vmatpush1.bf16.msra.mxu0 0
      %859 = vmatprep.mubr.bf16.mxu0 0
      %860 = vmatmul.mubr.bf16.gmra.mrb[0].mxu0 %v825
      %v861 = vpop.f32.mrb[0].mxu0
      %v862 = vadd.f32 %v798, %v861
      %v863 = vpop.f32.mrb[0].mxu0
      %v864 = vpop.f32.mrb[0].mxu0
      %v865 = vadd.f32 %v798, %v864
      %v866 = vpop.f32.mrb[0].mxu0
      %867 = vdwg.mxu0
      %870 = vrot.lane.b32.xlu0 %v772, 32
      %v871 = vpop.permute.xlu0 %870
      %872 = vrot.lane.b32.xlu0 %v773, 32
      %v873 = vpop.permute.xlu0 %872
      %v876 = vsel %vm347, %v766, %v871
      %v877 = vsel %vm347, %v767, %v873
      %v878 = vpack.c.bf16 %v877, %v876
      %v879 = vld [vmem:[%s6] sm:$0xf]
      %v880 = vld [vmem:[%s6 + $0x4] sm:$0xf]
      %v881 = vld [vmem:[%s6 + $0x8] sm:$0xf]
      %v882 = vld [vmem:[%s6 + $0xc] sm:$0xf]
      %v883 = vld [vmem:[%s6 + $0x10] sm:$0xf]
      %v884 = vld [vmem:[%s6 + $0x14] sm:$0xf]
      %v885 = vld [vmem:[%s6 + $0x18] sm:$0xf]
      %v886 = vld [vmem:[%s6 + $0x1c] sm:$0xf]
      %v895 = vunpack.c.l.b16 %v879
      %v896 = vunpack.c.l.b16 %v880
      %v897 = vunpack.c.l.b16 %v881
      %v898 = vunpack.c.l.b16 %v882
      %v899 = vunpack.c.l.b16 %v883
      %v900 = vunpack.c.l.b16 %v884
      %v901 = vunpack.c.l.b16 %v885
      %v902 = vunpack.c.l.b16 %v886
      %v903 = vpack.c.b16 %v896, %v895
      %v904 = vpack.c.b16 %v898, %v897
      %v905 = vpack.c.b16 %v900, %v899
      %v906 = vpack.c.b16 %v902, %v901
      %v912 = vsel %vm382, %v878, 0
      %914 = vmatprep.subr.bf16.mxu0 0
      %915 = vmatpush1.bf16.msra.mxu0 %v903
      %916 = vmatprep.subr.bf16.mxu0 0
      %917 = vmatpush1.bf16.msra.mxu0 %v904
      %918 = vmatprep.subr.bf16.mxu0 0
      %919 = vmatpush1.bf16.msra.mxu0 %v905
      %920 = vmatprep.subr.bf16.mxu0 0
      %921 = vmatpush1.bf16.msra.mxu0 %v906
      %922 = vmatprep.subr.bf16.mxu0 0
      %923 = vmatpush1.bf16.msra.mxu0 0
      %924 = vmatprep.subr.bf16.mxu0 0
      %925 = vmatpush1.bf16.msra.mxu0 0
      %926 = vmatprep.subr.bf16.mxu0 0
      %927 = vmatpush1.bf16.msra.mxu0 0
      %928 = vmatprep.subr.bf16.mxu0 0
      %929 = vmatpush1.bf16.msra.mxu0 0
      %930 = vmatprep.subr.bf16.mxu0 0
      %931 = vmatpush1.bf16.msra.mxu0 0
      %932 = vmatprep.subr.bf16.mxu0 0
      %933 = vmatpush1.bf16.msra.mxu0 0
      %934 = vmatprep.subr.bf16.mxu0 0
      %935 = vmatpush1.bf16.msra.mxu0 0
      %936 = vmatprep.subr.bf16.mxu0 0
      %937 = vmatpush1.bf16.msra.mxu0 0
      %938 = vmatprep.subr.bf16.mxu0 0
      %939 = vmatpush1.bf16.msra.mxu0 0
      %940 = vmatprep.subr.bf16.mxu0 0
      %941 = vmatpush1.bf16.msra.mxu0 0
      %942 = vmatprep.subr.bf16.mxu0 0
      %943 = vmatpush1.bf16.msra.mxu0 0
      %944 = vmatprep.subr.bf16.mxu0 0
      %945 = vmatpush1.bf16.msra.mxu0 0
      %946 = vmatprep.mubr.bf16.mxu0 0
      %947 = vmatmul.mubr.bf16.gmra.mrb[0].mxu0 %v912
      %v948 = vpop.f32.mrb[0].mxu0
      %v949 = vadd.f32 %v798, %v948
      %v950 = vpop.f32.mrb[0].mxu0
      %v951 = vpop.f32.mrb[0].mxu0
      %v952 = vadd.f32 %v798, %v951
      %v953 = vpop.f32.mrb[0].mxu0
      %954 = vdwg.mxu0
      %955 = vst.msk [vmem:[%s340] sm:$0xff] %vm347, %v862
      %956 = vst.msk [vmem:[%s340 + $0x8] sm:$0xff] %vm347, %v865
      %957 = vst.msk [vmem:[%s345] sm:$0xff] %vm347, %v949
      %958 = vst.msk [vmem:[%s345 + $0x8] sm:$0xff] %vm347, %v952
      %p959 = scmp.lt.s32.totalorder %s21, 1
      %s960 = scalar_select %p959, %s21, 1
      %s961 = smul.addr %s960, 2
      %s962 = smul.addr %s961, 8
      %s963 = scalar_lea.vmem %s8, %s962
      %p964 = scmp.lt.s32.totalorder %s21, 1
      %s965 = scalar_select %p964, %s21, 1
      %s966 = smul.addr %s965, 2
      %s967 = smul.addr %s966, 8
      %s968 = scalar_lea.vmem %s9, %s967
      // Predicated region
      $region53: #{decoder_forward_pallas.6} parent=51 // pred_check
        %p969 = pneg %p212
      $region54: #{decoder_forward_pallas.6} parent=51 // pred_check_branch
        %971 = sbr.rel (%p969) target = $region56
      $region55: #{decoder_forward_pallas.6} parent=51 // pred_region
        _
      $region56: #{decoder_forward_pallas.6} parent=51 // pred_fallthru
        _
      // Predicated region
      $region57: #{decoder_forward_pallas.6} parent=51 // pred_check
        %p972 = pneg %p238
      $region58: #{decoder_forward_pallas.6} parent=51 // pred_check_branch
        %974 = sbr.rel (%p972) target = $region60
      $region59: #{decoder_forward_pallas.6} parent=51 // pred_region
        _
      $region60: #{decoder_forward_pallas.6} parent=51 // pred_fallthru
        _
    $region52: #{decoder_forward_pallas.6} parent=5 // pred_fallthru
      _
    %p975 = scmp.le.s32.totalorder 2, %s16
    // Predicated region
    $region61: #{decoder_forward_pallas.6} parent=5 // pred_check
      %p976 = pneg %p975
    $region62: #{decoder_forward_pallas.6} parent=5 // pred_check_branch
      %978 = sbr.rel (%p976) target = $region64
    $region63: #{decoder_forward_pallas.6} parent=5 // pred_region
      %s979 = ssub.s32 %s16, 2
      // Predicated region
      $region65: #{decoder_forward_pallas.6} parent=63 // pred_check
        %p980 = pneg %p218
      $region66: #{decoder_forward_pallas.6} parent=63 // pred_check_branch
        %982 = sbr.rel (%p980) target = $region68
      $region67: #{decoder_forward_pallas.6} parent=63 // pred_region
        %p983 = scmp.lt.s32.totalorder %s22, 1
        %s984 = scalar_select %p983, %s22, 1
        %s985 = smul.addr %s984, 2
        %s986 = smul.addr %s985, 8
        %s987 = scalar_lea.vmem %s8, %s986
      $region68: #{decoder_forward_pallas.6} parent=63 // pred_fallthru
        _
      // Predicated region
      $region69: #{decoder_forward_pallas.6} parent=63 // pred_check
        %p988 = pneg %p244
      $region70: #{decoder_forward_pallas.6} parent=63 // pred_check_branch
        %990 = sbr.rel (%p988) target = $region72
      $region71: #{decoder_forward_pallas.6} parent=63 // pred_region
        %p991 = scmp.lt.s32.totalorder %s22, 1
        %s992 = scalar_select %p991, %s22, 1
        %s993 = smul.addr %s992, 2
        %s994 = smul.addr %s993, 8
        %s995 = scalar_lea.vmem %s9, %s994
      $region72: #{decoder_forward_pallas.6} parent=63 // pred_fallthru
        _
    $region64: #{decoder_forward_pallas.6} parent=5 // pred_fallthru
      _
  $region6: #{decoder_forward_pallas.6} parent=0 // loop_footer
    %s20 = sadd.s32 1, %s16
  $region7: #{decoder_forward_pallas.6} parent=0 // loop_footer_branch
    %15 = sbr.rel target = $region3
  $region8: #{decoder_forward_pallas.6} parent=0 // loop_exit
    _

// kernel: decoder_forward_pallas.7
$region0: #{decoder_forward_pallas.7}
  #allocation0 [shape = 'u32[]', space=smem, size = 0x4, offset = 0x4, fixed_abs, tag = 'smem constant byte address 0x4 - core index']
  #allocation1 [shape = 'u32[144,128]{1,0:T(1,128)}', space=vmem, size = 0x12000, scoped, tag = 'internal scratch']
  #allocation2 [shape = 'f32[34,32]{1,0:T(8,128)}', space=vmem, size = 0x5000, scoped, tag = 'scratch operand']
  %s0 = inlined_call_operand.vmem [shape: f32[2,32,32], index: 0, kind: input, shape index: {}]
  %s1 = inlined_call_operand.vmem [shape: bf16[96,32], index: 1, kind: input, shape index: {}]
  %s2 = inlined_call_operand.vmem [shape: f32[1,32], index: 2, kind: input, shape index: {}]
  %s3 = inlined_call_operand.vmem [shape: bf16[96,3], index: 3, kind: input, shape index: {}]
  %s4 = inlined_call_operand.vmem [shape: f32[1,3], index: 4, kind: input, shape index: {}]
  %s5 = inlined_call_operand.vmem [shape: f32[2,32,3], index: 5, kind: output, shape index: {}]
  %s6 = sld [smem:[#allocation0]]
  $region53: #{decoder_forward_pallas.7} parent=0
    _
  %s8 = ssub.s32 1, %s6
  %s9 = scalar_select 0, %s8, %s6
  loop: start=0, step=1, limit=4
  $region2: #{decoder_forward_pallas.7} parent=0 // loop_pre_header
    _
  $region3: #{decoder_forward_pallas.7} parent=0 // loop_header
    %s11 = sphi 0, %s15
    %p12 = scmp.ge.s32.totalorder %s11, 4
    %s21 = sphi 0, %s23
    %s24 = sphi 0, %s21
    %s25 = sphi 0, %s24
    %s41 = sphi 0, %s25
    %s45 = sphi 0, %s45
    %s47 = sphi 0, %s45
    %s48 = sphi 0, %s47
    %s62 = sphi 0, %s48
    %s66 = sphi 0, %s66
    %s68 = sphi 0, %s66
    %s69 = sphi 0, %s68
    %s83 = sphi 0, %s69
    %s87 = sphi 0, %s87
    %s89 = sphi 0, %s87
    %s90 = sphi 0, %s89
    %s104 = sphi 0, %s90
    %s108 = sphi 0, %s108
    %s110 = sphi 0, %s108
    %s111 = sphi 0, %s110
    %s125 = sphi 0, %s111
    %s131 = sphi 0, %s133
    %s134 = sphi 0, %s131
    %s135 = sphi 0, %s134
    %s151 = sphi 0, %s135
  $region4: #{decoder_forward_pallas.7} parent=0 // loop_header_branch
    %14 = sbr.rel (%p12) target = $region8
  $region5: #{decoder_forward_pallas.7} parent=0 // loop_body
    %s16 = ssub.s32 %s11, 1
    %s17 = ssub.s32 %s11, 2
    %s18 = sadd.s32 %s11, 1
    %s19 = ssub.s32 %s11, %s18
    %p20 = scmp.eq.s32.totalorder %s19, 0
    %s22 = sadd.s32 %s21, 1
    %s23 = scalar_select %p20, %s21, %s22
    %p26 = pneg %p20
    %p27 = scmp.eq.s32.totalorder %s11, 1
    %p28 = por %p26, %p27
    %p29 = scmp.ne.s32.totalorder %s21, %s24
    %p30 = scmp.eq.s32.totalorder %s11, 0
    %p31 = por %p29, %p30
    %p32 = scmp.ne.s32.totalorder %s21, %s24
    %p33 = scmp.eq.s32.totalorder %s16, 1
    %p34 = por %p32, %p33
    %p35 = scmp.ne.s32.totalorder %s24, %s25
    %p36 = scmp.eq.s32.totalorder %s16, 0
    %p37 = por %p35, %p36
    %p38 = scmp.ne.s32.totalorder %s24, %s25
    %p39 = scmp.eq.s32.totalorder %s17, 1
    %p40 = por %p38, %p39
    %p42 = scmp.ne.s32.totalorder %s25, %s41
    %p43 = scmp.eq.s32.totalorder %s17, 0
    %p44 = por %p42, %p43
    %s46 = sadd.s32 %s45, 1
    %p49 = scmp.eq.s32.totalorder %s11, 1
    %p50 = scmp.ne.s32.totalorder %s45, %s47
    %p51 = scmp.eq.s32.totalorder %s11, 0
    %p52 = por %p50, %p51
    %p53 = scmp.ne.s32.totalorder %s45, %s47
    %p54 = scmp.eq.s32.totalorder %s16, 1
    %p55 = por %p53, %p54
    %p56 = scmp.ne.s32.totalorder %s47, %s48
    %p57 = scmp.eq.s32.totalorder %s16, 0
    %p58 = por %p56, %p57
    %p59 = scmp.ne.s32.totalorder %s47, %s48
    %p60 = scmp.eq.s32.totalorder %s17, 1
    %p61 = por %p59, %p60
    %p63 = scmp.ne.s32.totalorder %s48, %s62
    %p64 = scmp.eq.s32.totalorder %s17, 0
    %p65 = por %p63, %p64
    %s67 = sadd.s32 %s66, 1
    %p70 = scmp.eq.s32.totalorder %s11, 1
    %p71 = scmp.ne.s32.totalorder %s66, %s68
    %p72 = scmp.eq.s32.totalorder %s11, 0
    %p73 = por %p71, %p72
    %p74 = scmp.ne.s32.totalorder %s66, %s68
    %p75 = scmp.eq.s32.totalorder %s16, 1
    %p76 = por %p74, %p75
    %p77 = scmp.ne.s32.totalorder %s68, %s69
    %p78 = scmp.eq.s32.totalorder %s16, 0
    %p79 = por %p77, %p78
    %p80 = scmp.ne.s32.totalorder %s68, %s69
    %p81 = scmp.eq.s32.totalorder %s17, 1
    %p82 = por %p80, %p81
    %p84 = scmp.ne.s32.totalorder %s69, %s83
    %p85 = scmp.eq.s32.totalorder %s17, 0
    %p86 = por %p84, %p85
    %s88 = sadd.s32 %s87, 1
    %p91 = scmp.eq.s32.totalorder %s11, 1
    %p92 = scmp.ne.s32.totalorder %s87, %s89
    %p93 = scmp.eq.s32.totalorder %s11, 0
    %p94 = por %p92, %p93
    %p95 = scmp.ne.s32.totalorder %s87, %s89
    %p96 = scmp.eq.s32.totalorder %s16, 1
    %p97 = por %p95, %p96
    %p98 = scmp.ne.s32.totalorder %s89, %s90
    %p99 = scmp.eq.s32.totalorder %s16, 0
    %p100 = por %p98, %p99
    %p101 = scmp.ne.s32.totalorder %s89, %s90
    %p102 = scmp.eq.s32.totalorder %s17, 1
    %p103 = por %p101, %p102
    %p105 = scmp.ne.s32.totalorder %s90, %s104
    %p106 = scmp.eq.s32.totalorder %s17, 0
    %p107 = por %p105, %p106
    %s109 = sadd.s32 %s108, 1
    %p112 = scmp.eq.s32.totalorder %s11, 1
    %p113 = scmp.ne.s32.totalorder %s108, %s110
    %p114 = scmp.eq.s32.totalorder %s11, 0
    %p115 = por %p113, %p114
    %p116 = scmp.ne.s32.totalorder %s108, %s110
    %p117 = scmp.eq.s32.totalorder %s16, 1
    %p118 = por %p116, %p117
    %p119 = scmp.ne.s32.totalorder %s110, %s111
    %p120 = scmp.eq.s32.totalorder %s16, 0
    %p121 = por %p119, %p120
    %p122 = scmp.ne.s32.totalorder %s110, %s111
    %p123 = scmp.eq.s32.totalorder %s17, 1
    %p124 = por %p122, %p123
    %p126 = scmp.ne.s32.totalorder %s111, %s125
    %p127 = scmp.eq.s32.totalorder %s17, 0
    %p128 = por %p126, %p127
    %s129 = ssub.s32 %s11, %s18
    %p130 = scmp.eq.s32.totalorder %s129, 0
    %s132 = sadd.s32 %s131, 1
    %s133 = scalar_select %p130, %s131, %s132
    %p136 = pneg %p130
    %p137 = scmp.eq.s32.totalorder %s11, 1
    %p138 = por %p136, %p137
    %p139 = scmp.ne.s32.totalorder %s131, %s134
    %p140 = scmp.eq.s32.totalorder %s11, 0
    %p141 = por %p139, %p140
    %p142 = scmp.ne.s32.totalorder %s131, %s134
    %p143 = scmp.eq.s32.totalorder %s16, 1
    %p144 = por %p142, %p143
    %p145 = scmp.ne.s32.totalorder %s134, %s135
    %p146 = scmp.eq.s32.totalorder %s16, 0
    %p147 = por %p145, %p146
    %p148 = scmp.ne.s32.totalorder %s134, %s135
    %p149 = scmp.eq.s32.totalorder %s17, 1
    %p150 = por %p148, %p149
    %p152 = scmp.ne.s32.totalorder %s135, %s151
    %p153 = scmp.eq.s32.totalorder %s17, 0
    %p154 = por %p152, %p153
    %p155 = scmp.le.s32.totalorder 1, %s11
    %p156 = scmp.lt.s32.totalorder %s11, 3
    %p157 = pnand %p155, %p156
    %p158 = pneg %p157
    // Predicated region
    $region9: #{decoder_forward_pallas.7} parent=5 // pred_check
      _
    $region10: #{decoder_forward_pallas.7} parent=5 // pred_check_branch
      %160 = sbr.rel (%p157) target = $region12
    $region11: #{decoder_forward_pallas.7} parent=5 // pred_region
      %s161 = ssub.s32 %s11, 1
      // Predicated region
      $region13: #{decoder_forward_pallas.7} parent=11 // pred_check
        %p162 = pneg %p58
      $region14: #{decoder_forward_pallas.7} parent=11 // pred_check_branch
        %164 = sbr.rel (%p162) target = $region16
      $region15: #{decoder_forward_pallas.7} parent=11 // pred_region
        _
      $region16: #{decoder_forward_pallas.7} parent=11 // pred_fallthru
        _
      // Predicated region
      $region17: #{decoder_forward_pallas.7} parent=11 // pred_check
        %p165 = pneg %p79
      $region18: #{decoder_forward_pallas.7} parent=11 // pred_check_branch
        %167 = sbr.rel (%p165) target = $region20
      $region19: #{decoder_forward_pallas.7} parent=11 // pred_region
        _
      $region20: #{decoder_forward_pallas.7} parent=11 // pred_fallthru
        _
      // Predicated region
      $region21: #{decoder_forward_pallas.7} parent=11 // pred_check
        %p168 = pneg %p100
      $region22: #{decoder_forward_pallas.7} parent=11 // pred_check_branch
        %170 = sbr.rel (%p168) target = $region24
      $region23: #{decoder_forward_pallas.7} parent=11 // pred_region
        _
      $region24: #{decoder_forward_pallas.7} parent=11 // pred_fallthru
        _
      // Predicated region
      $region25: #{decoder_forward_pallas.7} parent=11 // pred_check
        %p171 = pneg %p121
      $region26: #{decoder_forward_pallas.7} parent=11 // pred_check_branch
        %173 = sbr.rel (%p171) target = $region28
      $region27: #{decoder_forward_pallas.7} parent=11 // pred_region
        _
      $region28: #{decoder_forward_pallas.7} parent=11 // pred_fallthru
        _
    $region12: #{decoder_forward_pallas.7} parent=5 // pred_fallthru
      _
    %p174 = scmp.lt.s32.totalorder %s11, 2
    // Predicated region
    $region29: #{decoder_forward_pallas.7} parent=5 // pred_check
      %p175 = pneg %p174
    $region30: #{decoder_forward_pallas.7} parent=5 // pred_check_branch
      %177 = sbr.rel (%p175) target = $region32
    $region31: #{decoder_forward_pallas.7} parent=5 // pred_region
      // Predicated region
      $region33: #{decoder_forward_pallas.7} parent=31 // pred_check
        %p178 = pneg %p31
      $region34: #{decoder_forward_pallas.7} parent=31 // pred_check_branch
        %180 = sbr.rel (%p178) target = $region36
      $region35: #{decoder_forward_pallas.7} parent=31 // pred_region
        %p181 = scmp.lt.s32.totalorder %s11, 1
        %s182 = scalar_select %p181, %s11, 1
        %s183 = smul.addr %s182, 4
        %s184 = smul.addr %s183, 8
        %s185 = scalar_lea.vmem %s0, %s184
      $region36: #{decoder_forward_pallas.7} parent=31 // pred_fallthru
        _
    $region32: #{decoder_forward_pallas.7} parent=5 // pred_fallthru
      _
    %p186 = scmp.le.s32.totalorder 1, %s11
    %p187 = scmp.lt.s32.totalorder %s11, 3
    %p188 = pnand %p186, %p187
    %p189 = pneg %p188
    // Predicated region
    $region37: #{decoder_forward_pallas.7} parent=5 // pred_check
      _
    $region38: #{decoder_forward_pallas.7} parent=5 // pred_check_branch
      %191 = sbr.rel (%p188) target = $region40
    $region39: #{decoder_forward_pallas.7} parent=5 // pred_region
      %s192 = ssub.s32 %s11, 1
      %p193 = scmp.lt.s32.totalorder %s16, 1
      %s194 = scalar_select %p193, %s16, 1
      %s195 = smul.addr %s194, 4
      %s196 = smul.addr %s195, 8
      %s197 = scalar_lea.vmem %s0, %s196
      %p198 = pneg %p37
      %p199 = pneg %p34
      %p200 = pneg %p58
      %p201 = pneg %p55
      %p202 = pneg %p79
      %p203 = pneg %p76
      %p204 = pneg %p100
      %p205 = pneg %p97
      %p206 = pneg %p121
      %p207 = pneg %p118
      %p208 = pneg %p147
      %p209 = pneg %p144
      %p210 = scmp.lt.s32.totalorder %s16, 1
      %s211 = scalar_select %p210, %s16, 1
      %s212 = smul.addr %s211, 4
      %s213 = smul.addr %s212, 8
      %s214 = scalar_lea.vmem %s5, %s213
      %p215 = scmp.lt.s32.totalorder %s16, 1
      %s216 = scalar_select %p215, %s16, 1
      %s217 = smul.addr %s216, 4
      %s218 = smul.addr %s217, 8
      %s219 = scalar_lea.vmem %s0, %s218
      %p220 = scmp.lt.s32.totalorder %s16, 1
      %s221 = scalar_select %p220, %s16, 1
      %s222 = smul.addr %s221, 4
      %s223 = smul.addr %s222, 8
      %s224 = scalar_lea.vmem %s5, %s223
      %vm226 = vcmask 261120
      %227 = vst.msk [vmem:[#allocation2] sm:$0xff] %vm226, 0.0
      %228 = vst.msk [vmem:[#allocation2 + $0x8] sm:$0xff] %vm226, 0.0
      %229 = vst.msk [vmem:[#allocation2 + $0x10] sm:$0xff] %vm226, 0.0
      %230 = vst.msk [vmem:[#allocation2 + $0x18] sm:$0xff] %vm226, 0.0
      %vm231 = vcmask 254976
      %232 = vst.msk [vmem:[#allocation2 + $0x20] sm:$0x3] %vm231, 0.0
      %v233 = vld [vmem:[%s219] sm:$0xff]
      %v234 = vld [vmem:[%s219 + $0x8] sm:$0xff]
      %v235 = vld [vmem:[%s219 + $0x10] sm:$0xff]
      %v236 = vld [vmem:[%s219 + $0x18] sm:$0xff]
      %237 = vst.msk [vmem:[#allocation2 + $0x1] sm:$0xff] %vm226, %v233
      %238 = vst.msk [vmem:[#allocation2 + $0x9] sm:$0xff] %vm226, %v234
      %239 = vst.msk [vmem:[#allocation2 + $0x11] sm:$0xff] %vm226, %v235
      %240 = vst.msk [vmem:[#allocation2 + $0x19] sm:$0xff] %vm226, %v236
      %v241 = vld [vmem:[#allocation2] sm:$0xff]
      %v242 = vld [vmem:[#allocation2 + $0x8] sm:$0xff]
      %v243 = vld [vmem:[#allocation2 + $0x10] sm:$0xff]
      %v244 = vld [vmem:[#allocation2 + $0x18] sm:$0xff]
      %v245 = vld [vmem:[#allocation2 + $0x1] sm:$0xff]
      %v246 = vld [vmem:[#allocation2 + $0x9] sm:$0xff]
      %v247 = vld [vmem:[#allocation2 + $0x11] sm:$0xff]
      %v248 = vld [vmem:[#allocation2 + $0x19] sm:$0xff]
      %v249 = vld [vmem:[#allocation2 + $0x2] sm:$0xff]
      %v250 = vld [vmem:[#allocation2 + $0xa] sm:$0xff]
      %v251 = vld [vmem:[#allocation2 + $0x12] sm:$0xff]
      %v252 = vld [vmem:[#allocation2 + $0x1a] sm:$0xff]
      %257 = vrot.lane.b32.xlu0 %v245, 32
      %v258 = vpop.permute.xlu0 %257
      %259 = vrot.lane.b32.xlu0 %v246, 32
      %v260 = vpop.permute.xlu0 %259
      %261 = vrot.lane.b32.xlu0 %v247, 32
      %v262 = vpop.permute.xlu0 %261
      %263 = vrot.lane.b32.xlu0 %v248, 32
      %v264 = vpop.permute.xlu0 %263
      %273 = vrot.lane.b32.xlu0 %v249, 64
      %v274 = vpop.permute.xlu0 %273
      %275 = vrot.lane.b32.xlu0 %v250, 64
      %v276 = vpop.permute.xlu0 %275
      %277 = vrot.lane.b32.xlu0 %v251, 64
      %v278 = vpop.permute.xlu0 %277
      %279 = vrot.lane.b32.xlu0 %v252, 64
      %v280 = vpop.permute.xlu0 %279
      %v285 = vsel %vm226, %v241, %v258
      %v286 = vsel %vm226, %v242, %v260
      %v287 = vsel %vm226, %v243, %v262
      %v288 = vsel %vm226, %v244, %v264
      %vm289 = vcmask 523264
      %v290 = vsel %vm289, %v285, %v274
      %v291 = vsel %vm289, %v286, %v276
      %v292 = vsel %vm289, %v287, %v278
      %v293 = vsel %vm289, %v288, %v280
      %v294 = vpack.c.bf16 %v291, %v290
      %v295 = vpack.c.bf16 %v293, %v292
      %v296 = vld [vmem:[%s1] sm:$0xf]
      %v297 = vld [vmem:[%s1 + $0x4] sm:$0xf]
      %v298 = vld [vmem:[%s1 + $0x8] sm:$0xf]
      %v299 = vld [vmem:[%s1 + $0xc] sm:$0xf]
      %v300 = vld [vmem:[%s1 + $0x10] sm:$0xf]
      %v301 = vld [vmem:[%s1 + $0x14] sm:$0xf]
      %v302 = vld [vmem:[%s1 + $0x18] sm:$0xf]
      %v303 = vld [vmem:[%s1 + $0x1c] sm:$0xf]
      %v304 = vld [vmem:[%s1 + $0x20] sm:$0xf]
      %v305 = vld [vmem:[%s1 + $0x24] sm:$0xf]
      %v306 = vld [vmem:[%s1 + $0x28] sm:$0xf]
      %v307 = vld [vmem:[%s1 + $0x2c] sm:$0xf]
      %v308 = vld [vmem:[%s2] sm:$0x1]
      %v310 = vlaneseq
      %v311 = vshrl.u32 %v310, 7
      %v312 = vsub.s32 0, %v311
      %v313 = vrot.slane %v308, %v312
      %v327 = vunpack.c.l.b16 %v296
      %v328 = vunpack.c.l.b16 %v297
      %v329 = vunpack.c.l.b16 %v298
      %v330 = vunpack.c.l.b16 %v299
      %v331 = vunpack.c.l.b16 %v300
      %v332 = vunpack.c.l.b16 %v301
      %v333 = vunpack.c.l.b16 %v302
      %v334 = vunpack.c.l.b16 %v303
      %v335 = vunpack.c.l.b16 %v304
      %v336 = vunpack.c.l.b16 %v305
      %v337 = vunpack.c.l.b16 %v306
      %v338 = vunpack.c.l.b16 %v307
      %v339 = vpack.c.b16 %v328, %v327
      %v340 = vpack.c.b16 %v330, %v329
      %v341 = vpack.c.b16 %v332, %v331
      %v342 = vpack.c.b16 %v334, %v333
      %v343 = vpack.c.b16 %v336, %v335
      %v344 = vpack.c.b16 %v338, %v337
      %vm351 = vcmask 785408
      %v353 = vsel %vm351, %v294, 0
      %v356 = vsel %vm351, %v295, 0
      %358 = vmatprep.subr.bf16.mxu0 0
      %359 = vmatpush1.bf16.msra.mxu0 %v339
      %360 = vmatprep.subr.bf16.mxu0 0
      %361 = vmatpush1.bf16.msra.mxu0 %v340
      %362 = vmatprep.subr.bf16.mxu0 0
      %363 = vmatpush1.bf16.msra.mxu0 %v341
      %364 = vmatprep.subr.bf16.mxu0 0
      %365 = vmatpush1.bf16.msra.mxu0 %v342
      %366 = vmatprep.subr.bf16.mxu0 0
      %367 = vmatpush1.bf16.msra.mxu0 %v343
      %368 = vmatprep.subr.bf16.mxu0 0
      %369 = vmatpush1.bf16.msra.mxu0 %v344
      %370 = vmatprep.subr.bf16.mxu0 0
      %371 = vmatpush1.bf16.msra.mxu0 0
      %372 = vmatprep.subr.bf16.mxu0 0
      %373 = vmatpush1.bf16.msra.mxu0 0
      %374 = vmatprep.subr.bf16.mxu0 0
      %375 = vmatpush1.bf16.msra.mxu0 0
      %376 = vmatprep.subr.bf16.mxu0 0
      %377 = vmatpush1.bf16.msra.mxu0 0
      %378 = vmatprep.subr.bf16.mxu0 0
      %379 = vmatpush1.bf16.msra.mxu0 0
      %380 = vmatprep.subr.bf16.mxu0 0
      %381 = vmatpush1.bf16.msra.mxu0 0
      %382 = vmatprep.subr.bf16.mxu0 0
      %383 = vmatpush1.bf16.msra.mxu0 0
      %384 = vmatprep.subr.bf16.mxu0 0
      %385 = vmatpush1.bf16.msra.mxu0 0
      %386 = vmatprep.subr.bf16.mxu0 0
      %387 = vmatpush1.bf16.msra.mxu0 0
      %388 = vmatprep.subr.bf16.mxu0 0
      %389 = vmatpush1.bf16.msra.mxu0 0
      %390 = vmatprep.mubr.bf16.mxu0 0
      %391 = vmatmul.mubr.bf16.gmra.mrb[0].mxu0 %v353
      %v392 = vpop.f32.mrb[0].mxu0
      %v393 = vadd.f32 %v313, %v392
      %v394 = vpop.f32.mrb[0].mxu0
      %v395 = vpop.f32.mrb[0].mxu0
      %v396 = vadd.f32 %v313, %v395
      %v397 = vpop.f32.mrb[0].mxu0
      %398 = vmatprep.mubr.bf16.mxu0 0
      %399 = vmatmul.mubr.bf16.gmra.mrb[0].mxu0 %v356
      %v400 = vpop.f32.mrb[0].mxu0
      %v401 = vadd.f32 %v313, %v400
      %v402 = vpop.f32.mrb[0].mxu0
      %v403 = vpop.f32.mrb[0].mxu0
      %v404 = vadd.f32 %v313, %v403
      %v405 = vpop.f32.mrb[0].mxu0
      %406 = vdwg.mxu0
      %v407 = vmax.f32 %v393, 0.0
      %v408 = vmax.f32 %v396, 0.0
      %v409 = vmax.f32 %v401, 0.0
      %v410 = vmax.f32 %v404, 0.0
      %411 = vst.msk [vmem:[#allocation2 + $0x1] sm:$0xff] %vm226, %v407
      %412 = vst.msk [vmem:[#allocation2 + $0x9] sm:$0xff] %vm226, %v408
      %413 = vst.msk [vmem:[#allocation2 + $0x11] sm:$0xff] %vm226, %v409
      %414 = vst.msk [vmem:[#allocation2 + $0x19] sm:$0xff] %vm226, %v410
      %v415 = vld [vmem:[#allocation2] sm:$0xff]
      %v416 = vld [vmem:[#allocation2 + $0x8] sm:$0xff]
      %v417 = vld [vmem:[#allocation2 + $0x10] sm:$0xff]
      %v418 = vld [vmem:[#allocation2 + $0x18] sm:$0xff]
      %v419 = vld [vmem:[#allocation2 + $0x1] sm:$0xff]
      %v420 = vld [vmem:[#allocation2 + $0x9] sm:$0xff]
      %v421 = vld [vmem:[#allocation2 + $0x11] sm:$0xff]
      %v422 = vld [vmem:[#allocation2 + $0x19] sm:$0xff]
      %v423 = vld [vmem:[#allocation2 + $0x2] sm:$0xff]
      %v424 = vld [vmem:[#allocation2 + $0xa] sm:$0xff]
      %v425 = vld [vmem:[#allocation2 + $0x12] sm:$0xff]
      %v426 = vld [vmem:[#allocation2 + $0x1a] sm:$0xff]
      %431 = vrot.lane.b32.xlu0 %v419, 32
      %v432 = vpop.permute.xlu0 %431
      %433 = vrot.lane.b32.xlu0 %v420, 32
      %v434 = vpop.permute.xlu0 %433
      %435 = vrot.lane.b32.xlu0 %v421, 32
      %v436 = vpop.permute.xlu0 %435
      %437 = vrot.lane.b32.xlu0 %v422, 32
      %v438 = vpop.permute.xlu0 %437
      %447 = vrot.lane.b32.xlu0 %v423, 64
      %v448 = vpop.permute.xlu0 %447
      %449 = vrot.lane.b32.xlu0 %v424, 64
      %v450 = vpop.permute.xlu0 %449
      %451 = vrot.lane.b32.xlu0 %v425, 64
      %v452 = vpop.permute.xlu0 %451
      %453 = vrot.lane.b32.xlu0 %v426, 64
      %v454 = vpop.permute.xlu0 %453
      %v459 = vsel %vm226, %v415, %v432
      %v460 = vsel %vm226, %v416, %v434
      %v461 = vsel %vm226, %v417, %v436
      %v462 = vsel %vm226, %v418, %v438
      %v463 = vsel %vm289, %v459, %v448
      %v464 = vsel %vm289, %v460, %v450
      %v465 = vsel %vm289, %v461, %v452
      %v466 = vsel %vm289, %v462, %v454
      %v467 = vpack.c.bf16 %v464, %v463
      %v468 = vpack.c.bf16 %v466, %v465
      %v469 = vld [vmem:[%s3] sm:$0xf]
      %v470 = vld [vmem:[%s3 + $0x4] sm:$0xf]
      %v471 = vld [vmem:[%s3 + $0x8] sm:$0xf]
      %v472 = vld [vmem:[%s3 + $0xc] sm:$0xf]
      %v473 = vld [vmem:[%s3 + $0x10] sm:$0xf]
      %v474 = vld [vmem:[%s3 + $0x14] sm:$0xf]
      %v475 = vld [vmem:[%s3 + $0x18] sm:$0xf]
      %v476 = vld [vmem:[%s3 + $0x1c] sm:$0xf]
      %v477 = vld [vmem:[%s3 + $0x20] sm:$0xf]
      %v478 = vld [vmem:[%s3 + $0x24] sm:$0xf]
      %v479 = vld [vmem:[%s3 + $0x28] sm:$0xf]
      %v480 = vld [vmem:[%s3 + $0x2c] sm:$0xf]
      %v481 = vld [vmem:[%s4] sm:$0x1]
      %v483 = vlaneseq
      %v484 = vshrl.u32 %v483, 7
      %v485 = vsub.s32 0, %v484
      %v486 = vrot.slane %v481, %v485
      %v500 = vunpack.c.l.b16 %v469
      %v501 = vunpack.c.l.b16 %v470
      %v502 = vunpack.c.l.b16 %v471
      %v503 = vunpack.c.l.b16 %v472
      %v504 = vunpack.c.l.b16 %v473
      %v505 = vunpack.c.l.b16 %v474
      %v506 = vunpack.c.l.b16 %v475
      %v507 = vunpack.c.l.b16 %v476
      %v508 = vunpack.c.l.b16 %v477
      %v509 = vunpack.c.l.b16 %v478
      %v510 = vunpack.c.l.b16 %v479
      %v511 = vunpack.c.l.b16 %v480
      %v512 = vpack.c.b16 %v501, %v500
      %v513 = vpack.c.b16 %v503, %v502
      %v514 = vpack.c.b16 %v505, %v504
      %v515 = vpack.c.b16 %v507, %v506
      %v516 = vpack.c.b16 %v509, %v508
      %v517 = vpack.c.b16 %v511, %v510
      %v525 = vsel %vm351, %v467, 0
      %v528 = vsel %vm351, %v468, 0
      %530 = vmatprep.subr.bf16.mxu0 0
      %531 = vmatpush1.bf16.msra.mxu0 %v512
      %532 = vmatprep.subr.bf16.mxu0 0
      %533 = vmatpush1.bf16.msra.mxu0 %v513
      %534 = vmatprep.subr.bf16.mxu0 0
      %535 = vmatpush1.bf16.msra.mxu0 %v514
      %536 = vmatprep.subr.bf16.mxu0 0
      %537 = vmatpush1.bf16.msra.mxu0 %v515
      %538 = vmatprep.subr.bf16.mxu0 0
      %539 = vmatpush1.bf16.msra.mxu0 %v516
      %540 = vmatprep.subr.bf16.mxu0 0
      %541 = vmatpush1.bf16.msra.mxu0 %v517
      %542 = vmatprep.subr.bf16.mxu0 0
      %543 = vmatpush1.bf16.msra.mxu0 0
      %544 = vmatprep.subr.bf16.mxu0 0
      %545 = vmatpush1.bf16.msra.mxu0 0
      %546 = vmatprep.subr.bf16.mxu0 0
      %547 = vmatpush1.bf16.msra.mxu0 0
      %548 = vmatprep.subr.bf16.mxu0 0
      %549 = vmatpush1.bf16.msra.mxu0 0
      %550 = vmatprep.subr.bf16.mxu0 0
      %551 = vmatpush1.bf16.msra.mxu0 0
      %552 = vmatprep.subr.bf16.mxu0 0
      %553 = vmatpush1.bf16.msra.mxu0 0
      %554 = vmatprep.subr.bf16.mxu0 0
      %555 = vmatpush1.bf16.msra.mxu0 0
      %556 = vmatprep.subr.bf16.mxu0 0
      %557 = vmatpush1.bf16.msra.mxu0 0
      %558 = vmatprep.subr.bf16.mxu0 0
      %559 = vmatpush1.bf16.msra.mxu0 0
      %560 = vmatprep.subr.bf16.mxu0 0
      %561 = vmatpush1.bf16.msra.mxu0 0
      %562 = vmatprep.mubr.bf16.mxu0 0
      %563 = vmatmul.mubr.bf16.gmra.mrb[0].mxu0 %v525
      %v564 = vpop.f32.mrb[0].mxu0
      %v565 = vadd.f32 %v486, %v564
      %v566 = vpop.f32.mrb[0].mxu0
      %v567 = vpop.f32.mrb[0].mxu0
      %v568 = vadd.f32 %v486, %v567
      %v569 = vpop.f32.mrb[0].mxu0
      %570 = vmatprep.mubr.bf16.mxu0 0
      %571 = vmatmul.mubr.bf16.gmra.mrb[0].mxu0 %v528
      %v572 = vpop.f32.mrb[0].mxu0
      %v573 = vadd.f32 %v486, %v572
      %v574 = vpop.f32.mrb[0].mxu0
      %v575 = vpop.f32.mrb[0].mxu0
      %v576 = vadd.f32 %v486, %v575
      %v577 = vpop.f32.mrb[0].mxu0
      %578 = vdwg.mxu0
      %vm579 = vcmask 23552
      %580 = vst.msk [vmem:[%s224] sm:$0xff] %vm579, %v565
      %581 = vst.msk [vmem:[%s224 + $0x8] sm:$0xff] %vm579, %v568
      %582 = vst.msk [vmem:[%s224 + $0x10] sm:$0xff] %vm579, %v573
      %583 = vst.msk [vmem:[%s224 + $0x18] sm:$0xff] %vm579, %v576
      %p584 = scmp.lt.s32.totalorder %s16, 1
      %s585 = scalar_select %p584, %s16, 1
      %s586 = smul.addr %s585, 4
      %s587 = smul.addr %s586, 8
      %s588 = scalar_lea.vmem %s5, %s587
      // Predicated region
      $region41: #{decoder_forward_pallas.7} parent=39 // pred_check
        %p589 = pneg %p144
      $region42: #{decoder_forward_pallas.7} parent=39 // pred_check_branch
        %591 = sbr.rel (%p589) target = $region44
      $region43: #{decoder_forward_pallas.7} parent=39 // pred_region
        _
      $region44: #{decoder_forward_pallas.7} parent=39 // pred_fallthru
        _
    $region40: #{decoder_forward_pallas.7} parent=5 // pred_fallthru
      _
    %p592 = scmp.le.s32.totalorder 2, %s11
    // Predicated region
    $region45: #{decoder_forward_pallas.7} parent=5 // pred_check
      %p593 = pneg %p592
    $region46: #{decoder_forward_pallas.7} parent=5 // pred_check_branch
      %595 = sbr.rel (%p593) target = $region48
    $region47: #{decoder_forward_pallas.7} parent=5 // pred_region
      %s596 = ssub.s32 %s11, 2
      // Predicated region
      $region49: #{decoder_forward_pallas.7} parent=47 // pred_check
        %p597 = pneg %p150
      $region50: #{decoder_forward_pallas.7} parent=47 // pred_check_branch
        %599 = sbr.rel (%p597) target = $region52
      $region51: #{decoder_forward_pallas.7} parent=47 // pred_region
        %p600 = scmp.lt.s32.totalorder %s17, 1
        %s601 = scalar_select %p600, %s17, 1
        %s602 = smul.addr %s601, 4
        %s603 = smul.addr %s602, 8
        %s604 = scalar_lea.vmem %s5, %s603
      $region52: #{decoder_forward_pallas.7} parent=47 // pred_fallthru
        _
    $region48: #{decoder_forward_pallas.7} parent=5 // pred_fallthru
      _
  $region6: #{decoder_forward_pallas.7} parent=0 // loop_footer
    %s15 = sadd.s32 1, %s11
  $region7: #{decoder_forward_pallas.7} parent=0 // loop_footer_branch
    %10 = sbr.rel target = $region3
  $region8: #{decoder_forward_pallas.7} parent=0 // loop_exit
    _

</llo_original>
